<compile_context>
chip_gen: v7x
topology: tpu7x:2x2x1
jax: 0.10.0
libtpu: 0.0.40
codegen_flags: <defaults>
</compile_context>

<pallas_src>
import math
import numpy as np
import jax
import jax.numpy as jnp
from jax import lax
from jax.experimental import pallas as pl
from jax.experimental.pallas import tpu as pltpu  # noqa: F401  (imported for TPU backend)

# ----------------------------- config (small) ------------------------------
B = 2
SEQ_LEN = 16          # L
ENC_IN = 4            # enc_in / c_out
D_MODEL = 32
N_HEADS = 4           # heads folded into D_MODEL (corr is head/channel-averaged)
D_FF = 64
E_LAYERS = 2
C_OUT = 4
MOVING_AVG = 5        # odd kernel, standard Autoformer config
FACTOR = 1
TOP_K = max(1, int(FACTOR * math.log(SEQ_LEN)))   # int(factor*log(L)), as in torch
EPS = 1e-5
NEG = -1e30

BL = B * SEQ_LEN                  # 32   (batch folded into the time axis)
BLL = B * SEQ_LEN * SEQ_LEN       # 512  (batch-folded (lag, time) lane axis)
EMB_K = 16                        # padded 3*ENC_IN for the embedding matmul
OUT_PAD = 8                       # padded c_out rows for the output store

_N_CONST = 10                     # x3T, embT, tileT, rotkT, rotvT, btT, bcastT, selT, d1T, dmT
_PER_LAYER = 10
_N_IN = _N_CONST + _PER_LAYER * E_LAYERS + 4


# ------------------------------- fused kernel -------------------------------
def _fused_kernel(*refs):
    (x3_ref, emb_ref, tile_ref, rotk_ref, rotv_ref, btt_ref, bcast_ref,
     sel_ref, d1_ref, dm_ref) = refs[:_N_CONST]
    lrefs = refs[_N_CONST:_N_CONST + _PER_LAYER * E_LAYERS]
    gamma_ref, beta_ref, wp_ref, bp_ref = refs[_N_CONST + _PER_LAYER * E_LAYERS:_N_IN]
    out_ref = refs[_N_IN]

    f32, bf16 = jnp.float32, jnp.bfloat16
    L, D = SEQ_LEN, D_MODEL
    inv_d = 1.0 / D

    def mm(a, b):
        # single-pass bf16 MXU matmul with f32 accumulation
        return jnp.dot(a.astype(bf16), b.astype(bf16), preferred_element_type=f32)

    tile_m = tile_ref[...]
    rotk_m = rotk_ref[...]
    rotv_m = rotv_ref[...]
    btt_m = btt_ref[...]
    bcast_m = bcast_ref[...]
    sel_m = sel_ref[...]
    d1_m = d1_ref[...]
    dm_m = dm_ref[...]

    # per-batch lane-group mask for the (B, B*L) score rows
    col = lax.broadcasted_iota(jnp.int32, (B, BL), 1)
    row = lax.broadcasted_iota(jnp.int32, (B, BL), 0)
    bmask = (col >= row * L) & (col < (row + 1) * L)

    # --- embedding: circular Conv1d(k=3, no bias) folded into a single matmul
    #     (taps stacked on the host).  Activations are feature-major (D, B*L).
    h = mm(emb_ref[...], x3_ref[...])                              # (D, B*L)

    for li in range(E_LAYERS):
        (wq, bq, wk, bk, wv, bv, wo, bo, w1, w2) = [
            r[...] for r in lrefs[_PER_LAYER * li:_PER_LAYER * (li + 1)]]

        q = mm(wq, h) + bq                                         # (D, B*L)
        k = mm(wk, h) + bk
        v = mm(wv, h) + bv

        # --- AutoCorrelation lag scores (batch folded, lane-dense intermediates)
        #     mv[b,tau] = (1/D) sum_{t,d} q[b,t,d] * k[b,(t-tau)%L,d]
        qs = mm(q, tile_m)                                         # (D, B*L*L): q[b,t,d]
        ks = mm(k, rotk_m)                                         # (D, B*L*L): k[b,(t-tau)%L,d]
        p2 = mm(qs * ks, btt_m)                                    # (D, B*L): sum over t
        scores = jnp.sum(p2, axis=0, keepdims=True) * inv_d        # (1, B*L)
        scores2 = jnp.where(bmask, scores, NEG)                    # (B, B*L) per-batch rows

        # top-k lags (iterative max -> threshold), masked softmax; both batches
        # are handled by the same axis=-1 reductions.
        masked = scores2
        wmax = None
        thr = None
        for i in range(TOP_K):
            thr = jnp.max(masked, axis=1, keepdims=True)           # (B, 1)
            if i == 0:
                wmax = thr                                         # reuse as softmax max
            masked = jnp.where(masked >= thr, NEG, masked)
        selected = scores2 >= thr                                  # exactly top-k (distinct)
        ex = jnp.where(selected, jnp.exp(scores2 - wmax), 0.0)
        denom = jnp.sum(ex, axis=1, keepdims=True)
        coef = jnp.sum(ex / denom, axis=0, keepdims=True)          # (1, B*L): coef[b*L+tau]

        # time-delay aggregation: agg[b,t,:] = sum_tau coef[b,tau] * v[b,(t+tau)%L,:]
        vs = mm(v, rotv_m)                                         # (D, B*L*L): v[b,(t+tau)%L,d]
        cb = mm(coef, bcast_m)                                     # (1, B*L*L): coef[b,tau]
        agg = mm(cb * vs, sel_m)                                   # (D, B*L)

        attn = mm(wo, agg) + bo
        x1 = mm(h + attn, d1_m)                                    # residual + series_decomp1
        y = jnp.maximum(mm(w1, x1), 0.0)                           # FF conv1 (k=1, no bias) + relu
        y = mm(w2, y)                                              # FF conv2 (k=1, no bias)
        h = mm(x1 + y, d1_m)                                       # residual + series_decomp2

    # --- my_Layernorm (LN over d_model, subtract per-batch time mean) + projection
    mu = jnp.mean(h, axis=0, keepdims=True)
    var = jnp.mean((h - mu) ** 2, axis=0, keepdims=True)
    ln = (h - mu) * lax.rsqrt(var + EPS) * gamma_ref[...] + beta_ref[...]
    xh = mm(ln, dm_m)                                              # DM = I - (1/L)*ones (block-diag)
    out_ref[...] = mm(wp_ref[...], xh) + bp_ref[...]               # (OUT_PAD, B*L)


# ----------------------------- pallas wrapper -------------------------------
def model_forward(x_enc, x_mark_enc, x_dec, x_mark_dec, params, mask=None):
    # == Model.forward -> anomaly_detection(x_enc); extra args ignored (as in torch)
    kp = params["kernel"]

    # circular conv taps stacked on the host: [x[(t-1)%L], x[t], x[(t+1)%L]]
    xp = jnp.roll(x_enc, 1, axis=1)
    xn = jnp.roll(x_enc, -1, axis=1)
    x3 = jnp.concatenate([xp, x_enc, xn], axis=-1)                  # (B, L, 3*Cin)
    x3 = jnp.pad(x3, ((0, 0), (0, 0), (0, EMB_K - 3 * ENC_IN)))
    x3t = x3.reshape(B * SEQ_LEN, EMB_K).T.astype(jnp.bfloat16)     # (EMB_K, B*L)

    args = [x3t, kp["embT"], kp["tileT"], kp["rotkT"], kp["rotvT"],
            kp["btT"], kp["bcastT"], kp["selT"], kp["d1T"], kp["dmT"]]
    for lk in kp["layers"]:
        args += [lk["wqT"], lk["bqT"], lk["wkT"], lk["bkT"], lk["wvT"], lk["bvT"],
                 lk["woT"], lk["boT"], lk["w1T"], lk["w2T"]]
    args += [kp["gammaT"], kp["betaT"], kp["wpT"], kp["bpT"]]

    out = pl.pallas_call(
        _fused_kernel,
        out_shape=jax.ShapeDtypeStruct((OUT_PAD, B * SEQ_LEN), jnp.float32),
    )(*args)
    return out[:C_OUT, :].T.reshape(B, SEQ_LEN, C_OUT)


# ------------------------- deterministic parameters -------------------------
def _block_diag(m, n):
    r, c = m.shape
    out = np.zeros((n * r, n * c), np.float32)
    for i in range(n):
        out[i * r:(i + 1) * r, i * c:(i + 1) * c] = m
    return out


def init_params(key):
    keys = jax.random.split(key, 40)
    kit = iter(keys)
    f32, bf16 = jnp.float32, jnp.bfloat16
    L = SEQ_LEN

    def rnd_bf(shape, scale):
        return (scale * jax.random.normal(next(kit), shape, f32)).astype(bf16)

    def rnd_f(shape, scale):
        return scale * jax.random.normal(next(kit), shape, f32)

    p = {}
    # DataEmbedding_wo_pos: circular Conv1d(enc_in -> d_model, k=3, no bias)
    p["emb_w"] = rnd_bf((3 * ENC_IN, D_MODEL), 1.0 / math.sqrt(3 * ENC_IN))

    s = 1.0 / math.sqrt(D_MODEL)
    layers = []
    for _ in range(E_LAYERS):
        layers.append({
            "wq": rnd_bf((D_MODEL, D_MODEL), s), "bq": rnd_f((D_MODEL,), 0.02),
            "wk": rnd_bf((D_MODEL, D_MODEL), s), "bk": rnd_f((D_MODEL,), 0.02),
            "wv": rnd_bf((D_MODEL, D_MODEL), s), "bv": rnd_f((D_MODEL,), 0.02),
            "wo": rnd_bf((D_MODEL, D_MODEL), s), "bo": rnd_f((D_MODEL,), 0.02),
            "w1": rnd_bf((D_MODEL, D_FF), s),
            "w2": rnd_bf((D_FF, D_MODEL), 1.0 / math.sqrt(D_FF)),
        })
    p["layers"] = layers
    p["gamma"] = jnp.ones((D_MODEL,), f32)
    p["beta"] = jnp.zeros((D_MODEL,), f32)
    p["wp"] = rnd_bf((D_MODEL, C_OUT), 1.0 / math.sqrt(D_MODEL))
    p["bp"] = rnd_f((C_OUT,), 0.02)

    # series_decomp moving-average (replicate-padded AvgPool1d) / my_Layernorm blocks
    pad = (MOVING_AVG - 1) // 2
    aavg = np.zeros((L, L), np.float32)
    for t in range(L):
        for j in range(-pad, pad + 1):
            aavg[t, min(max(t + j, 0), L - 1)] += 1.0 / MOVING_AVG
    d1_blk = np.eye(L, dtype=np.float32) - aavg
    dm_blk = np.eye(L, dtype=np.float32) - np.full((L, L), 1.0 / L, np.float32)
    p["d1_blk"] = jnp.asarray(d1_blk).astype(bf16)     # shared by kernel & reference
    p["dm_blk"] = jnp.asarray(dm_blk).astype(bf16)

    # stacked-lag constants (0/1, exact in bf16), batch folded block-diagonally.
    # lane index c = b*L*L + tau*L + t.
    LL = L * L
    tileT = np.zeros((BL, BLL), np.float32)
    rotkT = np.zeros((BL, BLL), np.float32)
    rotvT = np.zeros((BL, BLL), np.float32)
    btT = np.zeros((BLL, BL), np.float32)
    bcastT = np.zeros((BL, BLL), np.float32)
    selT = np.zeros((BLL, BL), np.float32)
    for b in range(B):
        for tau in range(L):
            for t in range(L):
                c = b * LL + tau * L + t
                tileT[b * L + t, c] = 1.0                 # -> q[b,t,:]
                rotkT[b * L + (t - tau) % L, c] = 1.0     # -> k[b,(t-tau)%L,:]
                rotvT[b * L + (t + tau) % L, c] = 1.0     # -> v[b,(t+tau)%L,:]
                btT[c, b * L + tau] = 1.0                 # sum over t per (b,tau)
                bcastT[b * L + tau, c] = 1.0              # broadcast coef[b,tau]
                selT[c, b * L + t] = 1.0                  # sum over tau per (b,t)

    def bcast_col(vec):   # (N,) f32 -> (N, B*L) pre-broadcast bias
        return jnp.broadcast_to(jnp.asarray(vec, f32)[:, None], (vec.shape[0], BL))

    klayers = []
    for lp in layers:
        klayers.append({
            "wqT": lp["wq"].T, "bqT": bcast_col(lp["bq"]),
            "wkT": lp["wk"].T, "bkT": bcast_col(lp["bk"]),
            "wvT": lp["wv"].T, "bvT": bcast_col(lp["bv"]),
            "woT": lp["wo"].T, "boT": bcast_col(lp["bo"]),
            "w1T": lp["w1"].T, "w2T": lp["w2"].T,
        })

    emb_pad = jnp.zeros((EMB_K, D_MODEL), bf16).at[:3 * ENC_IN, :].set(p["emb_w"])
    wpT = jnp.zeros((OUT_PAD, D_MODEL), bf16).at[:C_OUT, :].set(p["wp"].T)
    bpT = jnp.zeros((OUT_PAD, BL), f32).at[:C_OUT, :].set(
        jnp.broadcast_to(p["bp"][:, None], (C_OUT, BL)))

    p["kernel"] = {
        "embT": emb_pad.T,                                  # (D, EMB_K) bf16
        "tileT": jnp.asarray(tileT).astype(bf16),
        "rotkT": jnp.asarray(rotkT).astype(bf16),
        "rotvT": jnp.asarray(rotvT).astype(bf16),
        "btT": jnp.asarray(btT).astype(bf16),
        "bcastT": jnp.asarray(bcastT).astype(bf16),
        "selT": jnp.asarray(selT).astype(bf16),
        "d1T": jnp.asarray(_block_diag(d1_blk.T, B)).astype(bf16),
        "dmT": jnp.asarray(_block_diag(dm_blk.T, B)).astype(bf16),
        "layers": klayers,
        "gammaT": bcast_col(p["gamma"]),
        "betaT": bcast_col(p["beta"]),
        "wpT": wpT,
        "bpT": bpT,
    }
    return p


# -------------------------- pure-JAX reference ------------------------------
def reference_forward(x_enc, p):
    """Non-Pallas mirror of the module forward (same bf16-operand / f32-accumulate
    precision as the kernel, applied at the same points), structurally independent
    (rolls / lax.top_k / gathers instead of the kernel's block-diagonal matmuls)."""
    f32, bf16 = jnp.float32, jnp.bfloat16
    L, D = SEQ_LEN, D_MODEL
    rnd = lambda a: a.astype(bf16).astype(f32)

    def mmx(eq, a, b):
        return jnp.einsum(eq, a.astype(bf16), b.astype(bf16),
                          preferred_element_type=f32)

    d1, dm = p["d1_blk"], p["dm_blk"]

    xp = jnp.roll(x_enc, 1, axis=1)
    xn = jnp.roll(x_enc, -1, axis=1)
    x3 = jnp.concatenate([xp, x_enc, xn], axis=-1)                  # (B, L, 3*Cin)
    h = mmx("blc,cd->bld", x3, p["emb_w"])

    for lp in p["layers"]:
        q = mmx("bld,de->ble", h, lp["wq"]) + lp["bq"]
        k = mmx("bld,de->ble", h, lp["wk"]) + lp["bk"]
        v = mmx("bld,de->ble", h, lp["wv"]) + lp["bv"]

        qb, kb, vb = rnd(q), rnd(k), rnd(v)
        k_stack = jnp.stack([jnp.roll(kb, tau, axis=1) for tau in range(L)],
                            axis=1)                                 # (B, tau, t, D)
        prod = rnd(qb[:, None, :, :] * k_stack)
        mv = jnp.sum(prod, axis=(2, 3)) / D                         # (B, L)

        w, delay = lax.top_k(mv, TOP_K)
        cw = rnd(jax.nn.softmax(w, axis=-1))                        # (B, K)
        agg = jnp.zeros_like(v)
        for i in range(TOP_K):
            idx = (jnp.arange(L)[None, :] + delay[:, i:i + 1]) % L
            gathered = jnp.take_along_axis(vb, idx[:, :, None], axis=1)
            agg = agg + rnd(cw[:, i][:, None, None] * gathered)

        attn = mmx("bld,de->ble", agg, lp["wo"]) + lp["bo"]
        x1 = mmx("ts,bsd->btd", d1, h + attn)
        y = jnp.maximum(mmx("bld,df->blf", x1, lp["w1"]), 0.0)
        y = mmx("blf,fd->bld", y, lp["w2"])
        h = mmx("ts,bsd->btd", d1, x1 + y)

    mu = jnp.mean(h, axis=-1, keepdims=True)
    var = jnp.mean((h - mu) ** 2, axis=-1, keepdims=True)
    ln = (h - mu) * lax.rsqrt(var + EPS) * p["gamma"] + p["beta"]
    xh = mmx("ts,bsd->btd", dm, ln)
    return mmx("bld,dc->blc", xh, p["wp"]) + p["bp"]


# --------------------------------- main --------------------------------------
if __name__ == "__main__":
    key = jax.random.PRNGKey(0)
    k_in, k_par = jax.random.split(key)
    x_enc = jax.random.normal(k_in, (B, SEQ_LEN, ENC_IN), jnp.float32)
    params = init_params(k_par)

    out = model_forward(x_enc, None, None, None, params)
    out = jax.block_until_ready(out)
    assert out.shape == (B, SEQ_LEN, C_OUT), out.shape
    assert np.isfinite(np.asarray(out)).all()

    ref = jax.block_until_ready(reference_forward(x_enc, params))
    max_diff = float(jnp.max(jnp.abs(out - ref)))
    assert np.allclose(np.asarray(out), np.asarray(ref), atol=2e-2, rtol=2e-2), (
        f"mismatch vs reference, max abs diff = {max_diff}")
    print("KERNEL_OK")
</pallas_src>

<mosaic_0001>
module attributes {stable_mosaic.version = 11 : i64} {
  func.func @_fused_kernel(%arg0: memref<16x32xbf16, #tpu.memory_space<vmem>>, %arg1: memref<32x16xbf16, #tpu.memory_space<vmem>>, %arg2: memref<32x512xbf16, #tpu.memory_space<vmem>>, %arg3: memref<32x512xbf16, #tpu.memory_space<vmem>>, %arg4: memref<32x512xbf16, #tpu.memory_space<vmem>>, %arg5: memref<512x32xbf16, #tpu.memory_space<vmem>>, %arg6: memref<32x512xbf16, #tpu.memory_space<vmem>>, %arg7: memref<512x32xbf16, #tpu.memory_space<vmem>>, %arg8: memref<32x32xbf16, #tpu.memory_space<vmem>>, %arg9: memref<32x32xbf16, #tpu.memory_space<vmem>>, %arg10: memref<32x32xbf16, #tpu.memory_space<vmem>>, %arg11: memref<32x32xf32, #tpu.memory_space<vmem>>, %arg12: memref<32x32xbf16, #tpu.memory_space<vmem>>, %arg13: memref<32x32xf32, #tpu.memory_space<vmem>>, %arg14: memref<32x32xbf16, #tpu.memory_space<vmem>>, %arg15: memref<32x32xf32, #tpu.memory_space<vmem>>, %arg16: memref<32x32xbf16, #tpu.memory_space<vmem>>, %arg17: memref<32x32xf32, #tpu.memory_space<vmem>>, %arg18: memref<64x32xbf16, #tpu.memory_space<vmem>>, %arg19: memref<32x64xbf16, #tpu.memory_space<vmem>>, %arg20: memref<32x32xbf16, #tpu.memory_space<vmem>>, %arg21: memref<32x32xf32, #tpu.memory_space<vmem>>, %arg22: memref<32x32xbf16, #tpu.memory_space<vmem>>, %arg23: memref<32x32xf32, #tpu.memory_space<vmem>>, %arg24: memref<32x32xbf16, #tpu.memory_space<vmem>>, %arg25: memref<32x32xf32, #tpu.memory_space<vmem>>, %arg26: memref<32x32xbf16, #tpu.memory_space<vmem>>, %arg27: memref<32x32xf32, #tpu.memory_space<vmem>>, %arg28: memref<64x32xbf16, #tpu.memory_space<vmem>>, %arg29: memref<32x64xbf16, #tpu.memory_space<vmem>>, %arg30: memref<32x32xf32, #tpu.memory_space<vmem>>, %arg31: memref<32x32xf32, #tpu.memory_space<vmem>>, %arg32: memref<8x32xbf16, #tpu.memory_space<vmem>>, %arg33: memref<8x32xf32, #tpu.memory_space<vmem>>, %arg34: memref<8x32xf32, #tpu.memory_space<vmem>>) attributes {dimension_semantics = [], scalar_prefetch = 0 : i64, scratch_operands = 0 : i64, tpu.core_type = #tpu.core_type<tc>} {
    %c0 = arith.constant 0 : index
    %c0_0 = arith.constant 0 : index
    %0 = vector.load %arg2[%c0, %c0_0] : memref<32x512xbf16, #tpu.memory_space<vmem>>, vector<32x512xbf16>
    %c0_1 = arith.constant 0 : index
    %c0_2 = arith.constant 0 : index
    %1 = vector.load %arg3[%c0_1, %c0_2] : memref<32x512xbf16, #tpu.memory_space<vmem>>, vector<32x512xbf16>
    %c0_3 = arith.constant 0 : index
    %c0_4 = arith.constant 0 : index
    %2 = vector.load %arg4[%c0_3, %c0_4] : memref<32x512xbf16, #tpu.memory_space<vmem>>, vector<32x512xbf16>
    %c0_5 = arith.constant 0 : index
    %c0_6 = arith.constant 0 : index
    %3 = vector.load %arg5[%c0_5, %c0_6] : memref<512x32xbf16, #tpu.memory_space<vmem>>, vector<512x32xbf16>
    %c0_7 = arith.constant 0 : index
    %c0_8 = arith.constant 0 : index
    %4 = vector.load %arg6[%c0_7, %c0_8] : memref<32x512xbf16, #tpu.memory_space<vmem>>, vector<32x512xbf16>
    %c0_9 = arith.constant 0 : index
    %c0_10 = arith.constant 0 : index
    %5 = vector.load %arg7[%c0_9, %c0_10] : memref<512x32xbf16, #tpu.memory_space<vmem>>, vector<512x32xbf16>
    %c0_11 = arith.constant 0 : index
    %c0_12 = arith.constant 0 : index
    %6 = vector.load %arg8[%c0_11, %c0_12] : memref<32x32xbf16, #tpu.memory_space<vmem>>, vector<32x32xbf16>
    %c0_13 = arith.constant 0 : index
    %c0_14 = arith.constant 0 : index
    %7 = vector.load %arg9[%c0_13, %c0_14] : memref<32x32xbf16, #tpu.memory_space<vmem>>, vector<32x32xbf16>
    %8 = tpu.iota {dimensions = array<i32: 1>} : vector<2x32xi32>
    %9 = tpu.iota {dimensions = array<i32: 0>} : vector<2x32xi32>
    %c16_i32 = arith.constant 16 : i32
    %10 = vector.broadcast %c16_i32 : i32 to vector<2x32xi32>
    %11 = arith.muli %9, %10 : vector<2x32xi32>
    %12 = arith.cmpi sge, %8, %11 : vector<2x32xi32>
    %c1_i32 = arith.constant 1 : i32
    %13 = vector.broadcast %c1_i32 : i32 to vector<2x32xi32>
    %14 = arith.addi %9, %13 : vector<2x32xi32>
    %c16_i32_15 = arith.constant 16 : i32
    %15 = vector.broadcast %c16_i32_15 : i32 to vector<2x32xi32>
    %16 = arith.muli %14, %15 : vector<2x32xi32>
    %17 = arith.cmpi slt, %8, %16 : vector<2x32xi32>
    %18 = arith.andi %12, %17 : vector<2x32xi1>
    %c0_16 = arith.constant 0 : index
    %c0_17 = arith.constant 0 : index
    %19 = vector.load %arg1[%c0_16, %c0_17] : memref<32x16xbf16, #tpu.memory_space<vmem>>, vector<32x16xbf16>
    %c0_18 = arith.constant 0 : index
    %c0_19 = arith.constant 0 : index
    %20 = vector.load %arg0[%c0_18, %c0_19] : memref<16x32xbf16, #tpu.memory_space<vmem>>, vector<16x32xbf16>
    %cst = arith.constant dense<0.000000e+00> : vector<32x32xf32>
    %21 = tpu.matmul %19, %20, %cst {dimension_numbers = #tpu.dot_dimension_numbers<[1], [0], [0], [1], [0, 0, 1, 1], [], []>} : vector<32x16xbf16>, vector<16x32xbf16>, vector<32x32xf32> -> vector<32x32xf32>
    %c0_20 = arith.constant 0 : index
    %c0_21 = arith.constant 0 : index
    %22 = vector.load %arg10[%c0_20, %c0_21] : memref<32x32xbf16, #tpu.memory_space<vmem>>, vector<32x32xbf16>
    %c0_22 = arith.constant 0 : index
    %c0_23 = arith.constant 0 : index
    %23 = vector.load %arg11[%c0_22, %c0_23] : memref<32x32xf32, #tpu.memory_space<vmem>>, vector<32x32xf32>
    %c0_24 = arith.constant 0 : index
    %c0_25 = arith.constant 0 : index
    %24 = vector.load %arg12[%c0_24, %c0_25] : memref<32x32xbf16, #tpu.memory_space<vmem>>, vector<32x32xbf16>
    %c0_26 = arith.constant 0 : index
    %c0_27 = arith.constant 0 : index
    %25 = vector.load %arg13[%c0_26, %c0_27] : memref<32x32xf32, #tpu.memory_space<vmem>>, vector<32x32xf32>
    %c0_28 = arith.constant 0 : index
    %c0_29 = arith.constant 0 : index
    %26 = vector.load %arg14[%c0_28, %c0_29] : memref<32x32xbf16, #tpu.memory_space<vmem>>, vector<32x32xbf16>
    %c0_30 = arith.constant 0 : index
    %c0_31 = arith.constant 0 : index
    %27 = vector.load %arg15[%c0_30, %c0_31] : memref<32x32xf32, #tpu.memory_space<vmem>>, vector<32x32xf32>
    %c0_32 = arith.constant 0 : index
    %c0_33 = arith.constant 0 : index
    %28 = vector.load %arg16[%c0_32, %c0_33] : memref<32x32xbf16, #tpu.memory_space<vmem>>, vector<32x32xbf16>
    %c0_34 = arith.constant 0 : index
    %c0_35 = arith.constant 0 : index
    %29 = vector.load %arg17[%c0_34, %c0_35] : memref<32x32xf32, #tpu.memory_space<vmem>>, vector<32x32xf32>
    %c0_36 = arith.constant 0 : index
    %c0_37 = arith.constant 0 : index
    %30 = vector.load %arg18[%c0_36, %c0_37] : memref<64x32xbf16, #tpu.memory_space<vmem>>, vector<64x32xbf16>
    %c0_38 = arith.constant 0 : index
    %c0_39 = arith.constant 0 : index
    %31 = vector.load %arg19[%c0_38, %c0_39] : memref<32x64xbf16, #tpu.memory_space<vmem>>, vector<32x64xbf16>
    %32 = arith.truncf %21 : vector<32x32xf32> to vector<32x32xbf16>
    %cst_40 = arith.constant dense<0.000000e+00> : vector<32x32xf32>
    %33 = tpu.matmul %22, %32, %cst_40 {dimension_numbers = #tpu.dot_dimension_numbers<[1], [0], [0], [1], [0, 0, 1, 1], [], []>} : vector<32x32xbf16>, vector<32x32xbf16>, vector<32x32xf32> -> vector<32x32xf32>
    %34 = arith.addf %33, %23 : vector<32x32xf32>
    %35 = arith.truncf %21 : vector<32x32xf32> to vector<32x32xbf16>
    %cst_41 = arith.constant dense<0.000000e+00> : vector<32x32xf32>
    %36 = tpu.matmul %24, %35, %cst_41 {dimension_numbers = #tpu.dot_dimension_numbers<[1], [0], [0], [1], [0, 0, 1, 1], [], []>} : vector<32x32xbf16>, vector<32x32xbf16>, vector<32x32xf32> -> vector<32x32xf32>
    %37 = arith.addf %36, %25 : vector<32x32xf32>
    %38 = arith.truncf %21 : vector<32x32xf32> to vector<32x32xbf16>
    %cst_42 = arith.constant dense<0.000000e+00> : vector<32x32xf32>
    %39 = tpu.matmul %26, %38, %cst_42 {dimension_numbers = #tpu.dot_dimension_numbers<[1], [0], [0], [1], [0, 0, 1, 1], [], []>} : vector<32x32xbf16>, vector<32x32xbf16>, vector<32x32xf32> -> vector<32x32xf32>
    %40 = arith.addf %39, %27 : vector<32x32xf32>
    %41 = arith.truncf %34 : vector<32x32xf32> to vector<32x32xbf16>
    %cst_43 = arith.constant dense<0.000000e+00> : vector<32x512xf32>
    %42 = tpu.matmul %41, %0, %cst_43 {dimension_numbers = #tpu.dot_dimension_numbers<[1], [0], [0], [1], [0, 0, 1, 1], [], []>} : vector<32x32xbf16>, vector<32x512xbf16>, vector<32x512xf32> -> vector<32x512xf32>
    %43 = arith.truncf %37 : vector<32x32xf32> to vector<32x32xbf16>
    %cst_44 = arith.constant dense<0.000000e+00> : vector<32x512xf32>
    %44 = tpu.matmul %43, %1, %cst_44 {dimension_numbers = #tpu.dot_dimension_numbers<[1], [0], [0], [1], [0, 0, 1, 1], [], []>} : vector<32x32xbf16>, vector<32x512xbf16>, vector<32x512xf32> -> vector<32x512xf32>
    %45 = arith.mulf %42, %44 : vector<32x512xf32>
    %46 = arith.truncf %45 : vector<32x512xf32> to vector<32x512xbf16>
    %cst_45 = arith.constant dense<0.000000e+00> : vector<32x32xf32>
    %47 = tpu.matmul %46, %3, %cst_45 {dimension_numbers = #tpu.dot_dimension_numbers<[1], [0], [0], [1], [0, 0, 1, 1], [], []>} : vector<32x512xbf16>, vector<512x32xbf16>, vector<32x32xf32> -> vector<32x32xf32>
    %cst_46 = arith.constant dense<0.000000e+00> : vector<32xf32>
    %48 = vector.multi_reduction <add>, %47, %cst_46 [0] : vector<32x32xf32> to vector<32xf32>
    %49 = vector.shape_cast %48 : vector<32xf32> to vector<1x32xf32>
    %cst_47 = arith.constant 3.125000e-02 : f32
    %50 = vector.broadcast %cst_47 : f32 to vector<1x32xf32>
    %51 = arith.mulf %49, %50 : vector<1x32xf32>
    %cst_48 = arith.constant -1.000000e+30 : f32
    %52 = vector.shape_cast %51 : vector<1x32xf32> to vector<1x32xf32>
    %53 = vector.broadcast %52 : vector<1x32xf32> to vector<2x32xf32>
    %54 = vector.broadcast %cst_48 : f32 to vector<2x32xf32>
    %55 = arith.select %18, %53, %54 : vector<2x32xi1>, vector<2x32xf32>
    %cst_49 = arith.constant dense<0xFF800000> : vector<2xf32>
    %56 = vector.multi_reduction <maximumf>, %55, %cst_49 [1] : vector<2x32xf32> to vector<2xf32>
    %57 = vector.shape_cast %56 : vector<2xf32> to vector<2x1xf32>
    %58 = vector.broadcast %57 : vector<2x1xf32> to vector<2x32xf32>
    %59 = arith.cmpf oge, %55, %58 : vector<2x32xf32>
    %cst_50 = arith.constant -1.000000e+30 : f32
    %60 = vector.broadcast %cst_50 : f32 to vector<2x32xf32>
    %61 = arith.select %59, %60, %55 : vector<2x32xi1>, vector<2x32xf32>
    %cst_51 = arith.constant dense<0xFF800000> : vector<2xf32>
    %62 = vector.multi_reduction <maximumf>, %61, %cst_51 [1] : vector<2x32xf32> to vector<2xf32>
    %63 = vector.shape_cast %62 : vector<2xf32> to vector<2x1xf32>
    %64 = vector.broadcast %63 : vector<2x1xf32> to vector<2x32xf32>
    %65 = arith.cmpf oge, %55, %64 : vector<2x32xf32>
    %66 = vector.broadcast %57 : vector<2x1xf32> to vector<2x32xf32>
    %67 = arith.subf %55, %66 : vector<2x32xf32>
    %68 = math.exp %67 : vector<2x32xf32>
    %cst_52 = arith.constant 0.000000e+00 : f32
    %69 = vector.broadcast %cst_52 : f32 to vector<2x32xf32>
    %70 = arith.select %65, %68, %69 : vector<2x32xi1>, vector<2x32xf32>
    %cst_53 = arith.constant dense<0.000000e+00> : vector<2xf32>
    %71 = vector.multi_reduction <add>, %70, %cst_53 [1] : vector<2x32xf32> to vector<2xf32>
    %72 = vector.shape_cast %71 : vector<2xf32> to vector<2x1xf32>
    %73 = vector.broadcast %72 : vector<2x1xf32> to vector<2x32xf32>
    %74 = arith.divf %70, %73 : vector<2x32xf32>
    %cst_54 = arith.constant dense<0.000000e+00> : vector<32xf32>
    %75 = vector.multi_reduction <add>, %74, %cst_54 [0] : vector<2x32xf32> to vector<32xf32>
    %76 = vector.shape_cast %75 : vector<32xf32> to vector<1x32xf32>
    %77 = arith.truncf %40 : vector<32x32xf32> to vector<32x32xbf16>
    %cst_55 = arith.constant dense<0.000000e+00> : vector<32x512xf32>
    %78 = tpu.matmul %77, %2, %cst_55 {dimension_numbers = #tpu.dot_dimension_numbers<[1], [0], [0], [1], [0, 0, 1, 1], [], []>} : vector<32x32xbf16>, vector<32x512xbf16>, vector<32x512xf32> -> vector<32x512xf32>
    %79 = arith.truncf %76 : vector<1x32xf32> to vector<1x32xbf16>
    %cst_56 = arith.constant dense<0.000000e+00> : vector<1x512xf32>
    %80 = tpu.matmul %79, %4, %cst_56 {dimension_numbers = #tpu.dot_dimension_numbers<[1], [0], [0], [1], [0, 0, 1, 1], [], []>} : vector<1x32xbf16>, vector<32x512xbf16>, vector<1x512xf32> -> vector<1x512xf32>
    %81 = vector.broadcast %80 : vector<1x512xf32> to vector<32x512xf32>
    %82 = arith.mulf %81, %78 : vector<32x512xf32>
    %83 = arith.truncf %82 : vector<32x512xf32> to vector<32x512xbf16>
    %cst_57 = arith.constant dense<0.000000e+00> : vector<32x32xf32>
    %84 = tpu.matmul %83, %5, %cst_57 {dimension_numbers = #tpu.dot_dimension_numbers<[1], [0], [0], [1], [0, 0, 1, 1], [], []>} : vector<32x512xbf16>, vector<512x32xbf16>, vector<32x32xf32> -> vector<32x32xf32>
    %85 = arith.truncf %84 : vector<32x32xf32> to vector<32x32xbf16>
    %cst_58 = arith.constant dense<0.000000e+00> : vector<32x32xf32>
    %86 = tpu.matmul %28, %85, %cst_58 {dimension_numbers = #tpu.dot_dimension_numbers<[1], [0], [0], [1], [0, 0, 1, 1], [], []>} : vector<32x32xbf16>, vector<32x32xbf16>, vector<32x32xf32> -> vector<32x32xf32>
    %87 = arith.addf %86, %29 : vector<32x32xf32>
    %88 = arith.addf %21, %87 : vector<32x32xf32>
    %89 = arith.truncf %88 : vector<32x32xf32> to vector<32x32xbf16>
    %cst_59 = arith.constant dense<0.000000e+00> : vector<32x32xf32>
    %90 = tpu.matmul %89, %6, %cst_59 {dimension_numbers = #tpu.dot_dimension_numbers<[1], [0], [0], [1], [0, 0, 1, 1], [], []>} : vector<32x32xbf16>, vector<32x32xbf16>, vector<32x32xf32> -> vector<32x32xf32>
    %91 = arith.truncf %90 : vector<32x32xf32> to vector<32x32xbf16>
    %cst_60 = arith.constant dense<0.000000e+00> : vector<64x32xf32>
    %92 = tpu.matmul %30, %91, %cst_60 {dimension_numbers = #tpu.dot_dimension_numbers<[1], [0], [0], [1], [0, 0, 1, 1], [], []>} : vector<64x32xbf16>, vector<32x32xbf16>, vector<64x32xf32> -> vector<64x32xf32>
    %cst_61 = arith.constant 0.000000e+00 : f32
    %93 = vector.broadcast %cst_61 : f32 to vector<64x32xf32>
    %94 = arith.maximumf %92, %93 : vector<64x32xf32>
    %95 = arith.truncf %94 : vector<64x32xf32> to vector<64x32xbf16>
    %cst_62 = arith.constant dense<0.000000e+00> : vector<32x32xf32>
    %96 = tpu.matmul %31, %95, %cst_62 {dimension_numbers = #tpu.dot_dimension_numbers<[1], [0], [0], [1], [0, 0, 1, 1], [], []>} : vector<32x64xbf16>, vector<64x32xbf16>, vector<32x32xf32> -> vector<32x32xf32>
    %97 = arith.addf %90, %96 : vector<32x32xf32>
    %98 = arith.truncf %97 : vector<32x32xf32> to vector<32x32xbf16>
    %cst_63 = arith.constant dense<0.000000e+00> : vector<32x32xf32>
    %99 = tpu.matmul %98, %6, %cst_63 {dimension_numbers = #tpu.dot_dimension_numbers<[1], [0], [0], [1], [0, 0, 1, 1], [], []>} : vector<32x32xbf16>, vector<32x32xbf16>, vector<32x32xf32> -> vector<32x32xf32>
    %c0_64 = arith.constant 0 : index
    %c0_65 = arith.constant 0 : index
    %100 = vector.load %arg20[%c0_64, %c0_65] : memref<32x32xbf16, #tpu.memory_space<vmem>>, vector<32x32xbf16>
    %c0_66 = arith.constant 0 : index
    %c0_67 = arith.constant 0 : index
    %101 = vector.load %arg21[%c0_66, %c0_67] : memref<32x32xf32, #tpu.memory_space<vmem>>, vector<32x32xf32>
    %c0_68 = arith.constant 0 : index
    %c0_69 = arith.constant 0 : index
    %102 = vector.load %arg22[%c0_68, %c0_69] : memref<32x32xbf16, #tpu.memory_space<vmem>>, vector<32x32xbf16>
    %c0_70 = arith.constant 0 : index
    %c0_71 = arith.constant 0 : index
    %103 = vector.load %arg23[%c0_70, %c0_71] : memref<32x32xf32, #tpu.memory_space<vmem>>, vector<32x32xf32>
    %c0_72 = arith.constant 0 : index
    %c0_73 = arith.constant 0 : index
    %104 = vector.load %arg24[%c0_72, %c0_73] : memref<32x32xbf16, #tpu.memory_space<vmem>>, vector<32x32xbf16>
    %c0_74 = arith.constant 0 : index
    %c0_75 = arith.constant 0 : index
    %105 = vector.load %arg25[%c0_74, %c0_75] : memref<32x32xf32, #tpu.memory_space<vmem>>, vector<32x32xf32>
    %c0_76 = arith.constant 0 : index
    %c0_77 = arith.constant 0 : index
    %106 = vector.load %arg26[%c0_76, %c0_77] : memref<32x32xbf16, #tpu.memory_space<vmem>>, vector<32x32xbf16>
    %c0_78 = arith.constant 0 : index
    %c0_79 = arith.constant 0 : index
    %107 = vector.load %arg27[%c0_78, %c0_79] : memref<32x32xf32, #tpu.memory_space<vmem>>, vector<32x32xf32>
    %c0_80 = arith.constant 0 : index
    %c0_81 = arith.constant 0 : index
    %108 = vector.load %arg28[%c0_80, %c0_81] : memref<64x32xbf16, #tpu.memory_space<vmem>>, vector<64x32xbf16>
    %c0_82 = arith.constant 0 : index
    %c0_83 = arith.constant 0 : index
    %109 = vector.load %arg29[%c0_82, %c0_83] : memref<32x64xbf16, #tpu.memory_space<vmem>>, vector<32x64xbf16>
    %110 = arith.truncf %99 : vector<32x32xf32> to vector<32x32xbf16>
    %cst_84 = arith.constant dense<0.000000e+00> : vector<32x32xf32>
    %111 = tpu.matmul %100, %110, %cst_84 {dimension_numbers = #tpu.dot_dimension_numbers<[1], [0], [0], [1], [0, 0, 1, 1], [], []>} : vector<32x32xbf16>, vector<32x32xbf16>, vector<32x32xf32> -> vector<32x32xf32>
    %112 = arith.addf %111, %101 : vector<32x32xf32>
    %113 = arith.truncf %99 : vector<32x32xf32> to vector<32x32xbf16>
    %cst_85 = arith.constant dense<0.000000e+00> : vector<32x32xf32>
    %114 = tpu.matmul %102, %113, %cst_85 {dimension_numbers = #tpu.dot_dimension_numbers<[1], [0], [0], [1], [0, 0, 1, 1], [], []>} : vector<32x32xbf16>, vector<32x32xbf16>, vector<32x32xf32> -> vector<32x32xf32>
    %115 = arith.addf %114, %103 : vector<32x32xf32>
    %116 = arith.truncf %99 : vector<32x32xf32> to vector<32x32xbf16>
    %cst_86 = arith.constant dense<0.000000e+00> : vector<32x32xf32>
    %117 = tpu.matmul %104, %116, %cst_86 {dimension_numbers = #tpu.dot_dimension_numbers<[1], [0], [0], [1], [0, 0, 1, 1], [], []>} : vector<32x32xbf16>, vector<32x32xbf16>, vector<32x32xf32> -> vector<32x32xf32>
    %118 = arith.addf %117, %105 : vector<32x32xf32>
    %119 = arith.truncf %112 : vector<32x32xf32> to vector<32x32xbf16>
    %cst_87 = arith.constant dense<0.000000e+00> : vector<32x512xf32>
    %120 = tpu.matmul %119, %0, %cst_87 {dimension_numbers = #tpu.dot_dimension_numbers<[1], [0], [0], [1], [0, 0, 1, 1], [], []>} : vector<32x32xbf16>, vector<32x512xbf16>, vector<32x512xf32> -> vector<32x512xf32>
    %121 = arith.truncf %115 : vector<32x32xf32> to vector<32x32xbf16>
    %cst_88 = arith.constant dense<0.000000e+00> : vector<32x512xf32>
    %122 = tpu.matmul %121, %1, %cst_88 {dimension_numbers = #tpu.dot_dimension_numbers<[1], [0], [0], [1], [0, 0, 1, 1], [], []>} : vector<32x32xbf16>, vector<32x512xbf16>, vector<32x512xf32> -> vector<32x512xf32>
    %123 = arith.mulf %120, %122 : vector<32x512xf32>
    %124 = arith.truncf %123 : vector<32x512xf32> to vector<32x512xbf16>
    %cst_89 = arith.constant dense<0.000000e+00> : vector<32x32xf32>
    %125 = tpu.matmul %124, %3, %cst_89 {dimension_numbers = #tpu.dot_dimension_numbers<[1], [0], [0], [1], [0, 0, 1, 1], [], []>} : vector<32x512xbf16>, vector<512x32xbf16>, vector<32x32xf32> -> vector<32x32xf32>
    %cst_90 = arith.constant dense<0.000000e+00> : vector<32xf32>
    %126 = vector.multi_reduction <add>, %125, %cst_90 [0] : vector<32x32xf32> to vector<32xf32>
    %127 = vector.shape_cast %126 : vector<32xf32> to vector<1x32xf32>
    %cst_91 = arith.constant 3.125000e-02 : f32
    %128 = vector.broadcast %cst_91 : f32 to vector<1x32xf32>
    %129 = arith.mulf %127, %128 : vector<1x32xf32>
    %cst_92 = arith.constant -1.000000e+30 : f32
    %130 = vector.shape_cast %129 : vector<1x32xf32> to vector<1x32xf32>
    %131 = vector.broadcast %130 : vector<1x32xf32> to vector<2x32xf32>
    %132 = vector.broadcast %cst_92 : f32 to vector<2x32xf32>
    %133 = arith.select %18, %131, %132 : vector<2x32xi1>, vector<2x32xf32>
    %cst_93 = arith.constant dense<0xFF800000> : vector<2xf32>
    %134 = vector.multi_reduction <maximumf>, %133, %cst_93 [1] : vector<2x32xf32> to vector<2xf32>
    %135 = vector.shape_cast %134 : vector<2xf32> to vector<2x1xf32>
    %136 = vector.broadcast %135 : vector<2x1xf32> to vector<2x32xf32>
    %137 = arith.cmpf oge, %133, %136 : vector<2x32xf32>
    %cst_94 = arith.constant -1.000000e+30 : f32
    %138 = vector.broadcast %cst_94 : f32 to vector<2x32xf32>
    %139 = arith.select %137, %138, %133 : vector<2x32xi1>, vector<2x32xf32>
    %cst_95 = arith.constant dense<0xFF800000> : vector<2xf32>
    %140 = vector.multi_reduction <maximumf>, %139, %cst_95 [1] : vector<2x32xf32> to vector<2xf32>
    %141 = vector.shape_cast %140 : vector<2xf32> to vector<2x1xf32>
    %142 = vector.broadcast %141 : vector<2x1xf32> to vector<2x32xf32>
    %143 = arith.cmpf oge, %133, %142 : vector<2x32xf32>
    %144 = vector.broadcast %135 : vector<2x1xf32> to vector<2x32xf32>
    %145 = arith.subf %133, %144 : vector<2x32xf32>
    %146 = math.exp %145 : vector<2x32xf32>
    %cst_96 = arith.constant 0.000000e+00 : f32
    %147 = vector.broadcast %cst_96 : f32 to vector<2x32xf32>
    %148 = arith.select %143, %146, %147 : vector<2x32xi1>, vector<2x32xf32>
    %cst_97 = arith.constant dense<0.000000e+00> : vector<2xf32>
    %149 = vector.multi_reduction <add>, %148, %cst_97 [1] : vector<2x32xf32> to vector<2xf32>
    %150 = vector.shape_cast %149 : vector<2xf32> to vector<2x1xf32>
    %151 = vector.broadcast %150 : vector<2x1xf32> to vector<2x32xf32>
    %152 = arith.divf %148, %151 : vector<2x32xf32>
    %cst_98 = arith.constant dense<0.000000e+00> : vector<32xf32>
    %153 = vector.multi_reduction <add>, %152, %cst_98 [0] : vector<2x32xf32> to vector<32xf32>
    %154 = vector.shape_cast %153 : vector<32xf32> to vector<1x32xf32>
    %155 = arith.truncf %118 : vector<32x32xf32> to vector<32x32xbf16>
    %cst_99 = arith.constant dense<0.000000e+00> : vector<32x512xf32>
    %156 = tpu.matmul %155, %2, %cst_99 {dimension_numbers = #tpu.dot_dimension_numbers<[1], [0], [0], [1], [0, 0, 1, 1], [], []>} : vector<32x32xbf16>, vector<32x512xbf16>, vector<32x512xf32> -> vector<32x512xf32>
    %157 = arith.truncf %154 : vector<1x32xf32> to vector<1x32xbf16>
    %cst_100 = arith.constant dense<0.000000e+00> : vector<1x512xf32>
    %158 = tpu.matmul %157, %4, %cst_100 {dimension_numbers = #tpu.dot_dimension_numbers<[1], [0], [0], [1], [0, 0, 1, 1], [], []>} : vector<1x32xbf16>, vector<32x512xbf16>, vector<1x512xf32> -> vector<1x512xf32>
    %159 = vector.broadcast %158 : vector<1x512xf32> to vector<32x512xf32>
    %160 = arith.mulf %159, %156 : vector<32x512xf32>
    %161 = arith.truncf %160 : vector<32x512xf32> to vector<32x512xbf16>
    %cst_101 = arith.constant dense<0.000000e+00> : vector<32x32xf32>
    %162 = tpu.matmul %161, %5, %cst_101 {dimension_numbers = #tpu.dot_dimension_numbers<[1], [0], [0], [1], [0, 0, 1, 1], [], []>} : vector<32x512xbf16>, vector<512x32xbf16>, vector<32x32xf32> -> vector<32x32xf32>
    %163 = arith.truncf %162 : vector<32x32xf32> to vector<32x32xbf16>
    %cst_102 = arith.constant dense<0.000000e+00> : vector<32x32xf32>
    %164 = tpu.matmul %106, %163, %cst_102 {dimension_numbers = #tpu.dot_dimension_numbers<[1], [0], [0], [1], [0, 0, 1, 1], [], []>} : vector<32x32xbf16>, vector<32x32xbf16>, vector<32x32xf32> -> vector<32x32xf32>
    %165 = arith.addf %164, %107 : vector<32x32xf32>
    %166 = arith.addf %99, %165 : vector<32x32xf32>
    %167 = arith.truncf %166 : vector<32x32xf32> to vector<32x32xbf16>
    %cst_103 = arith.constant dense<0.000000e+00> : vector<32x32xf32>
    %168 = tpu.matmul %167, %6, %cst_103 {dimension_numbers = #tpu.dot_dimension_numbers<[1], [0], [0], [1], [0, 0, 1, 1], [], []>} : vector<32x32xbf16>, vector<32x32xbf16>, vector<32x32xf32> -> vector<32x32xf32>
    %169 = arith.truncf %168 : vector<32x32xf32> to vector<32x32xbf16>
    %cst_104 = arith.constant dense<0.000000e+00> : vector<64x32xf32>
    %170 = tpu.matmul %108, %169, %cst_104 {dimension_numbers = #tpu.dot_dimension_numbers<[1], [0], [0], [1], [0, 0, 1, 1], [], []>} : vector<64x32xbf16>, vector<32x32xbf16>, vector<64x32xf32> -> vector<64x32xf32>
    %cst_105 = arith.constant 0.000000e+00 : f32
    %171 = vector.broadcast %cst_105 : f32 to vector<64x32xf32>
    %172 = arith.maximumf %170, %171 : vector<64x32xf32>
    %173 = arith.truncf %172 : vector<64x32xf32> to vector<64x32xbf16>
    %cst_106 = arith.constant dense<0.000000e+00> : vector<32x32xf32>
    %174 = tpu.matmul %109, %173, %cst_106 {dimension_numbers = #tpu.dot_dimension_numbers<[1], [0], [0], [1], [0, 0, 1, 1], [], []>} : vector<32x64xbf16>, vector<64x32xbf16>, vector<32x32xf32> -> vector<32x32xf32>
    %175 = arith.addf %168, %174 : vector<32x32xf32>
    %176 = arith.truncf %175 : vector<32x32xf32> to vector<32x32xbf16>
    %cst_107 = arith.constant dense<0.000000e+00> : vector<32x32xf32>
    %177 = tpu.matmul %176, %6, %cst_107 {dimension_numbers = #tpu.dot_dimension_numbers<[1], [0], [0], [1], [0, 0, 1, 1], [], []>} : vector<32x32xbf16>, vector<32x32xbf16>, vector<32x32xf32> -> vector<32x32xf32>
    %cst_108 = arith.constant dense<0.000000e+00> : vector<32xf32>
    %178 = vector.multi_reduction <add>, %177, %cst_108 [0] : vector<32x32xf32> to vector<32xf32>
    %179 = vector.shape_cast %178 : vector<32xf32> to vector<1x32xf32>
    %cst_109 = arith.constant 3.200000e+01 : f32
    %180 = vector.broadcast %cst_109 : f32 to vector<1x32xf32>
    %181 = arith.divf %179, %180 : vector<1x32xf32>
    %182 = vector.broadcast %181 : vector<1x32xf32> to vector<32x32xf32>
    %183 = arith.subf %177, %182 : vector<32x32xf32>
    %184 = arith.mulf %183, %183 : vector<32x32xf32>
    %cst_110 = arith.constant dense<0.000000e+00> : vector<32xf32>
    %185 = vector.multi_reduction <add>, %184, %cst_110 [0] : vector<32x32xf32> to vector<32xf32>
    %186 = vector.shape_cast %185 : vector<32xf32> to vector<1x32xf32>
    %cst_111 = arith.constant 3.200000e+01 : f32
    %187 = vector.broadcast %cst_111 : f32 to vector<1x32xf32>
    %188 = arith.divf %186, %187 : vector<1x32xf32>
    %189 = vector.broadcast %181 : vector<1x32xf32> to vector<32x32xf32>
    %190 = arith.subf %177, %189 : vector<32x32xf32>
    %cst_112 = arith.constant 9.99999974E-6 : f32
    %191 = vector.broadcast %cst_112 : f32 to vector<1x32xf32>
    %192 = arith.addf %188, %191 : vector<1x32xf32>
    %193 = math.rsqrt %192 : vector<1x32xf32>
    %194 = vector.broadcast %193 : vector<1x32xf32> to vector<32x32xf32>
    %195 = arith.mulf %190, %194 : vector<32x32xf32>
    %c0_113 = arith.constant 0 : index
    %c0_114 = arith.constant 0 : index
    %196 = vector.load %arg30[%c0_113, %c0_114] : memref<32x32xf32, #tpu.memory_space<vmem>>, vector<32x32xf32>
    %197 = arith.mulf %195, %196 : vector<32x32xf32>
    %c0_115 = arith.constant 0 : index
    %c0_116 = arith.constant 0 : index
    %198 = vector.load %arg31[%c0_115, %c0_116] : memref<32x32xf32, #tpu.memory_space<vmem>>, vector<32x32xf32>
    %199 = arith.addf %197, %198 : vector<32x32xf32>
    %200 = arith.truncf %199 : vector<32x32xf32> to vector<32x32xbf16>
    %cst_117 = arith.constant dense<0.000000e+00> : vector<32x32xf32>
    %201 = tpu.matmul %200, %7, %cst_117 {dimension_numbers = #tpu.dot_dimension_numbers<[1], [0], [0], [1], [0, 0, 1, 1], [], []>} : vector<32x32xbf16>, vector<32x32xbf16>, vector<32x32xf32> -> vector<32x32xf32>
    %c0_118 = arith.constant 0 : index
    %c0_119 = arith.constant 0 : index
    %202 = vector.load %arg32[%c0_118, %c0_119] : memref<8x32xbf16, #tpu.memory_space<vmem>>, vector<8x32xbf16>
    %203 = arith.truncf %201 : vector<32x32xf32> to vector<32x32xbf16>
    %cst_120 = arith.constant dense<0.000000e+00> : vector<8x32xf32>
    %204 = tpu.matmul %202, %203, %cst_120 {dimension_numbers = #tpu.dot_dimension_numbers<[1], [0], [0], [1], [0, 0, 1, 1], [], []>} : vector<8x32xbf16>, vector<32x32xbf16>, vector<8x32xf32> -> vector<8x32xf32>
    %c0_121 = arith.constant 0 : index
    %c0_122 = arith.constant 0 : index
    %205 = vector.load %arg33[%c0_121, %c0_122] : memref<8x32xf32, #tpu.memory_space<vmem>>, vector<8x32xf32>
    %206 = arith.addf %204, %205 : vector<8x32xf32>
    %c0_123 = arith.constant 0 : index
    %c0_124 = arith.constant 0 : index
    %207 = vector.load %arg34[%c0_123, %c0_124] : memref<8x32xf32, #tpu.memory_space<vmem>>, vector<8x32xf32>
    tpu.vector_store %arg34[%c0_123, %c0_124], %206 {strides = array<i32>} : memref<8x32xf32, #tpu.memory_space<vmem>>, vector<8x32xf32>,
    return
  }
}

</mosaic_0001>

<llo_original>
// kernel: tpu_custom_call.1
$region0: #{tpu_custom_call.1}
  #allocation0 [shape = 'u32[]', space=smem, size = 0x4, offset = 0x4, fixed_abs, tag = 'smem constant byte address 0x4 - core index']
  #allocation1 [shape = 'u32[144,128]{1,0:T(1,128)}', space=vmem, size = 0x12000, scoped, tag = 'internal scratch']
  %s0 = inlined_call_operand.smem [shape: u32[35], index: -1, kind: input, shape index: {}]
  %s1 = sld [smem:[%s0]]
  %s2 = scalar_lea.smem %s0, 1
  %s3 = sld [smem:[%s2]]
  %s4 = scalar_lea.smem %s0, 2
  %s5 = sld [smem:[%s4]]
  %s6 = scalar_lea.smem %s0, 3
  %s7 = sld [smem:[%s6]]
  %s8 = scalar_lea.smem %s0, 4
  %s9 = sld [smem:[%s8]]
  %s10 = scalar_lea.smem %s0, 5
  %s11 = sld [smem:[%s10]]
  %s12 = scalar_lea.smem %s0, 6
  %s13 = sld [smem:[%s12]]
  %s14 = scalar_lea.smem %s0, 7
  %s15 = sld [smem:[%s14]]
  %s16 = scalar_lea.smem %s0, 8
  %s17 = sld [smem:[%s16]]
  %s18 = scalar_lea.smem %s0, 9
  %s19 = sld [smem:[%s18]]
  %s20 = scalar_lea.smem %s0, 10
  %s21 = sld [smem:[%s20]]
  %s22 = scalar_lea.smem %s0, 11
  %s23 = sld [smem:[%s22]]
  %s24 = scalar_lea.smem %s0, 12
  %s25 = sld [smem:[%s24]]
  %s26 = scalar_lea.smem %s0, 13
  %s27 = sld [smem:[%s26]]
  %s28 = scalar_lea.smem %s0, 14
  %s29 = sld [smem:[%s28]]
  %s30 = scalar_lea.smem %s0, 15
  %s31 = sld [smem:[%s30]]
  %s32 = scalar_lea.smem %s0, 16
  %s33 = sld [smem:[%s32]]
  %s34 = scalar_lea.smem %s0, 17
  %s35 = sld [smem:[%s34]]
  %s36 = scalar_lea.smem %s0, 18
  %s37 = sld [smem:[%s36]]
  %s38 = scalar_lea.smem %s0, 19
  %s39 = sld [smem:[%s38]]
  %s40 = scalar_lea.smem %s0, 20
  %s41 = sld [smem:[%s40]]
  %s42 = scalar_lea.smem %s0, 21
  %s43 = sld [smem:[%s42]]
  %s44 = scalar_lea.smem %s0, 22
  %s45 = sld [smem:[%s44]]
  %s46 = scalar_lea.smem %s0, 23
  %s47 = sld [smem:[%s46]]
  %s48 = scalar_lea.smem %s0, 24
  %s49 = sld [smem:[%s48]]
  %s50 = scalar_lea.smem %s0, 25
  %s51 = sld [smem:[%s50]]
  %s52 = scalar_lea.smem %s0, 26
  %s53 = sld [smem:[%s52]]
  %s54 = scalar_lea.smem %s0, 27
  %s55 = sld [smem:[%s54]]
  %s56 = scalar_lea.smem %s0, 28
  %s57 = sld [smem:[%s56]]
  %s58 = scalar_lea.smem %s0, 29
  %s59 = sld [smem:[%s58]]
  %s60 = scalar_lea.smem %s0, 30
  %s61 = sld [smem:[%s60]]
  %s62 = scalar_lea.smem %s0, 31
  %s63 = sld [smem:[%s62]]
  %s64 = scalar_lea.smem %s0, 32
  %s65 = sld [smem:[%s64]]
  %s66 = scalar_lea.smem %s0, 33
  %s67 = sld [smem:[%s66]]
  %s68 = scalar_lea.smem %s0, 34
  %s69 = sld [smem:[%s68]]
  %s70 = sld [smem:[#allocation0]]
  $region166: #{tpu_custom_call.1} parent=0
    _
  %s72 = ssub.s32 1, %s70
  %s73 = scalar_select 0, %s72, %s70
  $region1: #{tpu_custom_call.1} parent=0
    #allocation2 [shape = 'u8[4096]{0}', space=vmem, size = 0x1000, scoped, tag = 'input window, operand 0, single buffered']
    #allocation3 [shape = 's32[1]{0}', space=sflag, size = 0x4, scoped, tag = 'scoped memory for tpu_custom_call.1']
    #allocation4 [shape = 's32[1]{0}', space=sflag, size = 0x4, scoped, tag = 'scoped memory for tpu_custom_call.1']
    #allocation5 [shape = 'u8[8192]{0}', space=vmem, size = 0x2000, scoped, tag = 'input window, operand 20, single buffered']
    #allocation6 [shape = 's32[1]{0}', space=sflag, size = 0x4, scoped, tag = 'scoped memory for tpu_custom_call.1']
    #allocation7 [shape = 'u8[8192]{0}', space=vmem, size = 0x2000, scoped, tag = 'input window, operand 26, single buffered']
    #allocation8 [shape = 'u8[8192]{0}', space=vmem, size = 0x2000, scoped, tag = 'input window, operand 29, single buffered']
    #allocation9 [shape = 's32[1]{0}', space=sflag, size = 0x4, scoped, tag = 'scoped memory for tpu_custom_call.1']
    #allocation10 [shape = 'u8[2048]{0}', space=vmem, size = 0x800, scoped, tag = 'input window, operand 32, single buffered']
    #allocation11 [shape = 'u8[4096]{0}', space=vmem, size = 0x1000, scoped, tag = 'output window, operand 0, single buffered']
    %74 = vsyncpa [#allocation3], 0
    %75 = vsyncpa [#allocation6], 0
    %76 = vsyncpa [#allocation9], 0
    %77 = vsyncpa [#allocation4], 0
    // Predicated region
    $region2: #{tpu_custom_call.1} parent=1 // pred_check
      _
    $region3: #{tpu_custom_call.1} parent=1 // pred_check_branch
      %79 = sbr.rel (0) target = $region5
    $region4: #{tpu_custom_call.1} parent=1 // pred_region
      %s81 = ssub.s32 128, 128
      %82 = vsyncadd [#allocation3], %s81
      %s83 = sshll.u32 [#allocation2], 4
      %s84 = int_to_ptr.vmem [resolvable:$true] %s83
      %89 = dma.hbm_to_vmem [thread:$0]  %s1, 128, %s84, [#allocation3], 64, 64, 4
    $region5: #{tpu_custom_call.1} parent=1 // pred_fallthru
      _
    // Predicated region
    $region6: #{tpu_custom_call.1} parent=1 // pred_check
      _
    $region7: #{tpu_custom_call.1} parent=1 // pred_check_branch
      %91 = sbr.rel (0) target = $region9
    $region8: #{tpu_custom_call.1} parent=1 // pred_region
      _
    $region9: #{tpu_custom_call.1} parent=1 // pred_fallthru
      _
    // Predicated region
    $region10: #{tpu_custom_call.1} parent=1 // pred_check
      _
    $region11: #{tpu_custom_call.1} parent=1 // pred_check_branch
      %93 = sbr.rel (0) target = $region13
    $region12: #{tpu_custom_call.1} parent=1 // pred_region
      _
    $region13: #{tpu_custom_call.1} parent=1 // pred_fallthru
      _
    // Predicated region
    $region14: #{tpu_custom_call.1} parent=1 // pred_check
      _
    $region15: #{tpu_custom_call.1} parent=1 // pred_check_branch
      %95 = sbr.rel (0) target = $region17
    $region16: #{tpu_custom_call.1} parent=1 // pred_region
      _
    $region17: #{tpu_custom_call.1} parent=1 // pred_fallthru
      _
    // Predicated region
    $region18: #{tpu_custom_call.1} parent=1 // pred_check
      _
    $region19: #{tpu_custom_call.1} parent=1 // pred_check_branch
      %97 = sbr.rel (0) target = $region21
    $region20: #{tpu_custom_call.1} parent=1 // pred_region
      _
    $region21: #{tpu_custom_call.1} parent=1 // pred_fallthru
      _
    // Predicated region
    $region22: #{tpu_custom_call.1} parent=1 // pred_check
      _
    $region23: #{tpu_custom_call.1} parent=1 // pred_check_branch
      %99 = sbr.rel (0) target = $region25
    $region24: #{tpu_custom_call.1} parent=1 // pred_region
      _
    $region25: #{tpu_custom_call.1} parent=1 // pred_fallthru
      _
    // Predicated region
    $region26: #{tpu_custom_call.1} parent=1 // pred_check
      _
    $region27: #{tpu_custom_call.1} parent=1 // pred_check_branch
      %101 = sbr.rel (0) target = $region29
    $region28: #{tpu_custom_call.1} parent=1 // pred_region
      _
    $region29: #{tpu_custom_call.1} parent=1 // pred_fallthru
      _
    // Predicated region
    $region30: #{tpu_custom_call.1} parent=1 // pred_check
      _
    $region31: #{tpu_custom_call.1} parent=1 // pred_check_branch
      %103 = sbr.rel (0) target = $region33
    $region32: #{tpu_custom_call.1} parent=1 // pred_region
      _
    $region33: #{tpu_custom_call.1} parent=1 // pred_fallthru
      _
    // Predicated region
    $region34: #{tpu_custom_call.1} parent=1 // pred_check
      _
    $region35: #{tpu_custom_call.1} parent=1 // pred_check_branch
      %105 = sbr.rel (0) target = $region37
    $region36: #{tpu_custom_call.1} parent=1 // pred_region
      _
    $region37: #{tpu_custom_call.1} parent=1 // pred_fallthru
      _
    // Predicated region
    $region38: #{tpu_custom_call.1} parent=1 // pred_check
      _
    $region39: #{tpu_custom_call.1} parent=1 // pred_check_branch
      %107 = sbr.rel (0) target = $region41
    $region40: #{tpu_custom_call.1} parent=1 // pred_region
      _
    $region41: #{tpu_custom_call.1} parent=1 // pred_fallthru
      _
    // Predicated region
    $region42: #{tpu_custom_call.1} parent=1 // pred_check
      _
    $region43: #{tpu_custom_call.1} parent=1 // pred_check_branch
      %109 = sbr.rel (0) target = $region45
    $region44: #{tpu_custom_call.1} parent=1 // pred_region
      _
    $region45: #{tpu_custom_call.1} parent=1 // pred_fallthru
      _
    // Predicated region
    $region46: #{tpu_custom_call.1} parent=1 // pred_check
      _
    $region47: #{tpu_custom_call.1} parent=1 // pred_check_branch
      %111 = sbr.rel (0) target = $region49
    $region48: #{tpu_custom_call.1} parent=1 // pred_region
      _
    $region49: #{tpu_custom_call.1} parent=1 // pred_fallthru
      _
    // Predicated region
    $region50: #{tpu_custom_call.1} parent=1 // pred_check
      _
    $region51: #{tpu_custom_call.1} parent=1 // pred_check_branch
      %113 = sbr.rel (0) target = $region53
    $region52: #{tpu_custom_call.1} parent=1 // pred_region
      _
    $region53: #{tpu_custom_call.1} parent=1 // pred_fallthru
      _
    // Predicated region
    $region54: #{tpu_custom_call.1} parent=1 // pred_check
      _
    $region55: #{tpu_custom_call.1} parent=1 // pred_check_branch
      %115 = sbr.rel (0) target = $region57
    $region56: #{tpu_custom_call.1} parent=1 // pred_region
      _
    $region57: #{tpu_custom_call.1} parent=1 // pred_fallthru
      _
    // Predicated region
    $region58: #{tpu_custom_call.1} parent=1 // pred_check
      _
    $region59: #{tpu_custom_call.1} parent=1 // pred_check_branch
      %117 = sbr.rel (0) target = $region61
    $region60: #{tpu_custom_call.1} parent=1 // pred_region
      _
    $region61: #{tpu_custom_call.1} parent=1 // pred_fallthru
      _
    // Predicated region
    $region62: #{tpu_custom_call.1} parent=1 // pred_check
      _
    $region63: #{tpu_custom_call.1} parent=1 // pred_check_branch
      %119 = sbr.rel (0) target = $region65
    $region64: #{tpu_custom_call.1} parent=1 // pred_region
      _
    $region65: #{tpu_custom_call.1} parent=1 // pred_fallthru
      _
    // Predicated region
    $region66: #{tpu_custom_call.1} parent=1 // pred_check
      _
    $region67: #{tpu_custom_call.1} parent=1 // pred_check_branch
      %121 = sbr.rel (0) target = $region69
    $region68: #{tpu_custom_call.1} parent=1 // pred_region
      _
    $region69: #{tpu_custom_call.1} parent=1 // pred_fallthru
      _
    // Predicated region
    $region70: #{tpu_custom_call.1} parent=1 // pred_check
      _
    $region71: #{tpu_custom_call.1} parent=1 // pred_check_branch
      %123 = sbr.rel (0) target = $region73
    $region72: #{tpu_custom_call.1} parent=1 // pred_region
      _
    $region73: #{tpu_custom_call.1} parent=1 // pred_fallthru
      _
    // Predicated region
    $region74: #{tpu_custom_call.1} parent=1 // pred_check
      _
    $region75: #{tpu_custom_call.1} parent=1 // pred_check_branch
      %125 = sbr.rel (0) target = $region77
    $region76: #{tpu_custom_call.1} parent=1 // pred_region
      _
    $region77: #{tpu_custom_call.1} parent=1 // pred_fallthru
      _
    // Predicated region
    $region78: #{tpu_custom_call.1} parent=1 // pred_check
      _
    $region79: #{tpu_custom_call.1} parent=1 // pred_check_branch
      %127 = sbr.rel (0) target = $region81
    $region80: #{tpu_custom_call.1} parent=1 // pred_region
      _
    $region81: #{tpu_custom_call.1} parent=1 // pred_fallthru
      _
    // Predicated region
    $region82: #{tpu_custom_call.1} parent=1 // pred_check
      _
    $region83: #{tpu_custom_call.1} parent=1 // pred_check_branch
      %129 = sbr.rel (0) target = $region85
    $region84: #{tpu_custom_call.1} parent=1 // pred_region
      %s131 = ssub.s32 256, 256
      %132 = vsyncadd [#allocation6], %s131
      %s133 = sshll.u32 [#allocation5], 4
      %s134 = int_to_ptr.vmem [resolvable:$true] %s133
      %139 = dma.hbm_to_vmem [thread:$0]  %s41, 256, %s134, [#allocation6], 64, 64, 4
    $region85: #{tpu_custom_call.1} parent=1 // pred_fallthru
      _
    // Predicated region
    $region86: #{tpu_custom_call.1} parent=1 // pred_check
      _
    $region87: #{tpu_custom_call.1} parent=1 // pred_check_branch
      %141 = sbr.rel (0) target = $region89
    $region88: #{tpu_custom_call.1} parent=1 // pred_region
      _
    $region89: #{tpu_custom_call.1} parent=1 // pred_fallthru
      _
    // Predicated region
    $region90: #{tpu_custom_call.1} parent=1 // pred_check
      _
    $region91: #{tpu_custom_call.1} parent=1 // pred_check_branch
      %143 = sbr.rel (0) target = $region93
    $region92: #{tpu_custom_call.1} parent=1 // pred_region
      _
    $region93: #{tpu_custom_call.1} parent=1 // pred_fallthru
      _
    // Predicated region
    $region94: #{tpu_custom_call.1} parent=1 // pred_check
      _
    $region95: #{tpu_custom_call.1} parent=1 // pred_check_branch
      %145 = sbr.rel (0) target = $region97
    $region96: #{tpu_custom_call.1} parent=1 // pred_region
      _
    $region97: #{tpu_custom_call.1} parent=1 // pred_fallthru
      _
    // Predicated region
    $region98: #{tpu_custom_call.1} parent=1 // pred_check
      _
    $region99: #{tpu_custom_call.1} parent=1 // pred_check_branch
      %147 = sbr.rel (0) target = $region101
    $region100: #{tpu_custom_call.1} parent=1 // pred_region
      _
    $region101: #{tpu_custom_call.1} parent=1 // pred_fallthru
      _
    // Predicated region
    $region102: #{tpu_custom_call.1} parent=1 // pred_check
      _
    $region103: #{tpu_custom_call.1} parent=1 // pred_check_branch
      %149 = sbr.rel (0) target = $region105
    $region104: #{tpu_custom_call.1} parent=1 // pred_region
      _
    $region105: #{tpu_custom_call.1} parent=1 // pred_fallthru
      _
    // Predicated region
    $region106: #{tpu_custom_call.1} parent=1 // pred_check
      _
    $region107: #{tpu_custom_call.1} parent=1 // pred_check_branch
      %151 = sbr.rel (0) target = $region109
    $region108: #{tpu_custom_call.1} parent=1 // pred_region
      %s153 = ssub.s32 256, 256
      %154 = vsyncadd [#allocation6], %s153
      %s155 = sshll.u32 [#allocation7], 4
      %s156 = int_to_ptr.vmem [resolvable:$true] %s155
      %161 = dma.hbm_to_vmem [thread:$0]  %s53, 256, %s156, [#allocation6], 64, 64, 4
    $region109: #{tpu_custom_call.1} parent=1 // pred_fallthru
      _
    // Predicated region
    $region110: #{tpu_custom_call.1} parent=1 // pred_check
      _
    $region111: #{tpu_custom_call.1} parent=1 // pred_check_branch
      %163 = sbr.rel (0) target = $region113
    $region112: #{tpu_custom_call.1} parent=1 // pred_region
      _
    $region113: #{tpu_custom_call.1} parent=1 // pred_fallthru
      _
    // Predicated region
    $region114: #{tpu_custom_call.1} parent=1 // pred_check
      _
    $region115: #{tpu_custom_call.1} parent=1 // pred_check_branch
      %165 = sbr.rel (0) target = $region117
    $region116: #{tpu_custom_call.1} parent=1 // pred_region
      _
    $region117: #{tpu_custom_call.1} parent=1 // pred_fallthru
      _
    // Predicated region
    $region118: #{tpu_custom_call.1} parent=1 // pred_check
      _
    $region119: #{tpu_custom_call.1} parent=1 // pred_check_branch
      %167 = sbr.rel (0) target = $region121
    $region120: #{tpu_custom_call.1} parent=1 // pred_region
      %s169 = ssub.s32 256, 256
      %170 = vsyncadd [#allocation9], %s169
      %s171 = sshll.u32 [#allocation8], 4
      %s172 = int_to_ptr.vmem [resolvable:$true] %s171
      %177 = dma.hbm_to_vmem [thread:$0]  %s59, 256, %s172, [#allocation9], 64, 64, 4
    $region121: #{tpu_custom_call.1} parent=1 // pred_fallthru
      _
    // Predicated region
    $region122: #{tpu_custom_call.1} parent=1 // pred_check
      _
    $region123: #{tpu_custom_call.1} parent=1 // pred_check_branch
      %179 = sbr.rel (0) target = $region125
    $region124: #{tpu_custom_call.1} parent=1 // pred_region
      _
    $region125: #{tpu_custom_call.1} parent=1 // pred_fallthru
      _
    // Predicated region
    $region126: #{tpu_custom_call.1} parent=1 // pred_check
      _
    $region127: #{tpu_custom_call.1} parent=1 // pred_check_branch
      %181 = sbr.rel (0) target = $region129
    $region128: #{tpu_custom_call.1} parent=1 // pred_region
      _
    $region129: #{tpu_custom_call.1} parent=1 // pred_fallthru
      _
    // Predicated region
    $region130: #{tpu_custom_call.1} parent=1 // pred_check
      _
    $region131: #{tpu_custom_call.1} parent=1 // pred_check_branch
      %183 = sbr.rel (0) target = $region133
    $region132: #{tpu_custom_call.1} parent=1 // pred_region
      %s185 = ssub.s32 64, 64
      %186 = vsyncadd [#allocation9], %s185
      %s188 = sshll.u32 [#allocation10], 4
      %s189 = int_to_ptr.vmem [resolvable:$true] %s188
      %191 = dma.hbm_to_vmem [thread:$0]  %s65, 64, %s189, [#allocation9]
    $region133: #{tpu_custom_call.1} parent=1 // pred_fallthru
      _
    // Predicated region
    $region134: #{tpu_custom_call.1} parent=1 // pred_check
      _
    $region135: #{tpu_custom_call.1} parent=1 // pred_check_branch
      %193 = sbr.rel (0) target = $region137
    $region136: #{tpu_custom_call.1} parent=1 // pred_region
      _
    $region137: #{tpu_custom_call.1} parent=1 // pred_fallthru
      _
    // Predicated region
    $region138: #{tpu_custom_call.1} parent=1 // pred_check
      _
    $region139: #{tpu_custom_call.1} parent=1 // pred_check_branch
      %195 = sbr.rel (0) target = $region141
    $region140: #{tpu_custom_call.1} parent=1 // pred_region
      %196 = dma.done [#allocation3], 128
    $region141: #{tpu_custom_call.1} parent=1 // pred_fallthru
      _
    // Predicated region
    $region142: #{tpu_custom_call.1} parent=1 // pred_check
      _
    $region143: #{tpu_custom_call.1} parent=1 // pred_check_branch
      %198 = sbr.rel (0) target = $region145
    $region144: #{tpu_custom_call.1} parent=1 // pred_region
      %199 = dma.done [#allocation6], 256
    $region145: #{tpu_custom_call.1} parent=1 // pred_fallthru
      _
    // Predicated region
    $region146: #{tpu_custom_call.1} parent=1 // pred_check
      _
    $region147: #{tpu_custom_call.1} parent=1 // pred_check_branch
      %201 = sbr.rel (0) target = $region149
    $region148: #{tpu_custom_call.1} parent=1 // pred_region
      %202 = dma.done [#allocation6], 256
    $region149: #{tpu_custom_call.1} parent=1 // pred_fallthru
      _
    // Predicated region
    $region150: #{tpu_custom_call.1} parent=1 // pred_check
      _
    $region151: #{tpu_custom_call.1} parent=1 // pred_check_branch
      %204 = sbr.rel (0) target = $region153
    $region152: #{tpu_custom_call.1} parent=1 // pred_region
      %205 = dma.done [#allocation9], 256
    $region153: #{tpu_custom_call.1} parent=1 // pred_fallthru
      _
    // Predicated region
    $region154: #{tpu_custom_call.1} parent=1 // pred_check
      _
    $region155: #{tpu_custom_call.1} parent=1 // pred_check_branch
      %207 = sbr.rel (0) target = $region157
    $region156: #{tpu_custom_call.1} parent=1 // pred_region
      %208 = dma.done [#allocation9], 64
    $region157: #{tpu_custom_call.1} parent=1 // pred_fallthru
      _
    %v210 = vld [vmem:[%s5] sm:$0xff]
    %v211 = vld [vmem:[%s5 + $0x8] sm:$0xff]
    %v212 = vld [vmem:[%s5 + $0x10] sm:$0xff]
    %v213 = vld [vmem:[%s5 + $0x18] sm:$0xff]
    %v214 = vld [vmem:[%s5 + $0x20] sm:$0xff]
    %v215 = vld [vmem:[%s5 + $0x28] sm:$0xff]
    %v216 = vld [vmem:[%s5 + $0x30] sm:$0xff]
    %v217 = vld [vmem:[%s5 + $0x38] sm:$0xff]
    %v218 = vld [vmem:[%s7] sm:$0xff]
    %v219 = vld [vmem:[%s7 + $0x8] sm:$0xff]
    %v220 = vld [vmem:[%s7 + $0x10] sm:$0xff]
    %v221 = vld [vmem:[%s7 + $0x18] sm:$0xff]
    %v222 = vld [vmem:[%s7 + $0x20] sm:$0xff]
    %v223 = vld [vmem:[%s7 + $0x28] sm:$0xff]
    %v224 = vld [vmem:[%s7 + $0x30] sm:$0xff]
    %v225 = vld [vmem:[%s7 + $0x38] sm:$0xff]
    %v226 = vld [vmem:[%s9] sm:$0xff]
    %v227 = vld [vmem:[%s9 + $0x8] sm:$0xff]
    %v228 = vld [vmem:[%s9 + $0x10] sm:$0xff]
    %v229 = vld [vmem:[%s9 + $0x18] sm:$0xff]
    %v230 = vld [vmem:[%s9 + $0x20] sm:$0xff]
    %v231 = vld [vmem:[%s9 + $0x28] sm:$0xff]
    %v232 = vld [vmem:[%s9 + $0x30] sm:$0xff]
    %v233 = vld [vmem:[%s9 + $0x38] sm:$0xff]
    %v234 = vld [vmem:[%s11] sm:$0xf]
    %v235 = vld [vmem:[%s11 + $0x4] sm:$0xf]
    %v236 = vld [vmem:[%s11 + $0x8] sm:$0xf]
    %v237 = vld [vmem:[%s11 + $0xc] sm:$0xf]
    %v238 = vld [vmem:[%s11 + $0x10] sm:$0xf]
    %v239 = vld [vmem:[%s11 + $0x14] sm:$0xf]
    %v240 = vld [vmem:[%s11 + $0x18] sm:$0xf]
    %v241 = vld [vmem:[%s11 + $0x1c] sm:$0xf]
    %v242 = vld [vmem:[%s11 + $0x20] sm:$0xf]
    %v243 = vld [vmem:[%s11 + $0x24] sm:$0xf]
    %v244 = vld [vmem:[%s11 + $0x28] sm:$0xf]
    %v245 = vld [vmem:[%s11 + $0x2c] sm:$0xf]
    %v246 = vld [vmem:[%s11 + $0x30] sm:$0xf]
    %v247 = vld [vmem:[%s11 + $0x34] sm:$0xf]
    %v248 = vld [vmem:[%s11 + $0x38] sm:$0xf]
    %v249 = vld [vmem:[%s11 + $0x3c] sm:$0xf]
    %v250 = vld [vmem:[%s11 + $0x40] sm:$0xf]
    %v251 = vld [vmem:[%s11 + $0x44] sm:$0xf]
    %v252 = vld [vmem:[%s11 + $0x48] sm:$0xf]
    %v253 = vld [vmem:[%s11 + $0x4c] sm:$0xf]
    %v254 = vld [vmem:[%s11 + $0x50] sm:$0xf]
    %v255 = vld [vmem:[%s11 + $0x54] sm:$0xf]
    %v256 = vld [vmem:[%s11 + $0x58] sm:$0xf]
    %v257 = vld [vmem:[%s11 + $0x5c] sm:$0xf]
    %v258 = vld [vmem:[%s11 + $0x60] sm:$0xf]
    %v259 = vld [vmem:[%s11 + $0x64] sm:$0xf]
    %v260 = vld [vmem:[%s11 + $0x68] sm:$0xf]
    %v261 = vld [vmem:[%s11 + $0x6c] sm:$0xf]
    %v262 = vld [vmem:[%s11 + $0x70] sm:$0xf]
    %v263 = vld [vmem:[%s11 + $0x74] sm:$0xf]
    %v264 = vld [vmem:[%s11 + $0x78] sm:$0xf]
    %v265 = vld [vmem:[%s11 + $0x7c] sm:$0xf]
    %v266 = vld [vmem:[%s11 + $0x80] sm:$0xf]
    %v267 = vld [vmem:[%s11 + $0x84] sm:$0xf]
    %v268 = vld [vmem:[%s11 + $0x88] sm:$0xf]
    %v269 = vld [vmem:[%s11 + $0x8c] sm:$0xf]
    %v270 = vld [vmem:[%s11 + $0x90] sm:$0xf]
    %v271 = vld [vmem:[%s11 + $0x94] sm:$0xf]
    %v272 = vld [vmem:[%s11 + $0x98] sm:$0xf]
    %v273 = vld [vmem:[%s11 + $0x9c] sm:$0xf]
    %v274 = vld [vmem:[%s11 + $0xa0] sm:$0xf]
    %v275 = vld [vmem:[%s11 + $0xa4] sm:$0xf]
    %v276 = vld [vmem:[%s11 + $0xa8] sm:$0xf]
    %v277 = vld [vmem:[%s11 + $0xac] sm:$0xf]
    %v278 = vld [vmem:[%s11 + $0xb0] sm:$0xf]
    %v279 = vld [vmem:[%s11 + $0xb4] sm:$0xf]
    %v280 = vld [vmem:[%s11 + $0xb8] sm:$0xf]
    %v281 = vld [vmem:[%s11 + $0xbc] sm:$0xf]
    %v282 = vld [vmem:[%s11 + $0xc0] sm:$0xf]
    %v283 = vld [vmem:[%s11 + $0xc4] sm:$0xf]
    %v284 = vld [vmem:[%s11 + $0xc8] sm:$0xf]
    %v285 = vld [vmem:[%s11 + $0xcc] sm:$0xf]
    %v286 = vld [vmem:[%s11 + $0xd0] sm:$0xf]
    %v287 = vld [vmem:[%s11 + $0xd4] sm:$0xf]
    %v288 = vld [vmem:[%s11 + $0xd8] sm:$0xf]
    %v289 = vld [vmem:[%s11 + $0xdc] sm:$0xf]
    %v290 = vld [vmem:[%s11 + $0xe0] sm:$0xf]
    %v291 = vld [vmem:[%s11 + $0xe4] sm:$0xf]
    %v292 = vld [vmem:[%s11 + $0xe8] sm:$0xf]
    %v293 = vld [vmem:[%s11 + $0xec] sm:$0xf]
    %v294 = vld [vmem:[%s11 + $0xf0] sm:$0xf]
    %v295 = vld [vmem:[%s11 + $0xf4] sm:$0xf]
    %v296 = vld [vmem:[%s11 + $0xf8] sm:$0xf]
    %v297 = vld [vmem:[%s11 + $0xfc] sm:$0xf]
    %v298 = vld [vmem:[%s13] sm:$0xff]
    %v299 = vld [vmem:[%s13 + $0x8] sm:$0xff]
    %v300 = vld [vmem:[%s13 + $0x10] sm:$0xff]
    %v301 = vld [vmem:[%s13 + $0x18] sm:$0xff]
    %v302 = vld [vmem:[%s13 + $0x20] sm:$0xff]
    %v303 = vld [vmem:[%s13 + $0x28] sm:$0xff]
    %v304 = vld [vmem:[%s13 + $0x30] sm:$0xff]
    %v305 = vld [vmem:[%s13 + $0x38] sm:$0xff]
    %v306 = vld [vmem:[%s15] sm:$0xf]
    %v307 = vld [vmem:[%s15 + $0x4] sm:$0xf]
    %v308 = vld [vmem:[%s15 + $0x8] sm:$0xf]
    %v309 = vld [vmem:[%s15 + $0xc] sm:$0xf]
    %v310 = vld [vmem:[%s15 + $0x10] sm:$0xf]
    %v311 = vld [vmem:[%s15 + $0x14] sm:$0xf]
    %v312 = vld [vmem:[%s15 + $0x18] sm:$0xf]
    %v313 = vld [vmem:[%s15 + $0x1c] sm:$0xf]
    %v314 = vld [vmem:[%s15 + $0x20] sm:$0xf]
    %v315 = vld [vmem:[%s15 + $0x24] sm:$0xf]
    %v316 = vld [vmem:[%s15 + $0x28] sm:$0xf]
    %v317 = vld [vmem:[%s15 + $0x2c] sm:$0xf]
    %v318 = vld [vmem:[%s15 + $0x30] sm:$0xf]
    %v319 = vld [vmem:[%s15 + $0x34] sm:$0xf]
    %v320 = vld [vmem:[%s15 + $0x38] sm:$0xf]
    %v321 = vld [vmem:[%s15 + $0x3c] sm:$0xf]
    %v322 = vld [vmem:[%s15 + $0x40] sm:$0xf]
    %v323 = vld [vmem:[%s15 + $0x44] sm:$0xf]
    %v324 = vld [vmem:[%s15 + $0x48] sm:$0xf]
    %v325 = vld [vmem:[%s15 + $0x4c] sm:$0xf]
    %v326 = vld [vmem:[%s15 + $0x50] sm:$0xf]
    %v327 = vld [vmem:[%s15 + $0x54] sm:$0xf]
    %v328 = vld [vmem:[%s15 + $0x58] sm:$0xf]
    %v329 = vld [vmem:[%s15 + $0x5c] sm:$0xf]
    %v330 = vld [vmem:[%s15 + $0x60] sm:$0xf]
    %v331 = vld [vmem:[%s15 + $0x64] sm:$0xf]
    %v332 = vld [vmem:[%s15 + $0x68] sm:$0xf]
    %v333 = vld [vmem:[%s15 + $0x6c] sm:$0xf]
    %v334 = vld [vmem:[%s15 + $0x70] sm:$0xf]
    %v335 = vld [vmem:[%s15 + $0x74] sm:$0xf]
    %v336 = vld [vmem:[%s15 + $0x78] sm:$0xf]
    %v337 = vld [vmem:[%s15 + $0x7c] sm:$0xf]
    %v338 = vld [vmem:[%s15 + $0x80] sm:$0xf]
    %v339 = vld [vmem:[%s15 + $0x84] sm:$0xf]
    %v340 = vld [vmem:[%s15 + $0x88] sm:$0xf]
    %v341 = vld [vmem:[%s15 + $0x8c] sm:$0xf]
    %v342 = vld [vmem:[%s15 + $0x90] sm:$0xf]
    %v343 = vld [vmem:[%s15 + $0x94] sm:$0xf]
    %v344 = vld [vmem:[%s15 + $0x98] sm:$0xf]
    %v345 = vld [vmem:[%s15 + $0x9c] sm:$0xf]
    %v346 = vld [vmem:[%s15 + $0xa0] sm:$0xf]
    %v347 = vld [vmem:[%s15 + $0xa4] sm:$0xf]
    %v348 = vld [vmem:[%s15 + $0xa8] sm:$0xf]
    %v349 = vld [vmem:[%s15 + $0xac] sm:$0xf]
    %v350 = vld [vmem:[%s15 + $0xb0] sm:$0xf]
    %v351 = vld [vmem:[%s15 + $0xb4] sm:$0xf]
    %v352 = vld [vmem:[%s15 + $0xb8] sm:$0xf]
    %v353 = vld [vmem:[%s15 + $0xbc] sm:$0xf]
    %v354 = vld [vmem:[%s15 + $0xc0] sm:$0xf]
    %v355 = vld [vmem:[%s15 + $0xc4] sm:$0xf]
    %v356 = vld [vmem:[%s15 + $0xc8] sm:$0xf]
    %v357 = vld [vmem:[%s15 + $0xcc] sm:$0xf]
    %v358 = vld [vmem:[%s15 + $0xd0] sm:$0xf]
    %v359 = vld [vmem:[%s15 + $0xd4] sm:$0xf]
    %v360 = vld [vmem:[%s15 + $0xd8] sm:$0xf]
    %v361 = vld [vmem:[%s15 + $0xdc] sm:$0xf]
    %v362 = vld [vmem:[%s15 + $0xe0] sm:$0xf]
    %v363 = vld [vmem:[%s15 + $0xe4] sm:$0xf]
    %v364 = vld [vmem:[%s15 + $0xe8] sm:$0xf]
    %v365 = vld [vmem:[%s15 + $0xec] sm:$0xf]
    %v366 = vld [vmem:[%s15 + $0xf0] sm:$0xf]
    %v367 = vld [vmem:[%s15 + $0xf4] sm:$0xf]
    %v368 = vld [vmem:[%s15 + $0xf8] sm:$0xf]
    %v369 = vld [vmem:[%s15 + $0xfc] sm:$0xf]
    %v370 = vld [vmem:[%s17] sm:$0xf]
    %v371 = vld [vmem:[%s17 + $0x4] sm:$0xf]
    %v372 = vld [vmem:[%s17 + $0x8] sm:$0xf]
    %v373 = vld [vmem:[%s17 + $0xc] sm:$0xf]
    %v374 = vld [vmem:[%s19] sm:$0xf]
    %v375 = vld [vmem:[%s19 + $0x4] sm:$0xf]
    %v376 = vld [vmem:[%s19 + $0x8] sm:$0xf]
    %v377 = vld [vmem:[%s19 + $0xc] sm:$0xf]
    %v378 = vlaneseq
    %v379 = vand.u32 %v378, 127
    %v380 = vlaneseq
    %v381 = vshrl.u32 %v380, 7
    %v382 = vmul.u32 %v381, 16
    %vm383 = vcmp.ge.s32.totalorder %v379, %v382
    %v384 = vadd.s32 %v381, 1
    %v385 = vmul.u32 %v384, 16
    %vm386 = vcmp.lt.s32.totalorder %v379, %v385
    %vm387 = vmand %vm383, %vm386
    %v388 = vld [vmem:[%s3] sm:$0xf]
    %v389 = vld [vmem:[%s3 + $0x4] sm:$0xf]
    %v390 = vld [vmem:[%s3 + $0x8] sm:$0xf]
    %v391 = vld [vmem:[%s3 + $0xc] sm:$0xf]
    %v392 = vld [vmem:[#allocation2] sm:$0xf]
    %v393 = vld [vmem:[#allocation2 + $0x4] sm:$0xf]
    %v398 = vunpack.c.l.b16 %v388
    %v399 = vunpack.c.l.b16 %v389
    %v400 = vunpack.c.l.b16 %v390
    %v401 = vunpack.c.l.b16 %v391
    %v402 = vpack.c.b16 %v399, %v398
    %v403 = vpack.c.b16 %v401, %v400
    %v406 = vunpack.c.l.b16 %v392
    %v407 = vunpack.c.l.b16 %v393
    %v408 = vpack.c.b16 %v407, %v406
    %vm410 = vcmask 130048
    %v412 = vsel %vm410, %v402, 0
    %v415 = vsel %vm410, %v403, 0
    %417 = vmatprep.subr.bf16.mxu0 0
    %418 = vmatpush1.bf16.msra.mxu0 %v408
    %419 = vmatprep.subr.bf16.mxu0 0
    %420 = vmatpush1.bf16.msra.mxu0 0
    %421 = vmatprep.subr.bf16.mxu0 0
    %422 = vmatpush1.bf16.msra.mxu0 0
    %423 = vmatprep.subr.bf16.mxu0 0
    %424 = vmatpush1.bf16.msra.mxu0 0
    %425 = vmatprep.subr.bf16.mxu0 0
    %426 = vmatpush1.bf16.msra.mxu0 0
    %427 = vmatprep.subr.bf16.mxu0 0
    %428 = vmatpush1.bf16.msra.mxu0 0
    %429 = vmatprep.subr.bf16.mxu0 0
    %430 = vmatpush1.bf16.msra.mxu0 0
    %431 = vmatprep.subr.bf16.mxu0 0
    %432 = vmatpush1.bf16.msra.mxu0 0
    %433 = vmatprep.subr.bf16.mxu0 0
    %434 = vmatpush1.bf16.msra.mxu0 0
    %435 = vmatprep.subr.bf16.mxu0 0
    %436 = vmatpush1.bf16.msra.mxu0 0
    %437 = vmatprep.subr.bf16.mxu0 0
    %438 = vmatpush1.bf16.msra.mxu0 0
    %439 = vmatprep.subr.bf16.mxu0 0
    %440 = vmatpush1.bf16.msra.mxu0 0
    %441 = vmatprep.subr.bf16.mxu0 0
    %442 = vmatpush1.bf16.msra.mxu0 0
    %443 = vmatprep.subr.bf16.mxu0 0
    %444 = vmatpush1.bf16.msra.mxu0 0
    %445 = vmatprep.subr.bf16.mxu0 0
    %446 = vmatpush1.bf16.msra.mxu0 0
    %447 = vmatprep.subr.bf16.mxu0 0
    %448 = vmatpush1.bf16.msra.mxu0 0
    %449 = vmatprep.mubr.bf16.mxu0 0
    %450 = vmatmul.mubr.bf16.gmra.mrb[0].mxu0 %v412
    %v451 = vpop.f32.mrb[0].mxu0
    %v452 = vadd.f32 0.0, %v451
    %v453 = vpop.f32.mrb[0].mxu0
    %v454 = vpop.f32.mrb[0].mxu0
    %v455 = vadd.f32 0.0, %v454
    %v456 = vpop.f32.mrb[0].mxu0
    %457 = vmatprep.mubr.bf16.mxu0 0
    %458 = vmatmul.mubr.bf16.gmra.mrb[0].mxu0 %v415
    %v459 = vpop.f32.mrb[0].mxu0
    %v460 = vadd.f32 0.0, %v459
    %v461 = vpop.f32.mrb[0].mxu0
    %v462 = vpop.f32.mrb[0].mxu0
    %v463 = vadd.f32 0.0, %v462
    %v464 = vpop.f32.mrb[0].mxu0
    %465 = vdwg.mxu0
    %v466 = vld [vmem:[%s21] sm:$0xf]
    %v467 = vld [vmem:[%s21 + $0x4] sm:$0xf]
    %v468 = vld [vmem:[%s21 + $0x8] sm:$0xf]
    %v469 = vld [vmem:[%s21 + $0xc] sm:$0xf]
    %v470 = vld [vmem:[%s23] sm:$0xff]
    %v471 = vld [vmem:[%s23 + $0x8] sm:$0xff]
    %v472 = vld [vmem:[%s23 + $0x10] sm:$0xff]
    %v473 = vld [vmem:[%s23 + $0x18] sm:$0xff]
    %v474 = vld [vmem:[%s25] sm:$0xf]
    %v475 = vld [vmem:[%s25 + $0x4] sm:$0xf]
    %v476 = vld [vmem:[%s25 + $0x8] sm:$0xf]
    %v477 = vld [vmem:[%s25 + $0xc] sm:$0xf]
    %v478 = vld [vmem:[%s27] sm:$0xff]
    %v479 = vld [vmem:[%s27 + $0x8] sm:$0xff]
    %v480 = vld [vmem:[%s27 + $0x10] sm:$0xff]
    %v481 = vld [vmem:[%s27 + $0x18] sm:$0xff]
    %v482 = vld [vmem:[%s29] sm:$0xf]
    %v483 = vld [vmem:[%s29 + $0x4] sm:$0xf]
    %v484 = vld [vmem:[%s29 + $0x8] sm:$0xf]
    %v485 = vld [vmem:[%s29 + $0xc] sm:$0xf]
    %v486 = vld [vmem:[%s31] sm:$0xff]
    %v487 = vld [vmem:[%s31 + $0x8] sm:$0xff]
    %v488 = vld [vmem:[%s31 + $0x10] sm:$0xff]
    %v489 = vld [vmem:[%s31 + $0x18] sm:$0xff]
    %v490 = vld [vmem:[%s33] sm:$0xf]
    %v491 = vld [vmem:[%s33 + $0x4] sm:$0xf]
    %v492 = vld [vmem:[%s33 + $0x8] sm:$0xf]
    %v493 = vld [vmem:[%s33 + $0xc] sm:$0xf]
    %v494 = vld [vmem:[%s35] sm:$0xff]
    %v495 = vld [vmem:[%s35 + $0x8] sm:$0xff]
    %v496 = vld [vmem:[%s35 + $0x10] sm:$0xff]
    %v497 = vld [vmem:[%s35 + $0x18] sm:$0xff]
    %v498 = vld [vmem:[%s37] sm:$0xf]
    %v499 = vld [vmem:[%s37 + $0x4] sm:$0xf]
    %v500 = vld [vmem:[%s37 + $0x8] sm:$0xf]
    %v501 = vld [vmem:[%s37 + $0xc] sm:$0xf]
    %v502 = vld [vmem:[%s37 + $0x10] sm:$0xf]
    %v503 = vld [vmem:[%s37 + $0x14] sm:$0xf]
    %v504 = vld [vmem:[%s37 + $0x18] sm:$0xf]
    %v505 = vld [vmem:[%s37 + $0x1c] sm:$0xf]
    %v506 = vld [vmem:[%s39] sm:$0xf]
    %v507 = vld [vmem:[%s39 + $0x4] sm:$0xf]
    %v508 = vld [vmem:[%s39 + $0x8] sm:$0xf]
    %v509 = vld [vmem:[%s39 + $0xc] sm:$0xf]
    %v510 = vpack.c.bf16 %v455, %v452
    %v511 = vpack.c.bf16 %v463, %v460
    %v516 = vunpack.c.l.b16 %v466
    %v517 = vunpack.c.l.b16 %v467
    %v518 = vunpack.c.l.b16 %v468
    %v519 = vunpack.c.l.b16 %v469
    %v520 = vpack.c.b16 %v517, %v516
    %v521 = vpack.c.b16 %v519, %v518
    %vm522 = vcmask 261120
    %v524 = vsel %vm522, %v520, 0
    %v527 = vsel %vm522, %v521, 0
    %529 = vmatprep.subr.bf16.mxu0 0
    %530 = vmatpush1.bf16.msra.mxu0 %v510
    %531 = vmatprep.subr.bf16.mxu0 0
    %532 = vmatpush1.bf16.msra.mxu0 %v511
    %533 = vmatprep.subr.bf16.mxu0 0
    %534 = vmatpush1.bf16.msra.mxu0 0
    %535 = vmatprep.subr.bf16.mxu0 0
    %536 = vmatpush1.bf16.msra.mxu0 0
    %537 = vmatprep.subr.bf16.mxu0 0
    %538 = vmatpush1.bf16.msra.mxu0 0
    %539 = vmatprep.subr.bf16.mxu0 0
    %540 = vmatpush1.bf16.msra.mxu0 0
    %541 = vmatprep.subr.bf16.mxu0 0
    %542 = vmatpush1.bf16.msra.mxu0 0
    %543 = vmatprep.subr.bf16.mxu0 0
    %544 = vmatpush1.bf16.msra.mxu0 0
    %545 = vmatprep.subr.bf16.mxu0 0
    %546 = vmatpush1.bf16.msra.mxu0 0
    %547 = vmatprep.subr.bf16.mxu0 0
    %548 = vmatpush1.bf16.msra.mxu0 0
    %549 = vmatprep.subr.bf16.mxu0 0
    %550 = vmatpush1.bf16.msra.mxu0 0
    %551 = vmatprep.subr.bf16.mxu0 0
    %552 = vmatpush1.bf16.msra.mxu0 0
    %553 = vmatprep.subr.bf16.mxu0 0
    %554 = vmatpush1.bf16.msra.mxu0 0
    %555 = vmatprep.subr.bf16.mxu0 0
    %556 = vmatpush1.bf16.msra.mxu0 0
    %557 = vmatprep.subr.bf16.mxu0 0
    %558 = vmatpush1.bf16.msra.mxu0 0
    %559 = vmatprep.subr.bf16.mxu0 0
    %560 = vmatpush1.bf16.msra.mxu0 0
    %561 = vmatprep.mubr.bf16.mxu0 0
    %562 = vmatmul.mubr.bf16.gmra.mrb[0].mxu0 %v524
    %v563 = vpop.f32.mrb[0].mxu0
    %v564 = vadd.f32 %v470, %v563
    %v565 = vpop.f32.mrb[0].mxu0
    %v566 = vpop.f32.mrb[0].mxu0
    %v567 = vadd.f32 %v471, %v566
    %v568 = vpop.f32.mrb[0].mxu0
    %569 = vmatprep.mubr.bf16.mxu0 0
    %570 = vmatmul.mubr.bf16.gmra.mrb[0].mxu0 %v527
    %v571 = vpop.f32.mrb[0].mxu0
    %v572 = vadd.f32 %v472, %v571
    %v573 = vpop.f32.mrb[0].mxu0
    %v574 = vpop.f32.mrb[0].mxu0
    %v575 = vadd.f32 %v473, %v574
    %v576 = vpop.f32.mrb[0].mxu0
    %577 = vdwg.mxu0
    %v582 = vunpack.c.l.b16 %v474
    %v583 = vunpack.c.l.b16 %v475
    %v584 = vunpack.c.l.b16 %v476
    %v585 = vunpack.c.l.b16 %v477
    %v586 = vpack.c.b16 %v583, %v582
    %v587 = vpack.c.b16 %v585, %v584
    %v589 = vsel %vm522, %v586, 0
    %v592 = vsel %vm522, %v587, 0
    %594 = vmatprep.subr.bf16.mxu0 0
    %595 = vmatpush1.bf16.msra.mxu0 %v510
    %596 = vmatprep.subr.bf16.mxu0 0
    %597 = vmatpush1.bf16.msra.mxu0 %v511
    %598 = vmatprep.subr.bf16.mxu0 0
    %599 = vmatpush1.bf16.msra.mxu0 0
    %600 = vmatprep.subr.bf16.mxu0 0
    %601 = vmatpush1.bf16.msra.mxu0 0
    %602 = vmatprep.subr.bf16.mxu0 0
    %603 = vmatpush1.bf16.msra.mxu0 0
    %604 = vmatprep.subr.bf16.mxu0 0
    %605 = vmatpush1.bf16.msra.mxu0 0
    %606 = vmatprep.subr.bf16.mxu0 0
    %607 = vmatpush1.bf16.msra.mxu0 0
    %608 = vmatprep.subr.bf16.mxu0 0
    %609 = vmatpush1.bf16.msra.mxu0 0
    %610 = vmatprep.subr.bf16.mxu0 0
    %611 = vmatpush1.bf16.msra.mxu0 0
    %612 = vmatprep.subr.bf16.mxu0 0
    %613 = vmatpush1.bf16.msra.mxu0 0
    %614 = vmatprep.subr.bf16.mxu0 0
    %615 = vmatpush1.bf16.msra.mxu0 0
    %616 = vmatprep.subr.bf16.mxu0 0
    %617 = vmatpush1.bf16.msra.mxu0 0
    %618 = vmatprep.subr.bf16.mxu0 0
    %619 = vmatpush1.bf16.msra.mxu0 0
    %620 = vmatprep.subr.bf16.mxu0 0
    %621 = vmatpush1.bf16.msra.mxu0 0
    %622 = vmatprep.subr.bf16.mxu0 0
    %623 = vmatpush1.bf16.msra.mxu0 0
    %624 = vmatprep.subr.bf16.mxu0 0
    %625 = vmatpush1.bf16.msra.mxu0 0
    %626 = vmatprep.mubr.bf16.mxu0 0
    %627 = vmatmul.mubr.bf16.gmra.mrb[0].mxu0 %v589
    %v628 = vpop.f32.mrb[0].mxu0
    %v629 = vadd.f32 %v478, %v628
    %v630 = vpop.f32.mrb[0].mxu0
    %v631 = vpop.f32.mrb[0].mxu0
    %v632 = vadd.f32 %v479, %v631
    %v633 = vpop.f32.mrb[0].mxu0
    %634 = vmatprep.mubr.bf16.mxu0 0
    %635 = vmatmul.mubr.bf16.gmra.mrb[0].mxu0 %v592
    %v636 = vpop.f32.mrb[0].mxu0
    %v637 = vadd.f32 %v480, %v636
    %v638 = vpop.f32.mrb[0].mxu0
    %v639 = vpop.f32.mrb[0].mxu0
    %v640 = vadd.f32 %v481, %v639
    %v641 = vpop.f32.mrb[0].mxu0
    %642 = vdwg.mxu0
    %v647 = vunpack.c.l.b16 %v482
    %v648 = vunpack.c.l.b16 %v483
    %v649 = vunpack.c.l.b16 %v484
    %v650 = vunpack.c.l.b16 %v485
    %v651 = vpack.c.b16 %v648, %v647
    %v652 = vpack.c.b16 %v650, %v649
    %v654 = vsel %vm522, %v651, 0
    %v657 = vsel %vm522, %v652, 0
    %659 = vmatprep.subr.bf16.mxu0 0
    %660 = vmatpush1.bf16.msra.mxu0 %v510
    %661 = vmatprep.subr.bf16.mxu0 0
    %662 = vmatpush1.bf16.msra.mxu0 %v511
    %663 = vmatprep.subr.bf16.mxu0 0
    %664 = vmatpush1.bf16.msra.mxu0 0
    %665 = vmatprep.subr.bf16.mxu0 0
    %666 = vmatpush1.bf16.msra.mxu0 0
    %667 = vmatprep.subr.bf16.mxu0 0
    %668 = vmatpush1.bf16.msra.mxu0 0
    %669 = vmatprep.subr.bf16.mxu0 0
    %670 = vmatpush1.bf16.msra.mxu0 0
    %671 = vmatprep.subr.bf16.mxu0 0
    %672 = vmatpush1.bf16.msra.mxu0 0
    %673 = vmatprep.subr.bf16.mxu0 0
    %674 = vmatpush1.bf16.msra.mxu0 0
    %675 = vmatprep.subr.bf16.mxu0 0
    %676 = vmatpush1.bf16.msra.mxu0 0
    %677 = vmatprep.subr.bf16.mxu0 0
    %678 = vmatpush1.bf16.msra.mxu0 0
    %679 = vmatprep.subr.bf16.mxu0 0
    %680 = vmatpush1.bf16.msra.mxu0 0
    %681 = vmatprep.subr.bf16.mxu0 0
    %682 = vmatpush1.bf16.msra.mxu0 0
    %683 = vmatprep.subr.bf16.mxu0 0
    %684 = vmatpush1.bf16.msra.mxu0 0
    %685 = vmatprep.subr.bf16.mxu0 0
    %686 = vmatpush1.bf16.msra.mxu0 0
    %687 = vmatprep.subr.bf16.mxu0 0
    %688 = vmatpush1.bf16.msra.mxu0 0
    %689 = vmatprep.subr.bf16.mxu0 0
    %690 = vmatpush1.bf16.msra.mxu0 0
    %691 = vmatprep.mubr.bf16.mxu0 0
    %692 = vmatmul.mubr.bf16.gmra.mrb[0].mxu0 %v654
    %v693 = vpop.f32.mrb[0].mxu0
    %v694 = vadd.f32 %v486, %v693
    %v695 = vpop.f32.mrb[0].mxu0
    %v696 = vpop.f32.mrb[0].mxu0
    %v697 = vadd.f32 %v487, %v696
    %v698 = vpop.f32.mrb[0].mxu0
    %699 = vmatprep.mubr.bf16.mxu0 0
    %700 = vmatmul.mubr.bf16.gmra.mrb[0].mxu0 %v657
    %v701 = vpop.f32.mrb[0].mxu0
    %v702 = vadd.f32 %v488, %v701
    %v703 = vpop.f32.mrb[0].mxu0
    %v704 = vpop.f32.mrb[0].mxu0
    %v705 = vadd.f32 %v489, %v704
    %v706 = vpop.f32.mrb[0].mxu0
    %707 = vdwg.mxu0
    %v708 = vpack.c.bf16 %v567, %v564
    %v709 = vpack.c.bf16 %v575, %v572
    %v718 = vunpack.c.l.b16 %v210
    %v719 = vunpack.c.h.b16 %v210
    %v720 = vunpack.c.l.b16 %v211
    %v721 = vunpack.c.h.b16 %v211
    %v722 = vunpack.c.l.b16 %v212
    %v723 = vunpack.c.h.b16 %v212
    %v724 = vunpack.c.l.b16 %v213
    %v725 = vunpack.c.h.b16 %v213
    %v726 = vunpack.c.l.b16 %v214
    %v727 = vunpack.c.h.b16 %v214
    %v728 = vunpack.c.l.b16 %v215
    %v729 = vunpack.c.h.b16 %v215
    %v730 = vunpack.c.l.b16 %v216
    %v731 = vunpack.c.h.b16 %v216
    %v732 = vunpack.c.l.b16 %v217
    %v733 = vunpack.c.h.b16 %v217
    %v734 = vpack.c.b16 %v722, %v718
    %v735 = vpack.c.b16 %v723, %v719
    %v736 = vpack.c.b16 %v724, %v720
    %v737 = vpack.c.b16 %v725, %v721
    %v738 = vpack.c.b16 %v730, %v726
    %v739 = vpack.c.b16 %v731, %v727
    %v740 = vpack.c.b16 %v732, %v728
    %v741 = vpack.c.b16 %v733, %v729
    %v751 = vsel %vm522, %v708, 0
    %v754 = vsel %vm522, %v709, 0
    %756 = vmatprep.subr.bf16.mxu0 %v735
    %757 = vmatpush1.bf16.msra.mxu0 %v734
    %758 = vmatprep.subr.bf16.mxu0 %v739
    %759 = vmatpush1.bf16.msra.mxu0 %v738
    %760 = vmatprep.subr.bf16.mxu0 0
    %761 = vmatpush1.bf16.msra.mxu0 0
    %762 = vmatprep.subr.bf16.mxu0 0
    %763 = vmatpush1.bf16.msra.mxu0 0
    %764 = vmatprep.subr.bf16.mxu0 0
    %765 = vmatpush1.bf16.msra.mxu0 0
    %766 = vmatprep.subr.bf16.mxu0 0
    %767 = vmatpush1.bf16.msra.mxu0 0
    %768 = vmatprep.subr.bf16.mxu0 0
    %769 = vmatpush1.bf16.msra.mxu0 0
    %770 = vmatprep.subr.bf16.mxu0 0
    %771 = vmatpush1.bf16.msra.mxu0 0
    %772 = vmatprep.subr.bf16.mxu0 0
    %773 = vmatpush1.bf16.msra.mxu0 0
    %774 = vmatprep.subr.bf16.mxu0 0
    %775 = vmatpush1.bf16.msra.mxu0 0
    %776 = vmatprep.subr.bf16.mxu0 0
    %777 = vmatpush1.bf16.msra.mxu0 0
    %778 = vmatprep.subr.bf16.mxu0 0
    %779 = vmatpush1.bf16.msra.mxu0 0
    %780 = vmatprep.subr.bf16.mxu0 0
    %781 = vmatpush1.bf16.msra.mxu0 0
    %782 = vmatprep.subr.bf16.mxu0 0
    %783 = vmatpush1.bf16.msra.mxu0 0
    %784 = vmatprep.subr.bf16.mxu0 0
    %785 = vmatpush1.bf16.msra.mxu0 0
    %786 = vmatprep.subr.bf16.mxu0 0
    %787 = vmatpush1.bf16.msra.mxu0 0
    %788 = vmatprep.mubr.bf16.mxu0 0
    %789 = vmatmul.mubr.bf16.gmra.mrb[0].mxu0 %v751
    %v790 = vpop.f32.mrb[0].mxu0
    %v791 = vadd.f32 0.0, %v790
    %v792 = vpop.f32.mrb[0].mxu0
    %v793 = vadd.f32 0.0, %v792
    %v794 = vpop.f32.mrb[0].mxu0
    %v795 = vadd.f32 0.0, %v794
    %v796 = vpop.f32.mrb[0].mxu0
    %v797 = vadd.f32 0.0, %v796
    %798 = vmatprep.mubr.bf16.mxu0 0
    %799 = vmatmul.mubr.bf16.gmra.mrb[0].mxu0 %v754
    %v800 = vpop.f32.mrb[0].mxu0
    %v801 = vadd.f32 0.0, %v800
    %v802 = vpop.f32.mrb[0].mxu0
    %v803 = vadd.f32 0.0, %v802
    %v804 = vpop.f32.mrb[0].mxu0
    %v805 = vadd.f32 0.0, %v804
    %v806 = vpop.f32.mrb[0].mxu0
    %v807 = vadd.f32 0.0, %v806
    %808 = vdwg.mxu0
    %809 = vmatprep.subr.bf16.mxu0 %v737
    %810 = vmatpush1.bf16.msra.mxu0 %v736
    %811 = vmatprep.subr.bf16.mxu0 %v741
    %812 = vmatpush1.bf16.msra.mxu0 %v740
    %813 = vmatprep.subr.bf16.mxu0 0
    %814 = vmatpush1.bf16.msra.mxu0 0
    %815 = vmatprep.subr.bf16.mxu0 0
    %816 = vmatpush1.bf16.msra.mxu0 0
    %817 = vmatprep.subr.bf16.mxu0 0
    %818 = vmatpush1.bf16.msra.mxu0 0
    %819 = vmatprep.subr.bf16.mxu0 0
    %820 = vmatpush1.bf16.msra.mxu0 0
    %821 = vmatprep.subr.bf16.mxu0 0
    %822 = vmatpush1.bf16.msra.mxu0 0
    %823 = vmatprep.subr.bf16.mxu0 0
    %824 = vmatpush1.bf16.msra.mxu0 0
    %825 = vmatprep.subr.bf16.mxu0 0
    %826 = vmatpush1.bf16.msra.mxu0 0
    %827 = vmatprep.subr.bf16.mxu0 0
    %828 = vmatpush1.bf16.msra.mxu0 0
    %829 = vmatprep.subr.bf16.mxu0 0
    %830 = vmatpush1.bf16.msra.mxu0 0
    %831 = vmatprep.subr.bf16.mxu0 0
    %832 = vmatpush1.bf16.msra.mxu0 0
    %833 = vmatprep.subr.bf16.mxu0 0
    %834 = vmatpush1.bf16.msra.mxu0 0
    %835 = vmatprep.subr.bf16.mxu0 0
    %836 = vmatpush1.bf16.msra.mxu0 0
    %837 = vmatprep.subr.bf16.mxu0 0
    %838 = vmatpush1.bf16.msra.mxu0 0
    %839 = vmatprep.subr.bf16.mxu0 0
    %840 = vmatpush1.bf16.msra.mxu0 0
    %841 = vmatprep.mubr.bf16.mxu0 0
    %842 = vmatmul.mubr.bf16.gmra.mrb[0].mxu0 %v751
    %v843 = vpop.f32.mrb[0].mxu0
    %v844 = vadd.f32 0.0, %v843
    %v845 = vpop.f32.mrb[0].mxu0
    %v846 = vadd.f32 0.0, %v845
    %v847 = vpop.f32.mrb[0].mxu0
    %v848 = vadd.f32 0.0, %v847
    %v849 = vpop.f32.mrb[0].mxu0
    %v850 = vadd.f32 0.0, %v849
    %851 = vmatprep.mubr.bf16.mxu0 0
    %852 = vmatmul.mubr.bf16.gmra.mrb[0].mxu0 %v754
    %v853 = vpop.f32.mrb[0].mxu0
    %v854 = vadd.f32 0.0, %v853
    %v855 = vpop.f32.mrb[0].mxu0
    %v856 = vadd.f32 0.0, %v855
    %v857 = vpop.f32.mrb[0].mxu0
    %v858 = vadd.f32 0.0, %v857
    %v859 = vpop.f32.mrb[0].mxu0
    %v860 = vadd.f32 0.0, %v859
    %861 = vdwg.mxu0
    %v862 = vpack.c.bf16 %v632, %v629
    %v863 = vpack.c.bf16 %v640, %v637
    %v872 = vunpack.c.l.b16 %v218
    %v873 = vunpack.c.h.b16 %v218
    %v874 = vunpack.c.l.b16 %v219
    %v875 = vunpack.c.h.b16 %v219
    %v876 = vunpack.c.l.b16 %v220
    %v877 = vunpack.c.h.b16 %v220
    %v878 = vunpack.c.l.b16 %v221
    %v879 = vunpack.c.h.b16 %v221
    %v880 = vunpack.c.l.b16 %v222
    %v881 = vunpack.c.h.b16 %v222
    %v882 = vunpack.c.l.b16 %v223
    %v883 = vunpack.c.h.b16 %v223
    %v884 = vunpack.c.l.b16 %v224
    %v885 = vunpack.c.h.b16 %v224
    %v886 = vunpack.c.l.b16 %v225
    %v887 = vunpack.c.h.b16 %v225
    %v888 = vpack.c.b16 %v876, %v872
    %v889 = vpack.c.b16 %v877, %v873
    %v890 = vpack.c.b16 %v878, %v874
    %v891 = vpack.c.b16 %v879, %v875
    %v892 = vpack.c.b16 %v884, %v880
    %v893 = vpack.c.b16 %v885, %v881
    %v894 = vpack.c.b16 %v886, %v882
    %v895 = vpack.c.b16 %v887, %v883
    %v905 = vsel %vm522, %v862, 0
    %v908 = vsel %vm522, %v863, 0
    %910 = vmatprep.subr.bf16.mxu0 %v889
    %911 = vmatpush1.bf16.msra.mxu0 %v888
    %912 = vmatprep.subr.bf16.mxu0 %v893
    %913 = vmatpush1.bf16.msra.mxu0 %v892
    %914 = vmatprep.subr.bf16.mxu0 0
    %915 = vmatpush1.bf16.msra.mxu0 0
    %916 = vmatprep.subr.bf16.mxu0 0
    %917 = vmatpush1.bf16.msra.mxu0 0
    %918 = vmatprep.subr.bf16.mxu0 0
    %919 = vmatpush1.bf16.msra.mxu0 0
    %920 = vmatprep.subr.bf16.mxu0 0
    %921 = vmatpush1.bf16.msra.mxu0 0
    %922 = vmatprep.subr.bf16.mxu0 0
    %923 = vmatpush1.bf16.msra.mxu0 0
    %924 = vmatprep.subr.bf16.mxu0 0
    %925 = vmatpush1.bf16.msra.mxu0 0
    %926 = vmatprep.subr.bf16.mxu0 0
    %927 = vmatpush1.bf16.msra.mxu0 0
    %928 = vmatprep.subr.bf16.mxu0 0
    %929 = vmatpush1.bf16.msra.mxu0 0
    %930 = vmatprep.subr.bf16.mxu0 0
    %931 = vmatpush1.bf16.msra.mxu0 0
    %932 = vmatprep.subr.bf16.mxu0 0
    %933 = vmatpush1.bf16.msra.mxu0 0
    %934 = vmatprep.subr.bf16.mxu0 0
    %935 = vmatpush1.bf16.msra.mxu0 0
    %936 = vmatprep.subr.bf16.mxu0 0
    %937 = vmatpush1.bf16.msra.mxu0 0
    %938 = vmatprep.subr.bf16.mxu0 0
    %939 = vmatpush1.bf16.msra.mxu0 0
    %940 = vmatprep.subr.bf16.mxu0 0
    %941 = vmatpush1.bf16.msra.mxu0 0
    %942 = vmatprep.mubr.bf16.mxu0 0
    %943 = vmatmul.mubr.bf16.gmra.mrb[0].mxu0 %v905
    %v944 = vpop.f32.mrb[0].mxu0
    %v945 = vadd.f32 0.0, %v944
    %v946 = vpop.f32.mrb[0].mxu0
    %v947 = vadd.f32 0.0, %v946
    %v948 = vpop.f32.mrb[0].mxu0
    %v949 = vadd.f32 0.0, %v948
    %v950 = vpop.f32.mrb[0].mxu0
    %v951 = vadd.f32 0.0, %v950
    %952 = vmatprep.mubr.bf16.mxu0 0
    %953 = vmatmul.mubr.bf16.gmra.mrb[0].mxu0 %v908
    %v954 = vpop.f32.mrb[0].mxu0
    %v955 = vadd.f32 0.0, %v954
    %v956 = vpop.f32.mrb[0].mxu0
    %v957 = vadd.f32 0.0, %v956
    %v958 = vpop.f32.mrb[0].mxu0
    %v959 = vadd.f32 0.0, %v958
    %v960 = vpop.f32.mrb[0].mxu0
    %v961 = vadd.f32 0.0, %v960
    %962 = vdwg.mxu0
    %963 = vmatprep.subr.bf16.mxu0 %v891
    %964 = vmatpush1.bf16.msra.mxu0 %v890
    %965 = vmatprep.subr.bf16.mxu0 %v895
    %966 = vmatpush1.bf16.msra.mxu0 %v894
    %967 = vmatprep.subr.bf16.mxu0 0
    %968 = vmatpush1.bf16.msra.mxu0 0
    %969 = vmatprep.subr.bf16.mxu0 0
    %970 = vmatpush1.bf16.msra.mxu0 0
    %971 = vmatprep.subr.bf16.mxu0 0
    %972 = vmatpush1.bf16.msra.mxu0 0
    %973 = vmatprep.subr.bf16.mxu0 0
    %974 = vmatpush1.bf16.msra.mxu0 0
    %975 = vmatprep.subr.bf16.mxu0 0
    %976 = vmatpush1.bf16.msra.mxu0 0
    %977 = vmatprep.subr.bf16.mxu0 0
    %978 = vmatpush1.bf16.msra.mxu0 0
    %979 = vmatprep.subr.bf16.mxu0 0
    %980 = vmatpush1.bf16.msra.mxu0 0
    %981 = vmatprep.subr.bf16.mxu0 0
    %982 = vmatpush1.bf16.msra.mxu0 0
    %983 = vmatprep.subr.bf16.mxu0 0
    %984 = vmatpush1.bf16.msra.mxu0 0
    %985 = vmatprep.subr.bf16.mxu0 0
    %986 = vmatpush1.bf16.msra.mxu0 0
    %987 = vmatprep.subr.bf16.mxu0 0
    %988 = vmatpush1.bf16.msra.mxu0 0
    %989 = vmatprep.subr.bf16.mxu0 0
    %990 = vmatpush1.bf16.msra.mxu0 0
    %991 = vmatprep.subr.bf16.mxu0 0
    %992 = vmatpush1.bf16.msra.mxu0 0
    %993 = vmatprep.subr.bf16.mxu0 0
    %994 = vmatpush1.bf16.msra.mxu0 0
    %995 = vmatprep.mubr.bf16.mxu0 0
    %996 = vmatmul.mubr.bf16.gmra.mrb[0].mxu0 %v905
    %v997 = vpop.f32.mrb[0].mxu0
    %v998 = vadd.f32 0.0, %v997
    %v999 = vpop.f32.mrb[0].mxu0
    %v1000 = vadd.f32 0.0, %v999
    %v1001 = vpop.f32.mrb[0].mxu0
    %v1002 = vadd.f32 0.0, %v1001
    %v1003 = vpop.f32.mrb[0].mxu0
    %v1004 = vadd.f32 0.0, %v1003
    %1005 = vmatprep.mubr.bf16.mxu0 0
    %1006 = vmatmul.mubr.bf16.gmra.mrb[0].mxu0 %v908
    %v1007 = vpop.f32.mrb[0].mxu0
    %v1008 = vadd.f32 0.0, %v1007
    %v1009 = vpop.f32.mrb[0].mxu0
    %v1010 = vadd.f32 0.0, %v1009
    %v1011 = vpop.f32.mrb[0].mxu0
    %v1012 = vadd.f32 0.0, %v1011
    %v1013 = vpop.f32.mrb[0].mxu0
    %v1014 = vadd.f32 0.0, %v1013
    %1015 = vdwg.mxu0
    %v1016 = vmul.f32 %v791, %v945
    %v1017 = vmul.f32 %v793, %v947
    %v1018 = vmul.f32 %v844, %v998
    %v1019 = vmul.f32 %v846, %v1000
    %v1020 = vmul.f32 %v795, %v949
    %v1021 = vmul.f32 %v797, %v951
    %v1022 = vmul.f32 %v848, %v1002
    %v1023 = vmul.f32 %v850, %v1004
    %v1024 = vmul.f32 %v801, %v955
    %v1025 = vmul.f32 %v803, %v957
    %v1026 = vmul.f32 %v854, %v1008
    %v1027 = vmul.f32 %v856, %v1010
    %v1028 = vmul.f32 %v805, %v959
    %v1029 = vmul.f32 %v807, %v961
    %v1030 = vmul.f32 %v858, %v1012
    %v1031 = vmul.f32 %v860, %v1014
    %v1032 = vpack.c.bf16 %v1020, %v1016
    %v1033 = vpack.c.bf16 %v1021, %v1017
    %v1034 = vpack.c.bf16 %v1022, %v1018
    %v1035 = vpack.c.bf16 %v1023, %v1019
    %v1036 = vpack.c.bf16 %v1028, %v1024
    %v1037 = vpack.c.bf16 %v1029, %v1025
    %v1038 = vpack.c.bf16 %v1030, %v1026
    %v1039 = vpack.c.bf16 %v1031, %v1027
    %v1104 = vunpack.c.l.b16 %v234
    %v1105 = vunpack.c.l.b16 %v235
    %v1106 = vunpack.c.l.b16 %v236
    %v1107 = vunpack.c.l.b16 %v237
    %v1108 = vunpack.c.l.b16 %v238
    %v1109 = vunpack.c.l.b16 %v239
    %v1110 = vunpack.c.l.b16 %v240
    %v1111 = vunpack.c.l.b16 %v241
    %v1112 = vunpack.c.l.b16 %v242
    %v1113 = vunpack.c.l.b16 %v243
    %v1114 = vunpack.c.l.b16 %v244
    %v1115 = vunpack.c.l.b16 %v245
    %v1116 = vunpack.c.l.b16 %v246
    %v1117 = vunpack.c.l.b16 %v247
    %v1118 = vunpack.c.l.b16 %v248
    %v1119 = vunpack.c.l.b16 %v249
    %v1120 = vunpack.c.l.b16 %v250
    %v1121 = vunpack.c.l.b16 %v251
    %v1122 = vunpack.c.l.b16 %v252
    %v1123 = vunpack.c.l.b16 %v253
    %v1124 = vunpack.c.l.b16 %v254
    %v1125 = vunpack.c.l.b16 %v255
    %v1126 = vunpack.c.l.b16 %v256
    %v1127 = vunpack.c.l.b16 %v257
    %v1128 = vunpack.c.l.b16 %v258
    %v1129 = vunpack.c.l.b16 %v259
    %v1130 = vunpack.c.l.b16 %v260
    %v1131 = vunpack.c.l.b16 %v261
    %v1132 = vunpack.c.l.b16 %v262
    %v1133 = vunpack.c.l.b16 %v263
    %v1134 = vunpack.c.l.b16 %v264
    %v1135 = vunpack.c.l.b16 %v265
    %v1136 = vunpack.c.l.b16 %v266
    %v1137 = vunpack.c.l.b16 %v267
    %v1138 = vunpack.c.l.b16 %v268
    %v1139 = vunpack.c.l.b16 %v269
    %v1140 = vunpack.c.l.b16 %v270
    %v1141 = vunpack.c.l.b16 %v271
    %v1142 = vunpack.c.l.b16 %v272
    %v1143 = vunpack.c.l.b16 %v273
    %v1144 = vunpack.c.l.b16 %v274
    %v1145 = vunpack.c.l.b16 %v275
    %v1146 = vunpack.c.l.b16 %v276
    %v1147 = vunpack.c.l.b16 %v277
    %v1148 = vunpack.c.l.b16 %v278
    %v1149 = vunpack.c.l.b16 %v279
    %v1150 = vunpack.c.l.b16 %v280
    %v1151 = vunpack.c.l.b16 %v281
    %v1152 = vunpack.c.l.b16 %v282
    %v1153 = vunpack.c.l.b16 %v283
    %v1154 = vunpack.c.l.b16 %v284
    %v1155 = vunpack.c.l.b16 %v285
    %v1156 = vunpack.c.l.b16 %v286
    %v1157 = vunpack.c.l.b16 %v287
    %v1158 = vunpack.c.l.b16 %v288
    %v1159 = vunpack.c.l.b16 %v289
    %v1160 = vunpack.c.l.b16 %v290
    %v1161 = vunpack.c.l.b16 %v291
    %v1162 = vunpack.c.l.b16 %v292
    %v1163 = vunpack.c.l.b16 %v293
    %v1164 = vunpack.c.l.b16 %v294
    %v1165 = vunpack.c.l.b16 %v295
    %v1166 = vunpack.c.l.b16 %v296
    %v1167 = vunpack.c.l.b16 %v297
    %v1168 = vpack.c.b16 %v1105, %v1104
    %v1169 = vpack.c.b16 %v1107, %v1106
    %v1170 = vpack.c.b16 %v1109, %v1108
    %v1171 = vpack.c.b16 %v1111, %v1110
    %v1172 = vpack.c.b16 %v1113, %v1112
    %v1173 = vpack.c.b16 %v1115, %v1114
    %v1174 = vpack.c.b16 %v1117, %v1116
    %v1175 = vpack.c.b16 %v1119, %v1118
    %v1176 = vpack.c.b16 %v1121, %v1120
    %v1177 = vpack.c.b16 %v1123, %v1122
    %v1178 = vpack.c.b16 %v1125, %v1124
    %v1179 = vpack.c.b16 %v1127, %v1126
    %v1180 = vpack.c.b16 %v1129, %v1128
    %v1181 = vpack.c.b16 %v1131, %v1130
    %v1182 = vpack.c.b16 %v1133, %v1132
    %v1183 = vpack.c.b16 %v1135, %v1134
    %v1184 = vpack.c.b16 %v1137, %v1136
    %v1185 = vpack.c.b16 %v1139, %v1138
    %v1186 = vpack.c.b16 %v1141, %v1140
    %v1187 = vpack.c.b16 %v1143, %v1142
    %v1188 = vpack.c.b16 %v1145, %v1144
    %v1189 = vpack.c.b16 %v1147, %v1146
    %v1190 = vpack.c.b16 %v1149, %v1148
    %v1191 = vpack.c.b16 %v1151, %v1150
    %v1192 = vpack.c.b16 %v1153, %v1152
    %v1193 = vpack.c.b16 %v1155, %v1154
    %v1194 = vpack.c.b16 %v1157, %v1156
    %v1195 = vpack.c.b16 %v1159, %v1158
    %v1196 = vpack.c.b16 %v1161, %v1160
    %v1197 = vpack.c.b16 %v1163, %v1162
    %v1198 = vpack.c.b16 %v1165, %v1164
    %v1199 = vpack.c.b16 %v1167, %v1166
    %1232 = vmatprep.subr.bf16.mxu0 0
    %1233 = vmatpush1.bf16.msra.mxu0 %v1168
    %1234 = vmatprep.subr.bf16.mxu0 0
    %1235 = vmatpush1.bf16.msra.mxu0 %v1169
    %1236 = vmatprep.subr.bf16.mxu0 0
    %1237 = vmatpush1.bf16.msra.mxu0 %v1170
    %1238 = vmatprep.subr.bf16.mxu0 0
    %1239 = vmatpush1.bf16.msra.mxu0 %v1171
    %1240 = vmatprep.subr.bf16.mxu0 0
    %1241 = vmatpush1.bf16.msra.mxu0 %v1172
    %1242 = vmatprep.subr.bf16.mxu0 0
    %1243 = vmatpush1.bf16.msra.mxu0 %v1173
    %1244 = vmatprep.subr.bf16.mxu0 0
    %1245 = vmatpush1.bf16.msra.mxu0 %v1174
    %1246 = vmatprep.subr.bf16.mxu0 0
    %1247 = vmatpush1.bf16.msra.mxu0 %v1175
    %1248 = vmatprep.subr.bf16.mxu0 0
    %1249 = vmatpush1.bf16.msra.mxu0 %v1176
    %1250 = vmatprep.subr.bf16.mxu0 0
    %1251 = vmatpush1.bf16.msra.mxu0 %v1177
    %1252 = vmatprep.subr.bf16.mxu0 0
    %1253 = vmatpush1.bf16.msra.mxu0 %v1178
    %1254 = vmatprep.subr.bf16.mxu0 0
    %1255 = vmatpush1.bf16.msra.mxu0 %v1179
    %1256 = vmatprep.subr.bf16.mxu0 0
    %1257 = vmatpush1.bf16.msra.mxu0 %v1180
    %1258 = vmatprep.subr.bf16.mxu0 0
    %1259 = vmatpush1.bf16.msra.mxu0 %v1181
    %1260 = vmatprep.subr.bf16.mxu0 0
    %1261 = vmatpush1.bf16.msra.mxu0 %v1182
    %1262 = vmatprep.subr.bf16.mxu0 0
    %1263 = vmatpush1.bf16.msra.mxu0 %v1183
    %1264 = vmatprep.mubr.bf16.mxu0 %v1033
    %1265 = vmatmul.mubr.bf16.gmra.mrb[0].mxu0 %v1032
    %v1266 = vpop.f32.mrb[0].mxu0
    %v1267 = vadd.f32 0.0, %v1266
    %v1268 = vpop.f32.mrb[0].mxu0
    %v1269 = vpop.f32.mrb[0].mxu0
    %v1270 = vadd.f32 0.0, %v1269
    %v1271 = vpop.f32.mrb[0].mxu0
    %1272 = vmatprep.mubr.bf16.mxu0 %v1037
    %1273 = vmatmul.mubr.bf16.gmra.mrb[0].mxu0 %v1036
    %v1274 = vpop.f32.mrb[0].mxu0
    %v1275 = vadd.f32 0.0, %v1274
    %v1276 = vpop.f32.mrb[0].mxu0
    %v1277 = vpop.f32.mrb[0].mxu0
    %v1278 = vadd.f32 0.0, %v1277
    %v1279 = vpop.f32.mrb[0].mxu0
    %1280 = vdwg.mxu0
    %1281 = vmatprep.subr.bf16.mxu0 0
    %1282 = vmatpush1.bf16.msra.mxu0 %v1184
    %1283 = vmatprep.subr.bf16.mxu0 0
    %1284 = vmatpush1.bf16.msra.mxu0 %v1185
    %1285 = vmatprep.subr.bf16.mxu0 0
    %1286 = vmatpush1.bf16.msra.mxu0 %v1186
    %1287 = vmatprep.subr.bf16.mxu0 0
    %1288 = vmatpush1.bf16.msra.mxu0 %v1187
    %1289 = vmatprep.subr.bf16.mxu0 0
    %1290 = vmatpush1.bf16.msra.mxu0 %v1188
    %1291 = vmatprep.subr.bf16.mxu0 0
    %1292 = vmatpush1.bf16.msra.mxu0 %v1189
    %1293 = vmatprep.subr.bf16.mxu0 0
    %1294 = vmatpush1.bf16.msra.mxu0 %v1190
    %1295 = vmatprep.subr.bf16.mxu0 0
    %1296 = vmatpush1.bf16.msra.mxu0 %v1191
    %1297 = vmatprep.subr.bf16.mxu0 0
    %1298 = vmatpush1.bf16.msra.mxu0 %v1192
    %1299 = vmatprep.subr.bf16.mxu0 0
    %1300 = vmatpush1.bf16.msra.mxu0 %v1193
    %1301 = vmatprep.subr.bf16.mxu0 0
    %1302 = vmatpush1.bf16.msra.mxu0 %v1194
    %1303 = vmatprep.subr.bf16.mxu0 0
    %1304 = vmatpush1.bf16.msra.mxu0 %v1195
    %1305 = vmatprep.subr.bf16.mxu0 0
    %1306 = vmatpush1.bf16.msra.mxu0 %v1196
    %1307 = vmatprep.subr.bf16.mxu0 0
    %1308 = vmatpush1.bf16.msra.mxu0 %v1197
    %1309 = vmatprep.subr.bf16.mxu0 0
    %1310 = vmatpush1.bf16.msra.mxu0 %v1198
    %1311 = vmatprep.subr.bf16.mxu0 0
    %1312 = vmatpush1.bf16.msra.mxu0 %v1199
    %1313 = vmatprep.mubr.bf16.mxu0 %v1035
    %1314 = vmatmul.mubr.bf16.gmra.mrb[0].mxu0 %v1034
    %v1315 = vpop.f32.mrb[0].mxu0
    %v1316 = vadd.f32 %v1267, %v1315
    %v1317 = vpop.f32.mrb[0].mxu0
    %v1318 = vpop.f32.mrb[0].mxu0
    %v1319 = vadd.f32 %v1270, %v1318
    %v1320 = vpop.f32.mrb[0].mxu0
    %1321 = vmatprep.mubr.bf16.mxu0 %v1039
    %1322 = vmatmul.mubr.bf16.gmra.mrb[0].mxu0 %v1038
    %v1323 = vpop.f32.mrb[0].mxu0
    %v1324 = vadd.f32 %v1275, %v1323
    %v1325 = vpop.f32.mrb[0].mxu0
    %v1326 = vpop.f32.mrb[0].mxu0
    %v1327 = vadd.f32 %v1278, %v1326
    %v1328 = vpop.f32.mrb[0].mxu0
    %1329 = vdwg.mxu0
    %v1330 = vsel %vm522, %v1316, 0.0
    %v1331 = vsel %vm522, %v1319, 0.0
    %v1332 = vadd.f32 %v1330, %v1331
    %v1333 = vsel %vm522, %v1324, 0.0
    %v1334 = vadd.f32 %v1332, %v1333
    %v1335 = vsel %vm522, %v1327, 0.0
    %v1336 = vadd.f32 %v1334, %v1335
    %v1337 = vrot.slane %v1336, 4
    %v1338 = vadd.f32 %v1336, %v1337
    %v1339 = vrot.slane %v1338, 2
    %v1340 = vadd.f32 %v1338, %v1339
    %v1341 = vrot.slane %v1340, 1
    %v1342 = vadd.f32 %v1340, %v1341
    %v1343 = vmul.f32 %v1342, 0.03125
    %v1344 = vsel %vm387, %v1343, -1e+30
    %vm1345 = vcmask 254976
    %v1346 = vsel %vm1345, %v1344, -inf
    %1347 = vmax.xlane.f32.xlu0 %v1346
    %v1348 = vpop.xlane.xlu0 %1347
    %vm1349 = vcmp.ge.f32.partialorder %v1344, %v1348
    %v1350 = vsel %vm1349, -1e+30, %v1344
    %v1351 = vsel %vm1345, %v1350, -inf
    %1352 = vmax.xlane.f32.xlu0 %v1351
    %v1353 = vpop.xlane.xlu0 %1352
    %vm1354 = vcmp.ge.f32.partialorder %v1344, %v1353
    %v1355 = vsub.f32 %v1344, %v1348
    %v1356 = vmul.f32 %v1355, 1.442695
    %v1357 = vpow.pop %v1356
    %v1358 = vsel %vm1354, %v1357, 0.0
    %v1359 = vsel %vm1345, %v1358, 0.0
    %1360 = vadd.xlane.f32.xlu0 %v1359
    %v1361 = vpop.xlane.xlu0 %1360
    %v1362 = vrcp.pop %v1361
    %v1363 = vmul.f32 %v1358, %v1362
    %v1364 = vsel %vm1345, %v1363, 0.0
    %v1365 = vrot.slane %v1364, 4
    %v1366 = vadd.f32 %v1364, %v1365
    %v1367 = vrot.slane %v1366, 2
    %v1368 = vadd.f32 %v1366, %v1367
    %v1369 = vrot.slane %v1368, 1
    %v1370 = vadd.f32 %v1368, %v1369
    %v1371 = vpack.c.bf16 %v697, %v694
    %v1372 = vpack.c.bf16 %v705, %v702
    %v1381 = vunpack.c.l.b16 %v226
    %v1382 = vunpack.c.h.b16 %v226
    %v1383 = vunpack.c.l.b16 %v227
    %v1384 = vunpack.c.h.b16 %v227
    %v1385 = vunpack.c.l.b16 %v228
    %v1386 = vunpack.c.h.b16 %v228
    %v1387 = vunpack.c.l.b16 %v229
    %v1388 = vunpack.c.h.b16 %v229
    %v1389 = vunpack.c.l.b16 %v230
    %v1390 = vunpack.c.h.b16 %v230
    %v1391 = vunpack.c.l.b16 %v231
    %v1392 = vunpack.c.h.b16 %v231
    %v1393 = vunpack.c.l.b16 %v232
    %v1394 = vunpack.c.h.b16 %v232
    %v1395 = vunpack.c.l.b16 %v233
    %v1396 = vunpack.c.h.b16 %v233
    %v1397 = vpack.c.b16 %v1385, %v1381
    %v1398 = vpack.c.b16 %v1386, %v1382
    %v1399 = vpack.c.b16 %v1387, %v1383
    %v1400 = vpack.c.b16 %v1388, %v1384
    %v1401 = vpack.c.b16 %v1393, %v1389
    %v1402 = vpack.c.b16 %v1394, %v1390
    %v1403 = vpack.c.b16 %v1395, %v1391
    %v1404 = vpack.c.b16 %v1396, %v1392
    %v1414 = vsel %vm522, %v1371, 0
    %v1417 = vsel %vm522, %v1372, 0
    %1419 = vmatprep.subr.bf16.mxu0 %v1398
    %1420 = vmatpush1.bf16.msra.mxu0 %v1397
    %1421 = vmatprep.subr.bf16.mxu0 %v1402
    %1422 = vmatpush1.bf16.msra.mxu0 %v1401
    %1423 = vmatprep.subr.bf16.mxu0 0
    %1424 = vmatpush1.bf16.msra.mxu0 0
    %1425 = vmatprep.subr.bf16.mxu0 0
    %1426 = vmatpush1.bf16.msra.mxu0 0
    %1427 = vmatprep.subr.bf16.mxu0 0
    %1428 = vmatpush1.bf16.msra.mxu0 0
    %1429 = vmatprep.subr.bf16.mxu0 0
    %1430 = vmatpush1.bf16.msra.mxu0 0
    %1431 = vmatprep.subr.bf16.mxu0 0
    %1432 = vmatpush1.bf16.msra.mxu0 0
    %1433 = vmatprep.subr.bf16.mxu0 0
    %1434 = vmatpush1.bf16.msra.mxu0 0
    %1435 = vmatprep.subr.bf16.mxu0 0
    %1436 = vmatpush1.bf16.msra.mxu0 0
    %1437 = vmatprep.subr.bf16.mxu0 0
    %1438 = vmatpush1.bf16.msra.mxu0 0
    %1439 = vmatprep.subr.bf16.mxu0 0
    %1440 = vmatpush1.bf16.msra.mxu0 0
    %1441 = vmatprep.subr.bf16.mxu0 0
    %1442 = vmatpush1.bf16.msra.mxu0 0
    %1443 = vmatprep.subr.bf16.mxu0 0
    %1444 = vmatpush1.bf16.msra.mxu0 0
    %1445 = vmatprep.subr.bf16.mxu0 0
    %1446 = vmatpush1.bf16.msra.mxu0 0
    %1447 = vmatprep.subr.bf16.mxu0 0
    %1448 = vmatpush1.bf16.msra.mxu0 0
    %1449 = vmatprep.subr.bf16.mxu0 0
    %1450 = vmatpush1.bf16.msra.mxu0 0
    %1451 = vmatprep.mubr.bf16.mxu0 0
    %1452 = vmatmul.mubr.bf16.gmra.mrb[0].mxu0 %v1414
    %v1453 = vpop.f32.mrb[0].mxu0
    %v1454 = vadd.f32 0.0, %v1453
    %v1455 = vpop.f32.mrb[0].mxu0
    %v1456 = vadd.f32 0.0, %v1455
    %v1457 = vpop.f32.mrb[0].mxu0
    %v1458 = vadd.f32 0.0, %v1457
    %v1459 = vpop.f32.mrb[0].mxu0
    %v1460 = vadd.f32 0.0, %v1459
    %1461 = vmatprep.mubr.bf16.mxu0 0
    %1462 = vmatmul.mubr.bf16.gmra.mrb[0].mxu0 %v1417
    %v1463 = vpop.f32.mrb[0].mxu0
    %v1464 = vadd.f32 0.0, %v1463
    %v1465 = vpop.f32.mrb[0].mxu0
    %v1466 = vadd.f32 0.0, %v1465
    %v1467 = vpop.f32.mrb[0].mxu0
    %v1468 = vadd.f32 0.0, %v1467
    %v1469 = vpop.f32.mrb[0].mxu0
    %v1470 = vadd.f32 0.0, %v1469
    %1471 = vdwg.mxu0
    %1472 = vmatprep.subr.bf16.mxu0 %v1400
    %1473 = vmatpush1.bf16.msra.mxu0 %v1399
    %1474 = vmatprep.subr.bf16.mxu0 %v1404
    %1475 = vmatpush1.bf16.msra.mxu0 %v1403
    %1476 = vmatprep.subr.bf16.mxu0 0
    %1477 = vmatpush1.bf16.msra.mxu0 0
    %1478 = vmatprep.subr.bf16.mxu0 0
    %1479 = vmatpush1.bf16.msra.mxu0 0
    %1480 = vmatprep.subr.bf16.mxu0 0
    %1481 = vmatpush1.bf16.msra.mxu0 0
    %1482 = vmatprep.subr.bf16.mxu0 0
    %1483 = vmatpush1.bf16.msra.mxu0 0
    %1484 = vmatprep.subr.bf16.mxu0 0
    %1485 = vmatpush1.bf16.msra.mxu0 0
    %1486 = vmatprep.subr.bf16.mxu0 0
    %1487 = vmatpush1.bf16.msra.mxu0 0
    %1488 = vmatprep.subr.bf16.mxu0 0
    %1489 = vmatpush1.bf16.msra.mxu0 0
    %1490 = vmatprep.subr.bf16.mxu0 0
    %1491 = vmatpush1.bf16.msra.mxu0 0
    %1492 = vmatprep.subr.bf16.mxu0 0
    %1493 = vmatpush1.bf16.msra.mxu0 0
    %1494 = vmatprep.subr.bf16.mxu0 0
    %1495 = vmatpush1.bf16.msra.mxu0 0
    %1496 = vmatprep.subr.bf16.mxu0 0
    %1497 = vmatpush1.bf16.msra.mxu0 0
    %1498 = vmatprep.subr.bf16.mxu0 0
    %1499 = vmatpush1.bf16.msra.mxu0 0
    %1500 = vmatprep.subr.bf16.mxu0 0
    %1501 = vmatpush1.bf16.msra.mxu0 0
    %1502 = vmatprep.subr.bf16.mxu0 0
    %1503 = vmatpush1.bf16.msra.mxu0 0
    %1504 = vmatprep.mubr.bf16.mxu0 0
    %1505 = vmatmul.mubr.bf16.gmra.mrb[0].mxu0 %v1414
    %v1506 = vpop.f32.mrb[0].mxu0
    %v1507 = vadd.f32 0.0, %v1506
    %v1508 = vpop.f32.mrb[0].mxu0
    %v1509 = vadd.f32 0.0, %v1508
    %v1510 = vpop.f32.mrb[0].mxu0
    %v1511 = vadd.f32 0.0, %v1510
    %v1512 = vpop.f32.mrb[0].mxu0
    %v1513 = vadd.f32 0.0, %v1512
    %1514 = vmatprep.mubr.bf16.mxu0 0
    %1515 = vmatmul.mubr.bf16.gmra.mrb[0].mxu0 %v1417
    %v1516 = vpop.f32.mrb[0].mxu0
    %v1517 = vadd.f32 0.0, %v1516
    %v1518 = vpop.f32.mrb[0].mxu0
    %v1519 = vadd.f32 0.0, %v1518
    %v1520 = vpop.f32.mrb[0].mxu0
    %v1521 = vadd.f32 0.0, %v1520
    %v1522 = vpop.f32.mrb[0].mxu0
    %v1523 = vadd.f32 0.0, %v1522
    %1524 = vdwg.mxu0
    %v1525 = vpack.c.bf16 %v1370, %v1370
    %v1534 = vunpack.c.l.b16 %v298
    %v1535 = vunpack.c.h.b16 %v298
    %v1536 = vunpack.c.l.b16 %v299
    %v1537 = vunpack.c.h.b16 %v299
    %v1538 = vunpack.c.l.b16 %v300
    %v1539 = vunpack.c.h.b16 %v300
    %v1540 = vunpack.c.l.b16 %v301
    %v1541 = vunpack.c.h.b16 %v301
    %v1542 = vunpack.c.l.b16 %v302
    %v1543 = vunpack.c.h.b16 %v302
    %v1544 = vunpack.c.l.b16 %v303
    %v1545 = vunpack.c.h.b16 %v303
    %v1546 = vunpack.c.l.b16 %v304
    %v1547 = vunpack.c.h.b16 %v304
    %v1548 = vunpack.c.l.b16 %v305
    %v1549 = vunpack.c.h.b16 %v305
    %v1550 = vpack.c.b16 %v1538, %v1534
    %v1551 = vpack.c.b16 %v1539, %v1535
    %v1552 = vpack.c.b16 %v1540, %v1536
    %v1553 = vpack.c.b16 %v1541, %v1537
    %v1554 = vpack.c.b16 %v1546, %v1542
    %v1555 = vpack.c.b16 %v1547, %v1543
    %v1556 = vpack.c.b16 %v1548, %v1544
    %v1557 = vpack.c.b16 %v1549, %v1545
    %v1567 = vsel %vm522, %v1525, 0
    %1569 = vmatprep.subr.bf16.mxu0 %v1551
    %1570 = vmatpush1.bf16.msra.mxu0 %v1550
    %1571 = vmatprep.subr.bf16.mxu0 %v1555
    %1572 = vmatpush1.bf16.msra.mxu0 %v1554
    %1573 = vmatprep.subr.bf16.mxu0 0
    %1574 = vmatpush1.bf16.msra.mxu0 0
    %1575 = vmatprep.subr.bf16.mxu0 0
    %1576 = vmatpush1.bf16.msra.mxu0 0
    %1577 = vmatprep.subr.bf16.mxu0 0
    %1578 = vmatpush1.bf16.msra.mxu0 0
    %1579 = vmatprep.subr.bf16.mxu0 0
    %1580 = vmatpush1.bf16.msra.mxu0 0
    %1581 = vmatprep.subr.bf16.mxu0 0
    %1582 = vmatpush1.bf16.msra.mxu0 0
    %1583 = vmatprep.subr.bf16.mxu0 0
    %1584 = vmatpush1.bf16.msra.mxu0 0
    %1585 = vmatprep.subr.bf16.mxu0 0
    %1586 = vmatpush1.bf16.msra.mxu0 0
    %1587 = vmatprep.subr.bf16.mxu0 0
    %1588 = vmatpush1.bf16.msra.mxu0 0
    %1589 = vmatprep.subr.bf16.mxu0 0
    %1590 = vmatpush1.bf16.msra.mxu0 0
    %1591 = vmatprep.subr.bf16.mxu0 0
    %1592 = vmatpush1.bf16.msra.mxu0 0
    %1593 = vmatprep.subr.bf16.mxu0 0
    %1594 = vmatpush1.bf16.msra.mxu0 0
    %1595 = vmatprep.subr.bf16.mxu0 0
    %1596 = vmatpush1.bf16.msra.mxu0 0
    %1597 = vmatprep.subr.bf16.mxu0 0
    %1598 = vmatpush1.bf16.msra.mxu0 0
    %1599 = vmatprep.subr.bf16.mxu0 0
    %1600 = vmatpush1.bf16.msra.mxu0 0
    %1601 = vmatprep.mubr.bf16.mxu0 0
    %1602 = vmatmul.mubr.bf16.gmra.mrb[0].mxu0 %v1567
    %v1603 = vpop.f32.mrb[0].mxu0
    %v1604 = vadd.f32 0.0, %v1603
    %v1605 = vpop.f32.mrb[0].mxu0
    %v1606 = vadd.f32 0.0, %v1605
    %v1607 = vpop.f32.mrb[0].mxu0
    %v1608 = vpop.f32.mrb[0].mxu0
    %1609 = vdwg.mxu0
    %1610 = vmatprep.subr.bf16.mxu0 %v1553
    %1611 = vmatpush1.bf16.msra.mxu0 %v1552
    %1612 = vmatprep.subr.bf16.mxu0 %v1557
    %1613 = vmatpush1.bf16.msra.mxu0 %v1556
    %1614 = vmatprep.subr.bf16.mxu0 0
    %1615 = vmatpush1.bf16.msra.mxu0 0
    %1616 = vmatprep.subr.bf16.mxu0 0
    %1617 = vmatpush1.bf16.msra.mxu0 0
    %1618 = vmatprep.subr.bf16.mxu0 0
    %1619 = vmatpush1.bf16.msra.mxu0 0
    %1620 = vmatprep.subr.bf16.mxu0 0
    %1621 = vmatpush1.bf16.msra.mxu0 0
    %1622 = vmatprep.subr.bf16.mxu0 0
    %1623 = vmatpush1.bf16.msra.mxu0 0
    %1624 = vmatprep.subr.bf16.mxu0 0
    %1625 = vmatpush1.bf16.msra.mxu0 0
    %1626 = vmatprep.subr.bf16.mxu0 0
    %1627 = vmatpush1.bf16.msra.mxu0 0
    %1628 = vmatprep.subr.bf16.mxu0 0
    %1629 = vmatpush1.bf16.msra.mxu0 0
    %1630 = vmatprep.subr.bf16.mxu0 0
    %1631 = vmatpush1.bf16.msra.mxu0 0
    %1632 = vmatprep.subr.bf16.mxu0 0
    %1633 = vmatpush1.bf16.msra.mxu0 0
    %1634 = vmatprep.subr.bf16.mxu0 0
    %1635 = vmatpush1.bf16.msra.mxu0 0
    %1636 = vmatprep.subr.bf16.mxu0 0
    %1637 = vmatpush1.bf16.msra.mxu0 0
    %1638 = vmatprep.subr.bf16.mxu0 0
    %1639 = vmatpush1.bf16.msra.mxu0 0
    %1640 = vmatprep.subr.bf16.mxu0 0
    %1641 = vmatpush1.bf16.msra.mxu0 0
    %1642 = vmatprep.mubr.bf16.mxu0 0
    %1643 = vmatmul.mubr.bf16.gmra.mrb[0].mxu0 %v1567
    %v1644 = vpop.f32.mrb[0].mxu0
    %v1645 = vadd.f32 0.0, %v1644
    %v1646 = vpop.f32.mrb[0].mxu0
    %v1647 = vadd.f32 0.0, %v1646
    %v1648 = vpop.f32.mrb[0].mxu0
    %v1649 = vpop.f32.mrb[0].mxu0
    %1650 = vdwg.mxu0
    %v1651 = vlaneseq
    %v1652 = vshrl.u32 %v1651, 7
    %v1653 = vsub.s32 0, %v1652
    %v1654 = vrot.slane %v1604, %v1653
    %v1655 = vlaneseq
    %v1656 = vshrl.u32 %v1655, 7
    %v1657 = vsub.s32 0, %v1656
    %v1658 = vrot.slane %v1606, %v1657
    %v1659 = vlaneseq
    %v1660 = vshrl.u32 %v1659, 7
    %v1661 = vsub.s32 0, %v1660
    %v1662 = vrot.slane %v1645, %v1661
    %v1663 = vlaneseq
    %v1664 = vshrl.u32 %v1663, 7
    %v1665 = vsub.s32 0, %v1664
    %v1666 = vrot.slane %v1647, %v1665
    %v1667 = vmul.f32 %v1654, %v1454
    %v1668 = vmul.f32 %v1658, %v1456
    %v1669 = vmul.f32 %v1662, %v1507
    %v1670 = vmul.f32 %v1666, %v1509
    %v1671 = vmul.f32 %v1654, %v1458
    %v1672 = vmul.f32 %v1658, %v1460
    %v1673 = vmul.f32 %v1662, %v1511
    %v1674 = vmul.f32 %v1666, %v1513
    %v1675 = vmul.f32 %v1654, %v1464
    %v1676 = vmul.f32 %v1658, %v1466
    %v1677 = vmul.f32 %v1662, %v1517
    %v1678 = vmul.f32 %v1666, %v1519
    %v1679 = vmul.f32 %v1654, %v1468
    %v1680 = vmul.f32 %v1658, %v1470
    %v1681 = vmul.f32 %v1662, %v1521
    %v1682 = vmul.f32 %v1666, %v1523
    %v1683 = vpack.c.bf16 %v1671, %v1667
    %v1684 = vpack.c.bf16 %v1672, %v1668
    %v1685 = vpack.c.bf16 %v1673, %v1669
    %v1686 = vpack.c.bf16 %v1674, %v1670
    %v1687 = vpack.c.bf16 %v1679, %v1675
    %v1688 = vpack.c.bf16 %v1680, %v1676
    %v1689 = vpack.c.bf16 %v1681, %v1677
    %v1690 = vpack.c.bf16 %v1682, %v1678
    %v1755 = vunpack.c.l.b16 %v306
    %v1756 = vunpack.c.l.b16 %v307
    %v1757 = vunpack.c.l.b16 %v308
    %v1758 = vunpack.c.l.b16 %v309
    %v1759 = vunpack.c.l.b16 %v310
    %v1760 = vunpack.c.l.b16 %v311
    %v1761 = vunpack.c.l.b16 %v312
    %v1762 = vunpack.c.l.b16 %v313
    %v1763 = vunpack.c.l.b16 %v314
    %v1764 = vunpack.c.l.b16 %v315
    %v1765 = vunpack.c.l.b16 %v316
    %v1766 = vunpack.c.l.b16 %v317
    %v1767 = vunpack.c.l.b16 %v318
    %v1768 = vunpack.c.l.b16 %v319
    %v1769 = vunpack.c.l.b16 %v320
    %v1770 = vunpack.c.l.b16 %v321
    %v1771 = vunpack.c.l.b16 %v322
    %v1772 = vunpack.c.l.b16 %v323
    %v1773 = vunpack.c.l.b16 %v324
    %v1774 = vunpack.c.l.b16 %v325
    %v1775 = vunpack.c.l.b16 %v326
    %v1776 = vunpack.c.l.b16 %v327
    %v1777 = vunpack.c.l.b16 %v328
    %v1778 = vunpack.c.l.b16 %v329
    %v1779 = vunpack.c.l.b16 %v330
    %v1780 = vunpack.c.l.b16 %v331
    %v1781 = vunpack.c.l.b16 %v332
    %v1782 = vunpack.c.l.b16 %v333
    %v1783 = vunpack.c.l.b16 %v334
    %v1784 = vunpack.c.l.b16 %v335
    %v1785 = vunpack.c.l.b16 %v336
    %v1786 = vunpack.c.l.b16 %v337
    %v1787 = vunpack.c.l.b16 %v338
    %v1788 = vunpack.c.l.b16 %v339
    %v1789 = vunpack.c.l.b16 %v340
    %v1790 = vunpack.c.l.b16 %v341
    %v1791 = vunpack.c.l.b16 %v342
    %v1792 = vunpack.c.l.b16 %v343
    %v1793 = vunpack.c.l.b16 %v344
    %v1794 = vunpack.c.l.b16 %v345
    %v1795 = vunpack.c.l.b16 %v346
    %v1796 = vunpack.c.l.b16 %v347
    %v1797 = vunpack.c.l.b16 %v348
    %v1798 = vunpack.c.l.b16 %v349
    %v1799 = vunpack.c.l.b16 %v350
    %v1800 = vunpack.c.l.b16 %v351
    %v1801 = vunpack.c.l.b16 %v352
    %v1802 = vunpack.c.l.b16 %v353
    %v1803 = vunpack.c.l.b16 %v354
    %v1804 = vunpack.c.l.b16 %v355
    %v1805 = vunpack.c.l.b16 %v356
    %v1806 = vunpack.c.l.b16 %v357
    %v1807 = vunpack.c.l.b16 %v358
    %v1808 = vunpack.c.l.b16 %v359
    %v1809 = vunpack.c.l.b16 %v360
    %v1810 = vunpack.c.l.b16 %v361
    %v1811 = vunpack.c.l.b16 %v362
    %v1812 = vunpack.c.l.b16 %v363
    %v1813 = vunpack.c.l.b16 %v364
    %v1814 = vunpack.c.l.b16 %v365
    %v1815 = vunpack.c.l.b16 %v366
    %v1816 = vunpack.c.l.b16 %v367
    %v1817 = vunpack.c.l.b16 %v368
    %v1818 = vunpack.c.l.b16 %v369
    %v1819 = vpack.c.b16 %v1756, %v1755
    %v1820 = vpack.c.b16 %v1758, %v1757
    %v1821 = vpack.c.b16 %v1760, %v1759
    %v1822 = vpack.c.b16 %v1762, %v1761
    %v1823 = vpack.c.b16 %v1764, %v1763
    %v1824 = vpack.c.b16 %v1766, %v1765
    %v1825 = vpack.c.b16 %v1768, %v1767
    %v1826 = vpack.c.b16 %v1770, %v1769
    %v1827 = vpack.c.b16 %v1772, %v1771
    %v1828 = vpack.c.b16 %v1774, %v1773
    %v1829 = vpack.c.b16 %v1776, %v1775
    %v1830 = vpack.c.b16 %v1778, %v1777
    %v1831 = vpack.c.b16 %v1780, %v1779
    %v1832 = vpack.c.b16 %v1782, %v1781
    %v1833 = vpack.c.b16 %v1784, %v1783
    %v1834 = vpack.c.b16 %v1786, %v1785
    %v1835 = vpack.c.b16 %v1788, %v1787
    %v1836 = vpack.c.b16 %v1790, %v1789
    %v1837 = vpack.c.b16 %v1792, %v1791
    %v1838 = vpack.c.b16 %v1794, %v1793
    %v1839 = vpack.c.b16 %v1796, %v1795
    %v1840 = vpack.c.b16 %v1798, %v1797
    %v1841 = vpack.c.b16 %v1800, %v1799
    %v1842 = vpack.c.b16 %v1802, %v1801
    %v1843 = vpack.c.b16 %v1804, %v1803
    %v1844 = vpack.c.b16 %v1806, %v1805
    %v1845 = vpack.c.b16 %v1808, %v1807
    %v1846 = vpack.c.b16 %v1810, %v1809
    %v1847 = vpack.c.b16 %v1812, %v1811
    %v1848 = vpack.c.b16 %v1814, %v1813
    %v1849 = vpack.c.b16 %v1816, %v1815
    %v1850 = vpack.c.b16 %v1818, %v1817
    %1883 = vmatprep.subr.bf16.mxu0 0
    %1884 = vmatpush1.bf16.msra.mxu0 %v1819
    %1885 = vmatprep.subr.bf16.mxu0 0
    %1886 = vmatpush1.bf16.msra.mxu0 %v1820
    %1887 = vmatprep.subr.bf16.mxu0 0
    %1888 = vmatpush1.bf16.msra.mxu0 %v1821
    %1889 = vmatprep.subr.bf16.mxu0 0
    %1890 = vmatpush1.bf16.msra.mxu0 %v1822
    %1891 = vmatprep.subr.bf16.mxu0 0
    %1892 = vmatpush1.bf16.msra.mxu0 %v1823
    %1893 = vmatprep.subr.bf16.mxu0 0
    %1894 = vmatpush1.bf16.msra.mxu0 %v1824
    %1895 = vmatprep.subr.bf16.mxu0 0
    %1896 = vmatpush1.bf16.msra.mxu0 %v1825
    %1897 = vmatprep.subr.bf16.mxu0 0
    %1898 = vmatpush1.bf16.msra.mxu0 %v1826
    %1899 = vmatprep.subr.bf16.mxu0 0
    %1900 = vmatpush1.bf16.msra.mxu0 %v1827
    %1901 = vmatprep.subr.bf16.mxu0 0
    %1902 = vmatpush1.bf16.msra.mxu0 %v1828
    %1903 = vmatprep.subr.bf16.mxu0 0
    %1904 = vmatpush1.bf16.msra.mxu0 %v1829
    %1905 = vmatprep.subr.bf16.mxu0 0
    %1906 = vmatpush1.bf16.msra.mxu0 %v1830
    %1907 = vmatprep.subr.bf16.mxu0 0
    %1908 = vmatpush1.bf16.msra.mxu0 %v1831
    %1909 = vmatprep.subr.bf16.mxu0 0
    %1910 = vmatpush1.bf16.msra.mxu0 %v1832
    %1911 = vmatprep.subr.bf16.mxu0 0
    %1912 = vmatpush1.bf16.msra.mxu0 %v1833
    %1913 = vmatprep.subr.bf16.mxu0 0
    %1914 = vmatpush1.bf16.msra.mxu0 %v1834
    %1915 = vmatprep.mubr.bf16.mxu0 %v1684
    %1916 = vmatmul.mubr.bf16.gmra.mrb[0].mxu0 %v1683
    %v1917 = vpop.f32.mrb[0].mxu0
    %v1918 = vadd.f32 0.0, %v1917
    %v1919 = vpop.f32.mrb[0].mxu0
    %v1920 = vpop.f32.mrb[0].mxu0
    %v1921 = vadd.f32 0.0, %v1920
    %v1922 = vpop.f32.mrb[0].mxu0
    %1923 = vmatprep.mubr.bf16.mxu0 %v1688
    %1924 = vmatmul.mubr.bf16.gmra.mrb[0].mxu0 %v1687
    %v1925 = vpop.f32.mrb[0].mxu0
    %v1926 = vadd.f32 0.0, %v1925
    %v1927 = vpop.f32.mrb[0].mxu0
    %v1928 = vpop.f32.mrb[0].mxu0
    %v1929 = vadd.f32 0.0, %v1928
    %v1930 = vpop.f32.mrb[0].mxu0
    %1931 = vdwg.mxu0
    %1932 = vmatprep.subr.bf16.mxu0 0
    %1933 = vmatpush1.bf16.msra.mxu0 %v1835
    %1934 = vmatprep.subr.bf16.mxu0 0
    %1935 = vmatpush1.bf16.msra.mxu0 %v1836
    %1936 = vmatprep.subr.bf16.mxu0 0
    %1937 = vmatpush1.bf16.msra.mxu0 %v1837
    %1938 = vmatprep.subr.bf16.mxu0 0
    %1939 = vmatpush1.bf16.msra.mxu0 %v1838
    %1940 = vmatprep.subr.bf16.mxu0 0
    %1941 = vmatpush1.bf16.msra.mxu0 %v1839
    %1942 = vmatprep.subr.bf16.mxu0 0
    %1943 = vmatpush1.bf16.msra.mxu0 %v1840
    %1944 = vmatprep.subr.bf16.mxu0 0
    %1945 = vmatpush1.bf16.msra.mxu0 %v1841
    %1946 = vmatprep.subr.bf16.mxu0 0
    %1947 = vmatpush1.bf16.msra.mxu0 %v1842
    %1948 = vmatprep.subr.bf16.mxu0 0
    %1949 = vmatpush1.bf16.msra.mxu0 %v1843
    %1950 = vmatprep.subr.bf16.mxu0 0
    %1951 = vmatpush1.bf16.msra.mxu0 %v1844
    %1952 = vmatprep.subr.bf16.mxu0 0
    %1953 = vmatpush1.bf16.msra.mxu0 %v1845
    %1954 = vmatprep.subr.bf16.mxu0 0
    %1955 = vmatpush1.bf16.msra.mxu0 %v1846
    %1956 = vmatprep.subr.bf16.mxu0 0
    %1957 = vmatpush1.bf16.msra.mxu0 %v1847
    %1958 = vmatprep.subr.bf16.mxu0 0
    %1959 = vmatpush1.bf16.msra.mxu0 %v1848
    %1960 = vmatprep.subr.bf16.mxu0 0
    %1961 = vmatpush1.bf16.msra.mxu0 %v1849
    %1962 = vmatprep.subr.bf16.mxu0 0
    %1963 = vmatpush1.bf16.msra.mxu0 %v1850
    %1964 = vmatprep.mubr.bf16.mxu0 %v1686
    %1965 = vmatmul.mubr.bf16.gmra.mrb[0].mxu0 %v1685
    %v1966 = vpop.f32.mrb[0].mxu0
    %v1967 = vadd.f32 %v1918, %v1966
    %v1968 = vpop.f32.mrb[0].mxu0
    %v1969 = vpop.f32.mrb[0].mxu0
    %v1970 = vadd.f32 %v1921, %v1969
    %v1971 = vpop.f32.mrb[0].mxu0
    %1972 = vmatprep.mubr.bf16.mxu0 %v1690
    %1973 = vmatmul.mubr.bf16.gmra.mrb[0].mxu0 %v1689
    %v1974 = vpop.f32.mrb[0].mxu0
    %v1975 = vadd.f32 %v1926, %v1974
    %v1976 = vpop.f32.mrb[0].mxu0
    %v1977 = vpop.f32.mrb[0].mxu0
    %v1978 = vadd.f32 %v1929, %v1977
    %v1979 = vpop.f32.mrb[0].mxu0
    %1980 = vdwg.mxu0
    %v1981 = vpack.c.bf16 %v1970, %v1967
    %v1982 = vpack.c.bf16 %v1978, %v1975
    %v1987 = vunpack.c.l.b16 %v490
    %v1988 = vunpack.c.l.b16 %v491
    %v1989 = vunpack.c.l.b16 %v492
    %v1990 = vunpack.c.l.b16 %v493
    %v1991 = vpack.c.b16 %v1988, %v1987
    %v1992 = vpack.c.b16 %v1990, %v1989
    %v1994 = vsel %vm522, %v1991, 0
    %v1997 = vsel %vm522, %v1992, 0
    %1999 = vmatprep.subr.bf16.mxu0 0
    %2000 = vmatpush1.bf16.msra.mxu0 %v1981
    %2001 = vmatprep.subr.bf16.mxu0 0
    %2002 = vmatpush1.bf16.msra.mxu0 %v1982
    %2003 = vmatprep.subr.bf16.mxu0 0
    %2004 = vmatpush1.bf16.msra.mxu0 0
    %2005 = vmatprep.subr.bf16.mxu0 0
    %2006 = vmatpush1.bf16.msra.mxu0 0
    %2007 = vmatprep.subr.bf16.mxu0 0
    %2008 = vmatpush1.bf16.msra.mxu0 0
    %2009 = vmatprep.subr.bf16.mxu0 0
    %2010 = vmatpush1.bf16.msra.mxu0 0
    %2011 = vmatprep.subr.bf16.mxu0 0
    %2012 = vmatpush1.bf16.msra.mxu0 0
    %2013 = vmatprep.subr.bf16.mxu0 0
    %2014 = vmatpush1.bf16.msra.mxu0 0
    %2015 = vmatprep.subr.bf16.mxu0 0
    %2016 = vmatpush1.bf16.msra.mxu0 0
    %2017 = vmatprep.subr.bf16.mxu0 0
    %2018 = vmatpush1.bf16.msra.mxu0 0
    %2019 = vmatprep.subr.bf16.mxu0 0
    %2020 = vmatpush1.bf16.msra.mxu0 0
    %2021 = vmatprep.subr.bf16.mxu0 0
    %2022 = vmatpush1.bf16.msra.mxu0 0
    %2023 = vmatprep.subr.bf16.mxu0 0
    %2024 = vmatpush1.bf16.msra.mxu0 0
    %2025 = vmatprep.subr.bf16.mxu0 0
    %2026 = vmatpush1.bf16.msra.mxu0 0
    %2027 = vmatprep.subr.bf16.mxu0 0
    %2028 = vmatpush1.bf16.msra.mxu0 0
    %2029 = vmatprep.subr.bf16.mxu0 0
    %2030 = vmatpush1.bf16.msra.mxu0 0
    %2031 = vmatprep.mubr.bf16.mxu0 0
    %2032 = vmatmul.mubr.bf16.gmra.mrb[0].mxu0 %v1994
    %v2033 = vpop.f32.mrb[0].mxu0
    %v2034 = vadd.f32 %v494, %v2033
    %v2035 = vpop.f32.mrb[0].mxu0
    %v2036 = vpop.f32.mrb[0].mxu0
    %v2037 = vadd.f32 %v495, %v2036
    %v2038 = vpop.f32.mrb[0].mxu0
    %2039 = vmatprep.mubr.bf16.mxu0 0
    %2040 = vmatmul.mubr.bf16.gmra.mrb[0].mxu0 %v1997
    %v2041 = vpop.f32.mrb[0].mxu0
    %v2042 = vadd.f32 %v496, %v2041
    %v2043 = vpop.f32.mrb[0].mxu0
    %v2044 = vpop.f32.mrb[0].mxu0
    %v2045 = vadd.f32 %v497, %v2044
    %v2046 = vpop.f32.mrb[0].mxu0
    %2047 = vdwg.mxu0
    %v2048 = vadd.f32 %v452, %v2034
    %v2049 = vadd.f32 %v455, %v2037
    %v2050 = vadd.f32 %v460, %v2042
    %v2051 = vadd.f32 %v463, %v2045
    %v2052 = vpack.c.bf16 %v2049, %v2048
    %v2053 = vpack.c.bf16 %v2051, %v2050
    %v2058 = vunpack.c.l.b16 %v370
    %v2059 = vunpack.c.l.b16 %v371
    %v2060 = vunpack.c.l.b16 %v372
    %v2061 = vunpack.c.l.b16 %v373
    %v2062 = vpack.c.b16 %v2059, %v2058
    %v2063 = vpack.c.b16 %v2061, %v2060
    %v2067 = vsel %vm522, %v2052, 0
    %v2070 = vsel %vm522, %v2053, 0
    %2072 = vmatprep.subr.bf16.mxu0 0
    %2073 = vmatpush1.bf16.msra.mxu0 %v2062
    %2074 = vmatprep.subr.bf16.mxu0 0
    %2075 = vmatpush1.bf16.msra.mxu0 %v2063
    %2076 = vmatprep.subr.bf16.mxu0 0
    %2077 = vmatpush1.bf16.msra.mxu0 0
    %2078 = vmatprep.subr.bf16.mxu0 0
    %2079 = vmatpush1.bf16.msra.mxu0 0
    %2080 = vmatprep.subr.bf16.mxu0 0
    %2081 = vmatpush1.bf16.msra.mxu0 0
    %2082 = vmatprep.subr.bf16.mxu0 0
    %2083 = vmatpush1.bf16.msra.mxu0 0
    %2084 = vmatprep.subr.bf16.mxu0 0
    %2085 = vmatpush1.bf16.msra.mxu0 0
    %2086 = vmatprep.subr.bf16.mxu0 0
    %2087 = vmatpush1.bf16.msra.mxu0 0
    %2088 = vmatprep.subr.bf16.mxu0 0
    %2089 = vmatpush1.bf16.msra.mxu0 0
    %2090 = vmatprep.subr.bf16.mxu0 0
    %2091 = vmatpush1.bf16.msra.mxu0 0
    %2092 = vmatprep.subr.bf16.mxu0 0
    %2093 = vmatpush1.bf16.msra.mxu0 0
    %2094 = vmatprep.subr.bf16.mxu0 0
    %2095 = vmatpush1.bf16.msra.mxu0 0
    %2096 = vmatprep.subr.bf16.mxu0 0
    %2097 = vmatpush1.bf16.msra.mxu0 0
    %2098 = vmatprep.subr.bf16.mxu0 0
    %2099 = vmatpush1.bf16.msra.mxu0 0
    %2100 = vmatprep.subr.bf16.mxu0 0
    %2101 = vmatpush1.bf16.msra.mxu0 0
    %2102 = vmatprep.subr.bf16.mxu0 0
    %2103 = vmatpush1.bf16.msra.mxu0 0
    %2104 = vmatprep.mubr.bf16.mxu0 0
    %2105 = vmatmul.mubr.bf16.gmra.mrb[0].mxu0 %v2067
    %v2106 = vpop.f32.mrb[0].mxu0
    %v2107 = vadd.f32 0.0, %v2106
    %v2108 = vpop.f32.mrb[0].mxu0
    %v2109 = vpop.f32.mrb[0].mxu0
    %v2110 = vadd.f32 0.0, %v2109
    %v2111 = vpop.f32.mrb[0].mxu0
    %2112 = vmatprep.mubr.bf16.mxu0 0
    %2113 = vmatmul.mubr.bf16.gmra.mrb[0].mxu0 %v2070
    %v2114 = vpop.f32.mrb[0].mxu0
    %v2115 = vadd.f32 0.0, %v2114
    %v2116 = vpop.f32.mrb[0].mxu0
    %v2117 = vpop.f32.mrb[0].mxu0
    %v2118 = vadd.f32 0.0, %v2117
    %v2119 = vpop.f32.mrb[0].mxu0
    %2120 = vdwg.mxu0
    %v2121 = vpack.c.bf16 %v2110, %v2107
    %v2122 = vpack.c.bf16 %v2118, %v2115
    %v2131 = vunpack.c.l.b16 %v498
    %v2132 = vunpack.c.l.b16 %v499
    %v2133 = vunpack.c.l.b16 %v500
    %v2134 = vunpack.c.l.b16 %v501
    %v2135 = vunpack.c.l.b16 %v502
    %v2136 = vunpack.c.l.b16 %v503
    %v2137 = vunpack.c.l.b16 %v504
    %v2138 = vunpack.c.l.b16 %v505
    %v2139 = vpack.c.b16 %v2132, %v2131
    %v2140 = vpack.c.b16 %v2134, %v2133
    %v2141 = vpack.c.b16 %v2136, %v2135
    %v2142 = vpack.c.b16 %v2138, %v2137
    %v2144 = vsel %vm522, %v2139, 0
    %v2147 = vsel %vm522, %v2140, 0
    %v2150 = vsel %vm522, %v2141, 0
    %v2153 = vsel %vm522, %v2142, 0
    %2155 = vmatprep.subr.bf16.mxu0 0
    %2156 = vmatpush1.bf16.msra.mxu0 %v2121
    %2157 = vmatprep.subr.bf16.mxu0 0
    %2158 = vmatpush1.bf16.msra.mxu0 %v2122
    %2159 = vmatprep.subr.bf16.mxu0 0
    %2160 = vmatpush1.bf16.msra.mxu0 0
    %2161 = vmatprep.subr.bf16.mxu0 0
    %2162 = vmatpush1.bf16.msra.mxu0 0
    %2163 = vmatprep.subr.bf16.mxu0 0
    %2164 = vmatpush1.bf16.msra.mxu0 0
    %2165 = vmatprep.subr.bf16.mxu0 0
    %2166 = vmatpush1.bf16.msra.mxu0 0
    %2167 = vmatprep.subr.bf16.mxu0 0
    %2168 = vmatpush1.bf16.msra.mxu0 0
    %2169 = vmatprep.subr.bf16.mxu0 0
    %2170 = vmatpush1.bf16.msra.mxu0 0
    %2171 = vmatprep.subr.bf16.mxu0 0
    %2172 = vmatpush1.bf16.msra.mxu0 0
    %2173 = vmatprep.subr.bf16.mxu0 0
    %2174 = vmatpush1.bf16.msra.mxu0 0
    %2175 = vmatprep.subr.bf16.mxu0 0
    %2176 = vmatpush1.bf16.msra.mxu0 0
    %2177 = vmatprep.subr.bf16.mxu0 0
    %2178 = vmatpush1.bf16.msra.mxu0 0
    %2179 = vmatprep.subr.bf16.mxu0 0
    %2180 = vmatpush1.bf16.msra.mxu0 0
    %2181 = vmatprep.subr.bf16.mxu0 0
    %2182 = vmatpush1.bf16.msra.mxu0 0
    %2183 = vmatprep.subr.bf16.mxu0 0
    %2184 = vmatpush1.bf16.msra.mxu0 0
    %2185 = vmatprep.subr.bf16.mxu0 0
    %2186 = vmatpush1.bf16.msra.mxu0 0
    %2187 = vmatprep.mubr.bf16.mxu0 0
    %2188 = vmatmul.mubr.bf16.gmra.mrb[0].mxu0 %v2144
    %v2189 = vpop.f32.mrb[0].mxu0
    %v2190 = vadd.f32 0.0, %v2189
    %v2191 = vpop.f32.mrb[0].mxu0
    %v2192 = vpop.f32.mrb[0].mxu0
    %v2193 = vadd.f32 0.0, %v2192
    %v2194 = vpop.f32.mrb[0].mxu0
    %2195 = vmatprep.mubr.bf16.mxu0 0
    %2196 = vmatmul.mubr.bf16.gmra.mrb[0].mxu0 %v2147
    %v2197 = vpop.f32.mrb[0].mxu0
    %v2198 = vadd.f32 0.0, %v2197
    %v2199 = vpop.f32.mrb[0].mxu0
    %v2200 = vpop.f32.mrb[0].mxu0
    %v2201 = vadd.f32 0.0, %v2200
    %v2202 = vpop.f32.mrb[0].mxu0
    %2203 = vmatprep.mubr.bf16.mxu0 0
    %2204 = vmatmul.mubr.bf16.gmra.mrb[0].mxu0 %v2150
    %v2205 = vpop.f32.mrb[0].mxu0
    %v2206 = vadd.f32 0.0, %v2205
    %v2207 = vpop.f32.mrb[0].mxu0
    %v2208 = vpop.f32.mrb[0].mxu0
    %v2209 = vadd.f32 0.0, %v2208
    %v2210 = vpop.f32.mrb[0].mxu0
    %2211 = vmatprep.mubr.bf16.mxu0 0
    %2212 = vmatmul.mubr.bf16.gmra.mrb[0].mxu0 %v2153
    %v2213 = vpop.f32.mrb[0].mxu0
    %v2214 = vadd.f32 0.0, %v2213
    %v2215 = vpop.f32.mrb[0].mxu0
    %v2216 = vpop.f32.mrb[0].mxu0
    %v2217 = vadd.f32 0.0, %v2216
    %v2218 = vpop.f32.mrb[0].mxu0
    %2219 = vdwg.mxu0
    %v2220 = vmax.f32 %v2190, 0.0
    %v2221 = vmax.f32 %v2193, 0.0
    %v2222 = vmax.f32 %v2198, 0.0
    %v2223 = vmax.f32 %v2201, 0.0
    %v2224 = vmax.f32 %v2206, 0.0
    %v2225 = vmax.f32 %v2209, 0.0
    %v2226 = vmax.f32 %v2214, 0.0
    %v2227 = vmax.f32 %v2217, 0.0
    %v2228 = vpack.c.bf16 %v2221, %v2220
    %v2229 = vpack.c.bf16 %v2223, %v2222
    %v2230 = vpack.c.bf16 %v2225, %v2224
    %v2231 = vpack.c.bf16 %v2227, %v2226
    %v2236 = vunpack.c.l.b16 %v506
    %v2237 = vunpack.c.l.b16 %v507
    %v2238 = vunpack.c.l.b16 %v508
    %v2239 = vunpack.c.l.b16 %v509
    %v2240 = vpack.c.b16 %v2237, %v2236
    %v2241 = vpack.c.b16 %v2239, %v2238
    %vm2242 = vcmask 523264
    %v2244 = vsel %vm2242, %v2240, 0
    %v2247 = vsel %vm2242, %v2241, 0
    %2249 = vmatprep.subr.bf16.mxu0 0
    %2250 = vmatpush1.bf16.msra.mxu0 %v2228
    %2251 = vmatprep.subr.bf16.mxu0 0
    %2252 = vmatpush1.bf16.msra.mxu0 %v2229
    %2253 = vmatprep.subr.bf16.mxu0 0
    %2254 = vmatpush1.bf16.msra.mxu0 %v2230
    %2255 = vmatprep.subr.bf16.mxu0 0
    %2256 = vmatpush1.bf16.msra.mxu0 %v2231
    %2257 = vmatprep.subr.bf16.mxu0 0
    %2258 = vmatpush1.bf16.msra.mxu0 0
    %2259 = vmatprep.subr.bf16.mxu0 0
    %2260 = vmatpush1.bf16.msra.mxu0 0
    %2261 = vmatprep.subr.bf16.mxu0 0
    %2262 = vmatpush1.bf16.msra.mxu0 0
    %2263 = vmatprep.subr.bf16.mxu0 0
    %2264 = vmatpush1.bf16.msra.mxu0 0
    %2265 = vmatprep.subr.bf16.mxu0 0
    %2266 = vmatpush1.bf16.msra.mxu0 0
    %2267 = vmatprep.subr.bf16.mxu0 0
    %2268 = vmatpush1.bf16.msra.mxu0 0
    %2269 = vmatprep.subr.bf16.mxu0 0
    %2270 = vmatpush1.bf16.msra.mxu0 0
    %2271 = vmatprep.subr.bf16.mxu0 0
    %2272 = vmatpush1.bf16.msra.mxu0 0
    %2273 = vmatprep.subr.bf16.mxu0 0
    %2274 = vmatpush1.bf16.msra.mxu0 0
    %2275 = vmatprep.subr.bf16.mxu0 0
    %2276 = vmatpush1.bf16.msra.mxu0 0
    %2277 = vmatprep.subr.bf16.mxu0 0
    %2278 = vmatpush1.bf16.msra.mxu0 0
    %2279 = vmatprep.subr.bf16.mxu0 0
    %2280 = vmatpush1.bf16.msra.mxu0 0
    %2281 = vmatprep.mubr.bf16.mxu0 0
    %2282 = vmatmul.mubr.bf16.gmra.mrb[0].mxu0 %v2244
    %v2283 = vpop.f32.mrb[0].mxu0
    %v2284 = vadd.f32 0.0, %v2283
    %v2285 = vpop.f32.mrb[0].mxu0
    %v2286 = vpop.f32.mrb[0].mxu0
    %v2287 = vadd.f32 0.0, %v2286
    %v2288 = vpop.f32.mrb[0].mxu0
    %2289 = vmatprep.mubr.bf16.mxu0 0
    %2290 = vmatmul.mubr.bf16.gmra.mrb[0].mxu0 %v2247
    %v2291 = vpop.f32.mrb[0].mxu0
    %v2292 = vadd.f32 0.0, %v2291
    %v2293 = vpop.f32.mrb[0].mxu0
    %v2294 = vpop.f32.mrb[0].mxu0
    %v2295 = vadd.f32 0.0, %v2294
    %v2296 = vpop.f32.mrb[0].mxu0
    %2297 = vdwg.mxu0
    %v2298 = vadd.f32 %v2107, %v2284
    %v2299 = vadd.f32 %v2110, %v2287
    %v2300 = vadd.f32 %v2115, %v2292
    %v2301 = vadd.f32 %v2118, %v2295
    %v2302 = vpack.c.bf16 %v2299, %v2298
    %v2303 = vpack.c.bf16 %v2301, %v2300
    %v2305 = vsel %vm522, %v2302, 0
    %v2308 = vsel %vm522, %v2303, 0
    %2310 = vmatprep.subr.bf16.mxu0 0
    %2311 = vmatpush1.bf16.msra.mxu0 %v2062
    %2312 = vmatprep.subr.bf16.mxu0 0
    %2313 = vmatpush1.bf16.msra.mxu0 %v2063
    %2314 = vmatprep.subr.bf16.mxu0 0
    %2315 = vmatpush1.bf16.msra.mxu0 0
    %2316 = vmatprep.subr.bf16.mxu0 0
    %2317 = vmatpush1.bf16.msra.mxu0 0
    %2318 = vmatprep.subr.bf16.mxu0 0
    %2319 = vmatpush1.bf16.msra.mxu0 0
    %2320 = vmatprep.subr.bf16.mxu0 0
    %2321 = vmatpush1.bf16.msra.mxu0 0
    %2322 = vmatprep.subr.bf16.mxu0 0
    %2323 = vmatpush1.bf16.msra.mxu0 0
    %2324 = vmatprep.subr.bf16.mxu0 0
    %2325 = vmatpush1.bf16.msra.mxu0 0
    %2326 = vmatprep.subr.bf16.mxu0 0
    %2327 = vmatpush1.bf16.msra.mxu0 0
    %2328 = vmatprep.subr.bf16.mxu0 0
    %2329 = vmatpush1.bf16.msra.mxu0 0
    %2330 = vmatprep.subr.bf16.mxu0 0
    %2331 = vmatpush1.bf16.msra.mxu0 0
    %2332 = vmatprep.subr.bf16.mxu0 0
    %2333 = vmatpush1.bf16.msra.mxu0 0
    %2334 = vmatprep.subr.bf16.mxu0 0
    %2335 = vmatpush1.bf16.msra.mxu0 0
    %2336 = vmatprep.subr.bf16.mxu0 0
    %2337 = vmatpush1.bf16.msra.mxu0 0
    %2338 = vmatprep.subr.bf16.mxu0 0
    %2339 = vmatpush1.bf16.msra.mxu0 0
    %2340 = vmatprep.subr.bf16.mxu0 0
    %2341 = vmatpush1.bf16.msra.mxu0 0
    %2342 = vmatprep.mubr.bf16.mxu0 0
    %2343 = vmatmul.mubr.bf16.gmra.mrb[0].mxu0 %v2305
    %v2344 = vpop.f32.mrb[0].mxu0
    %v2345 = vadd.f32 0.0, %v2344
    %v2346 = vpop.f32.mrb[0].mxu0
    %v2347 = vpop.f32.mrb[0].mxu0
    %v2348 = vadd.f32 0.0, %v2347
    %v2349 = vpop.f32.mrb[0].mxu0
    %2350 = vmatprep.mubr.bf16.mxu0 0
    %2351 = vmatmul.mubr.bf16.gmra.mrb[0].mxu0 %v2308
    %v2352 = vpop.f32.mrb[0].mxu0
    %v2353 = vadd.f32 0.0, %v2352
    %v2354 = vpop.f32.mrb[0].mxu0
    %v2355 = vpop.f32.mrb[0].mxu0
    %v2356 = vadd.f32 0.0, %v2355
    %v2357 = vpop.f32.mrb[0].mxu0
    %2358 = vdwg.mxu0
    %v2359 = vld [vmem:[#allocation5] sm:$0xf]
    %v2360 = vld [vmem:[#allocation5 + $0x4] sm:$0xf]
    %v2361 = vld [vmem:[#allocation5 + $0x8] sm:$0xf]
    %v2362 = vld [vmem:[#allocation5 + $0xc] sm:$0xf]
    %v2363 = vld [vmem:[%s43] sm:$0xff]
    %v2364 = vld [vmem:[%s43 + $0x8] sm:$0xff]
    %v2365 = vld [vmem:[%s43 + $0x10] sm:$0xff]
    %v2366 = vld [vmem:[%s43 + $0x18] sm:$0xff]
    %v2367 = vld [vmem:[%s45] sm:$0xf]
    %v2368 = vld [vmem:[%s45 + $0x4] sm:$0xf]
    %v2369 = vld [vmem:[%s45 + $0x8] sm:$0xf]
    %v2370 = vld [vmem:[%s45 + $0xc] sm:$0xf]
    %v2371 = vld [vmem:[%s47] sm:$0xff]
    %v2372 = vld [vmem:[%s47 + $0x8] sm:$0xff]
    %v2373 = vld [vmem:[%s47 + $0x10] sm:$0xff]
    %v2374 = vld [vmem:[%s47 + $0x18] sm:$0xff]
    %v2375 = vld [vmem:[%s49] sm:$0xf]
    %v2376 = vld [vmem:[%s49 + $0x4] sm:$0xf]
    %v2377 = vld [vmem:[%s49 + $0x8] sm:$0xf]
    %v2378 = vld [vmem:[%s49 + $0xc] sm:$0xf]
    %v2379 = vld [vmem:[%s51] sm:$0xff]
    %v2380 = vld [vmem:[%s51 + $0x8] sm:$0xff]
    %v2381 = vld [vmem:[%s51 + $0x10] sm:$0xff]
    %v2382 = vld [vmem:[%s51 + $0x18] sm:$0xff]
    %v2383 = vld [vmem:[#allocation7] sm:$0xf]
    %v2384 = vld [vmem:[#allocation7 + $0x4] sm:$0xf]
    %v2385 = vld [vmem:[#allocation7 + $0x8] sm:$0xf]
    %v2386 = vld [vmem:[#allocation7 + $0xc] sm:$0xf]
    %v2387 = vld [vmem:[%s55] sm:$0xff]
    %v2388 = vld [vmem:[%s55 + $0x8] sm:$0xff]
    %v2389 = vld [vmem:[%s55 + $0x10] sm:$0xff]
    %v2390 = vld [vmem:[%s55 + $0x18] sm:$0xff]
    %v2391 = vld [vmem:[%s57] sm:$0xf]
    %v2392 = vld [vmem:[%s57 + $0x4] sm:$0xf]
    %v2393 = vld [vmem:[%s57 + $0x8] sm:$0xf]
    %v2394 = vld [vmem:[%s57 + $0xc] sm:$0xf]
    %v2395 = vld [vmem:[%s57 + $0x10] sm:$0xf]
    %v2396 = vld [vmem:[%s57 + $0x14] sm:$0xf]
    %v2397 = vld [vmem:[%s57 + $0x18] sm:$0xf]
    %v2398 = vld [vmem:[%s57 + $0x1c] sm:$0xf]
    %v2399 = vld [vmem:[#allocation8] sm:$0xf]
    %v2400 = vld [vmem:[#allocation8 + $0x4] sm:$0xf]
    %v2401 = vld [vmem:[#allocation8 + $0x8] sm:$0xf]
    %v2402 = vld [vmem:[#allocation8 + $0xc] sm:$0xf]
    %v2403 = vpack.c.bf16 %v2348, %v2345
    %v2404 = vpack.c.bf16 %v2356, %v2353
    %v2409 = vunpack.c.l.b16 %v2359
    %v2410 = vunpack.c.l.b16 %v2360
    %v2411 = vunpack.c.l.b16 %v2361
    %v2412 = vunpack.c.l.b16 %v2362
    %v2413 = vpack.c.b16 %v2410, %v2409
    %v2414 = vpack.c.b16 %v2412, %v2411
    %v2416 = vsel %vm522, %v2413, 0
    %v2419 = vsel %vm522, %v2414, 0
    %2421 = vmatprep.subr.bf16.mxu0 0
    %2422 = vmatpush1.bf16.msra.mxu0 %v2403
    %2423 = vmatprep.subr.bf16.mxu0 0
    %2424 = vmatpush1.bf16.msra.mxu0 %v2404
    %2425 = vmatprep.subr.bf16.mxu0 0
    %2426 = vmatpush1.bf16.msra.mxu0 0
    %2427 = vmatprep.subr.bf16.mxu0 0
    %2428 = vmatpush1.bf16.msra.mxu0 0
    %2429 = vmatprep.subr.bf16.mxu0 0
    %2430 = vmatpush1.bf16.msra.mxu0 0
    %2431 = vmatprep.subr.bf16.mxu0 0
    %2432 = vmatpush1.bf16.msra.mxu0 0
    %2433 = vmatprep.subr.bf16.mxu0 0
    %2434 = vmatpush1.bf16.msra.mxu0 0
    %2435 = vmatprep.subr.bf16.mxu0 0
    %2436 = vmatpush1.bf16.msra.mxu0 0
    %2437 = vmatprep.subr.bf16.mxu0 0
    %2438 = vmatpush1.bf16.msra.mxu0 0
    %2439 = vmatprep.subr.bf16.mxu0 0
    %2440 = vmatpush1.bf16.msra.mxu0 0
    %2441 = vmatprep.subr.bf16.mxu0 0
    %2442 = vmatpush1.bf16.msra.mxu0 0
    %2443 = vmatprep.subr.bf16.mxu0 0
    %2444 = vmatpush1.bf16.msra.mxu0 0
    %2445 = vmatprep.subr.bf16.mxu0 0
    %2446 = vmatpush1.bf16.msra.mxu0 0
    %2447 = vmatprep.subr.bf16.mxu0 0
    %2448 = vmatpush1.bf16.msra.mxu0 0
    %2449 = vmatprep.subr.bf16.mxu0 0
    %2450 = vmatpush1.bf16.msra.mxu0 0
    %2451 = vmatprep.subr.bf16.mxu0 0
    %2452 = vmatpush1.bf16.msra.mxu0 0
    %2453 = vmatprep.mubr.bf16.mxu0 0
    %2454 = vmatmul.mubr.bf16.gmra.mrb[0].mxu0 %v2416
    %v2455 = vpop.f32.mrb[0].mxu0
    %v2456 = vadd.f32 %v2363, %v2455
    %v2457 = vpop.f32.mrb[0].mxu0
    %v2458 = vpop.f32.mrb[0].mxu0
    %v2459 = vadd.f32 %v2364, %v2458
    %v2460 = vpop.f32.mrb[0].mxu0
    %2461 = vmatprep.mubr.bf16.mxu0 0
    %2462 = vmatmul.mubr.bf16.gmra.mrb[0].mxu0 %v2419
    %v2463 = vpop.f32.mrb[0].mxu0
    %v2464 = vadd.f32 %v2365, %v2463
    %v2465 = vpop.f32.mrb[0].mxu0
    %v2466 = vpop.f32.mrb[0].mxu0
    %v2467 = vadd.f32 %v2366, %v2466
    %v2468 = vpop.f32.mrb[0].mxu0
    %2469 = vdwg.mxu0
    %v2474 = vunpack.c.l.b16 %v2367
    %v2475 = vunpack.c.l.b16 %v2368
    %v2476 = vunpack.c.l.b16 %v2369
    %v2477 = vunpack.c.l.b16 %v2370
    %v2478 = vpack.c.b16 %v2475, %v2474
    %v2479 = vpack.c.b16 %v2477, %v2476
    %v2481 = vsel %vm522, %v2478, 0
    %v2484 = vsel %vm522, %v2479, 0
    %2486 = vmatprep.subr.bf16.mxu0 0
    %2487 = vmatpush1.bf16.msra.mxu0 %v2403
    %2488 = vmatprep.subr.bf16.mxu0 0
    %2489 = vmatpush1.bf16.msra.mxu0 %v2404
    %2490 = vmatprep.subr.bf16.mxu0 0
    %2491 = vmatpush1.bf16.msra.mxu0 0
    %2492 = vmatprep.subr.bf16.mxu0 0
    %2493 = vmatpush1.bf16.msra.mxu0 0
    %2494 = vmatprep.subr.bf16.mxu0 0
    %2495 = vmatpush1.bf16.msra.mxu0 0
    %2496 = vmatprep.subr.bf16.mxu0 0
    %2497 = vmatpush1.bf16.msra.mxu0 0
    %2498 = vmatprep.subr.bf16.mxu0 0
    %2499 = vmatpush1.bf16.msra.mxu0 0
    %2500 = vmatprep.subr.bf16.mxu0 0
    %2501 = vmatpush1.bf16.msra.mxu0 0
    %2502 = vmatprep.subr.bf16.mxu0 0
    %2503 = vmatpush1.bf16.msra.mxu0 0
    %2504 = vmatprep.subr.bf16.mxu0 0
    %2505 = vmatpush1.bf16.msra.mxu0 0
    %2506 = vmatprep.subr.bf16.mxu0 0
    %2507 = vmatpush1.bf16.msra.mxu0 0
    %2508 = vmatprep.subr.bf16.mxu0 0
    %2509 = vmatpush1.bf16.msra.mxu0 0
    %2510 = vmatprep.subr.bf16.mxu0 0
    %2511 = vmatpush1.bf16.msra.mxu0 0
    %2512 = vmatprep.subr.bf16.mxu0 0
    %2513 = vmatpush1.bf16.msra.mxu0 0
    %2514 = vmatprep.subr.bf16.mxu0 0
    %2515 = vmatpush1.bf16.msra.mxu0 0
    %2516 = vmatprep.subr.bf16.mxu0 0
    %2517 = vmatpush1.bf16.msra.mxu0 0
    %2518 = vmatprep.mubr.bf16.mxu0 0
    %2519 = vmatmul.mubr.bf16.gmra.mrb[0].mxu0 %v2481
    %v2520 = vpop.f32.mrb[0].mxu0
    %v2521 = vadd.f32 %v2371, %v2520
    %v2522 = vpop.f32.mrb[0].mxu0
    %v2523 = vpop.f32.mrb[0].mxu0
    %v2524 = vadd.f32 %v2372, %v2523
    %v2525 = vpop.f32.mrb[0].mxu0
    %2526 = vmatprep.mubr.bf16.mxu0 0
    %2527 = vmatmul.mubr.bf16.gmra.mrb[0].mxu0 %v2484
    %v2528 = vpop.f32.mrb[0].mxu0
    %v2529 = vadd.f32 %v2373, %v2528
    %v2530 = vpop.f32.mrb[0].mxu0
    %v2531 = vpop.f32.mrb[0].mxu0
    %v2532 = vadd.f32 %v2374, %v2531
    %v2533 = vpop.f32.mrb[0].mxu0
    %2534 = vdwg.mxu0
    %v2539 = vunpack.c.l.b16 %v2375
    %v2540 = vunpack.c.l.b16 %v2376
    %v2541 = vunpack.c.l.b16 %v2377
    %v2542 = vunpack.c.l.b16 %v2378
    %v2543 = vpack.c.b16 %v2540, %v2539
    %v2544 = vpack.c.b16 %v2542, %v2541
    %v2546 = vsel %vm522, %v2543, 0
    %v2549 = vsel %vm522, %v2544, 0
    %2551 = vmatprep.subr.bf16.mxu0 0
    %2552 = vmatpush1.bf16.msra.mxu0 %v2403
    %2553 = vmatprep.subr.bf16.mxu0 0
    %2554 = vmatpush1.bf16.msra.mxu0 %v2404
    %2555 = vmatprep.subr.bf16.mxu0 0
    %2556 = vmatpush1.bf16.msra.mxu0 0
    %2557 = vmatprep.subr.bf16.mxu0 0
    %2558 = vmatpush1.bf16.msra.mxu0 0
    %2559 = vmatprep.subr.bf16.mxu0 0
    %2560 = vmatpush1.bf16.msra.mxu0 0
    %2561 = vmatprep.subr.bf16.mxu0 0
    %2562 = vmatpush1.bf16.msra.mxu0 0
    %2563 = vmatprep.subr.bf16.mxu0 0
    %2564 = vmatpush1.bf16.msra.mxu0 0
    %2565 = vmatprep.subr.bf16.mxu0 0
    %2566 = vmatpush1.bf16.msra.mxu0 0
    %2567 = vmatprep.subr.bf16.mxu0 0
    %2568 = vmatpush1.bf16.msra.mxu0 0
    %2569 = vmatprep.subr.bf16.mxu0 0
    %2570 = vmatpush1.bf16.msra.mxu0 0
    %2571 = vmatprep.subr.bf16.mxu0 0
    %2572 = vmatpush1.bf16.msra.mxu0 0
    %2573 = vmatprep.subr.bf16.mxu0 0
    %2574 = vmatpush1.bf16.msra.mxu0 0
    %2575 = vmatprep.subr.bf16.mxu0 0
    %2576 = vmatpush1.bf16.msra.mxu0 0
    %2577 = vmatprep.subr.bf16.mxu0 0
    %2578 = vmatpush1.bf16.msra.mxu0 0
    %2579 = vmatprep.subr.bf16.mxu0 0
    %2580 = vmatpush1.bf16.msra.mxu0 0
    %2581 = vmatprep.subr.bf16.mxu0 0
    %2582 = vmatpush1.bf16.msra.mxu0 0
    %2583 = vmatprep.mubr.bf16.mxu0 0
    %2584 = vmatmul.mubr.bf16.gmra.mrb[0].mxu0 %v2546
    %v2585 = vpop.f32.mrb[0].mxu0
    %v2586 = vadd.f32 %v2379, %v2585
    %v2587 = vpop.f32.mrb[0].mxu0
    %v2588 = vpop.f32.mrb[0].mxu0
    %v2589 = vadd.f32 %v2380, %v2588
    %v2590 = vpop.f32.mrb[0].mxu0
    %2591 = vmatprep.mubr.bf16.mxu0 0
    %2592 = vmatmul.mubr.bf16.gmra.mrb[0].mxu0 %v2549
    %v2593 = vpop.f32.mrb[0].mxu0
    %v2594 = vadd.f32 %v2381, %v2593
    %v2595 = vpop.f32.mrb[0].mxu0
    %v2596 = vpop.f32.mrb[0].mxu0
    %v2597 = vadd.f32 %v2382, %v2596
    %v2598 = vpop.f32.mrb[0].mxu0
    %2599 = vdwg.mxu0
    %v2600 = vpack.c.bf16 %v2459, %v2456
    %v2601 = vpack.c.bf16 %v2467, %v2464
    %v2603 = vsel %vm522, %v2600, 0
    %v2606 = vsel %vm522, %v2601, 0
    %2608 = vmatprep.subr.bf16.mxu0 %v735
    %2609 = vmatpush1.bf16.msra.mxu0 %v734
    %2610 = vmatprep.subr.bf16.mxu0 %v739
    %2611 = vmatpush1.bf16.msra.mxu0 %v738
    %2612 = vmatprep.subr.bf16.mxu0 0
    %2613 = vmatpush1.bf16.msra.mxu0 0
    %2614 = vmatprep.subr.bf16.mxu0 0
    %2615 = vmatpush1.bf16.msra.mxu0 0
    %2616 = vmatprep.subr.bf16.mxu0 0
    %2617 = vmatpush1.bf16.msra.mxu0 0
    %2618 = vmatprep.subr.bf16.mxu0 0
    %2619 = vmatpush1.bf16.msra.mxu0 0
    %2620 = vmatprep.subr.bf16.mxu0 0
    %2621 = vmatpush1.bf16.msra.mxu0 0
    %2622 = vmatprep.subr.bf16.mxu0 0
    %2623 = vmatpush1.bf16.msra.mxu0 0
    %2624 = vmatprep.subr.bf16.mxu0 0
    %2625 = vmatpush1.bf16.msra.mxu0 0
    %2626 = vmatprep.subr.bf16.mxu0 0
    %2627 = vmatpush1.bf16.msra.mxu0 0
    %2628 = vmatprep.subr.bf16.mxu0 0
    %2629 = vmatpush1.bf16.msra.mxu0 0
    %2630 = vmatprep.subr.bf16.mxu0 0
    %2631 = vmatpush1.bf16.msra.mxu0 0
    %2632 = vmatprep.subr.bf16.mxu0 0
    %2633 = vmatpush1.bf16.msra.mxu0 0
    %2634 = vmatprep.subr.bf16.mxu0 0
    %2635 = vmatpush1.bf16.msra.mxu0 0
    %2636 = vmatprep.subr.bf16.mxu0 0
    %2637 = vmatpush1.bf16.msra.mxu0 0
    %2638 = vmatprep.subr.bf16.mxu0 0
    %2639 = vmatpush1.bf16.msra.mxu0 0
    %2640 = vmatprep.mubr.bf16.mxu0 0
    %2641 = vmatmul.mubr.bf16.gmra.mrb[0].mxu0 %v2603
    %v2642 = vpop.f32.mrb[0].mxu0
    %v2643 = vadd.f32 0.0, %v2642
    %v2644 = vpop.f32.mrb[0].mxu0
    %v2645 = vadd.f32 0.0, %v2644
    %v2646 = vpop.f32.mrb[0].mxu0
    %v2647 = vadd.f32 0.0, %v2646
    %v2648 = vpop.f32.mrb[0].mxu0
    %v2649 = vadd.f32 0.0, %v2648
    %2650 = vmatprep.mubr.bf16.mxu0 0
    %2651 = vmatmul.mubr.bf16.gmra.mrb[0].mxu0 %v2606
    %v2652 = vpop.f32.mrb[0].mxu0
    %v2653 = vadd.f32 0.0, %v2652
    %v2654 = vpop.f32.mrb[0].mxu0
    %v2655 = vadd.f32 0.0, %v2654
    %v2656 = vpop.f32.mrb[0].mxu0
    %v2657 = vadd.f32 0.0, %v2656
    %v2658 = vpop.f32.mrb[0].mxu0
    %v2659 = vadd.f32 0.0, %v2658
    %2660 = vdwg.mxu0
    %2661 = vmatprep.subr.bf16.mxu0 %v737
    %2662 = vmatpush1.bf16.msra.mxu0 %v736
    %2663 = vmatprep.subr.bf16.mxu0 %v741
    %2664 = vmatpush1.bf16.msra.mxu0 %v740
    %2665 = vmatprep.subr.bf16.mxu0 0
    %2666 = vmatpush1.bf16.msra.mxu0 0
    %2667 = vmatprep.subr.bf16.mxu0 0
    %2668 = vmatpush1.bf16.msra.mxu0 0
    %2669 = vmatprep.subr.bf16.mxu0 0
    %2670 = vmatpush1.bf16.msra.mxu0 0
    %2671 = vmatprep.subr.bf16.mxu0 0
    %2672 = vmatpush1.bf16.msra.mxu0 0
    %2673 = vmatprep.subr.bf16.mxu0 0
    %2674 = vmatpush1.bf16.msra.mxu0 0
    %2675 = vmatprep.subr.bf16.mxu0 0
    %2676 = vmatpush1.bf16.msra.mxu0 0
    %2677 = vmatprep.subr.bf16.mxu0 0
    %2678 = vmatpush1.bf16.msra.mxu0 0
    %2679 = vmatprep.subr.bf16.mxu0 0
    %2680 = vmatpush1.bf16.msra.mxu0 0
    %2681 = vmatprep.subr.bf16.mxu0 0
    %2682 = vmatpush1.bf16.msra.mxu0 0
    %2683 = vmatprep.subr.bf16.mxu0 0
    %2684 = vmatpush1.bf16.msra.mxu0 0
    %2685 = vmatprep.subr.bf16.mxu0 0
    %2686 = vmatpush1.bf16.msra.mxu0 0
    %2687 = vmatprep.subr.bf16.mxu0 0
    %2688 = vmatpush1.bf16.msra.mxu0 0
    %2689 = vmatprep.subr.bf16.mxu0 0
    %2690 = vmatpush1.bf16.msra.mxu0 0
    %2691 = vmatprep.subr.bf16.mxu0 0
    %2692 = vmatpush1.bf16.msra.mxu0 0
    %2693 = vmatprep.mubr.bf16.mxu0 0
    %2694 = vmatmul.mubr.bf16.gmra.mrb[0].mxu0 %v2603
    %v2695 = vpop.f32.mrb[0].mxu0
    %v2696 = vadd.f32 0.0, %v2695
    %v2697 = vpop.f32.mrb[0].mxu0
    %v2698 = vadd.f32 0.0, %v2697
    %v2699 = vpop.f32.mrb[0].mxu0
    %v2700 = vadd.f32 0.0, %v2699
    %v2701 = vpop.f32.mrb[0].mxu0
    %v2702 = vadd.f32 0.0, %v2701
    %2703 = vmatprep.mubr.bf16.mxu0 0
    %2704 = vmatmul.mubr.bf16.gmra.mrb[0].mxu0 %v2606
    %v2705 = vpop.f32.mrb[0].mxu0
    %v2706 = vadd.f32 0.0, %v2705
    %v2707 = vpop.f32.mrb[0].mxu0
    %v2708 = vadd.f32 0.0, %v2707
    %v2709 = vpop.f32.mrb[0].mxu0
    %v2710 = vadd.f32 0.0, %v2709
    %v2711 = vpop.f32.mrb[0].mxu0
    %v2712 = vadd.f32 0.0, %v2711
    %2713 = vdwg.mxu0
    %v2714 = vpack.c.bf16 %v2524, %v2521
    %v2715 = vpack.c.bf16 %v2532, %v2529
    %v2717 = vsel %vm522, %v2714, 0
    %v2720 = vsel %vm522, %v2715, 0
    %2722 = vmatprep.subr.bf16.mxu0 %v889
    %2723 = vmatpush1.bf16.msra.mxu0 %v888
    %2724 = vmatprep.subr.bf16.mxu0 %v893
    %2725 = vmatpush1.bf16.msra.mxu0 %v892
    %2726 = vmatprep.subr.bf16.mxu0 0
    %2727 = vmatpush1.bf16.msra.mxu0 0
    %2728 = vmatprep.subr.bf16.mxu0 0
    %2729 = vmatpush1.bf16.msra.mxu0 0
    %2730 = vmatprep.subr.bf16.mxu0 0
    %2731 = vmatpush1.bf16.msra.mxu0 0
    %2732 = vmatprep.subr.bf16.mxu0 0
    %2733 = vmatpush1.bf16.msra.mxu0 0
    %2734 = vmatprep.subr.bf16.mxu0 0
    %2735 = vmatpush1.bf16.msra.mxu0 0
    %2736 = vmatprep.subr.bf16.mxu0 0
    %2737 = vmatpush1.bf16.msra.mxu0 0
    %2738 = vmatprep.subr.bf16.mxu0 0
    %2739 = vmatpush1.bf16.msra.mxu0 0
    %2740 = vmatprep.subr.bf16.mxu0 0
    %2741 = vmatpush1.bf16.msra.mxu0 0
    %2742 = vmatprep.subr.bf16.mxu0 0
    %2743 = vmatpush1.bf16.msra.mxu0 0
    %2744 = vmatprep.subr.bf16.mxu0 0
    %2745 = vmatpush1.bf16.msra.mxu0 0
    %2746 = vmatprep.subr.bf16.mxu0 0
    %2747 = vmatpush1.bf16.msra.mxu0 0
    %2748 = vmatprep.subr.bf16.mxu0 0
    %2749 = vmatpush1.bf16.msra.mxu0 0
    %2750 = vmatprep.subr.bf16.mxu0 0
    %2751 = vmatpush1.bf16.msra.mxu0 0
    %2752 = vmatprep.subr.bf16.mxu0 0
    %2753 = vmatpush1.bf16.msra.mxu0 0
    %2754 = vmatprep.mubr.bf16.mxu0 0
    %2755 = vmatmul.mubr.bf16.gmra.mrb[0].mxu0 %v2717
    %v2756 = vpop.f32.mrb[0].mxu0
    %v2757 = vadd.f32 0.0, %v2756
    %v2758 = vpop.f32.mrb[0].mxu0
    %v2759 = vadd.f32 0.0, %v2758
    %v2760 = vpop.f32.mrb[0].mxu0
    %v2761 = vadd.f32 0.0, %v2760
    %v2762 = vpop.f32.mrb[0].mxu0
    %v2763 = vadd.f32 0.0, %v2762
    %2764 = vmatprep.mubr.bf16.mxu0 0
    %2765 = vmatmul.mubr.bf16.gmra.mrb[0].mxu0 %v2720
    %v2766 = vpop.f32.mrb[0].mxu0
    %v2767 = vadd.f32 0.0, %v2766
    %v2768 = vpop.f32.mrb[0].mxu0
    %v2769 = vadd.f32 0.0, %v2768
    %v2770 = vpop.f32.mrb[0].mxu0
    %v2771 = vadd.f32 0.0, %v2770
    %v2772 = vpop.f32.mrb[0].mxu0
    %v2773 = vadd.f32 0.0, %v2772
    %2774 = vdwg.mxu0
    %2775 = vmatprep.subr.bf16.mxu0 %v891
    %2776 = vmatpush1.bf16.msra.mxu0 %v890
    %2777 = vmatprep.subr.bf16.mxu0 %v895
    %2778 = vmatpush1.bf16.msra.mxu0 %v894
    %2779 = vmatprep.subr.bf16.mxu0 0
    %2780 = vmatpush1.bf16.msra.mxu0 0
    %2781 = vmatprep.subr.bf16.mxu0 0
    %2782 = vmatpush1.bf16.msra.mxu0 0
    %2783 = vmatprep.subr.bf16.mxu0 0
    %2784 = vmatpush1.bf16.msra.mxu0 0
    %2785 = vmatprep.subr.bf16.mxu0 0
    %2786 = vmatpush1.bf16.msra.mxu0 0
    %2787 = vmatprep.subr.bf16.mxu0 0
    %2788 = vmatpush1.bf16.msra.mxu0 0
    %2789 = vmatprep.subr.bf16.mxu0 0
    %2790 = vmatpush1.bf16.msra.mxu0 0
    %2791 = vmatprep.subr.bf16.mxu0 0
    %2792 = vmatpush1.bf16.msra.mxu0 0
    %2793 = vmatprep.subr.bf16.mxu0 0
    %2794 = vmatpush1.bf16.msra.mxu0 0
    %2795 = vmatprep.subr.bf16.mxu0 0
    %2796 = vmatpush1.bf16.msra.mxu0 0
    %2797 = vmatprep.subr.bf16.mxu0 0
    %2798 = vmatpush1.bf16.msra.mxu0 0
    %2799 = vmatprep.subr.bf16.mxu0 0
    %2800 = vmatpush1.bf16.msra.mxu0 0
    %2801 = vmatprep.subr.bf16.mxu0 0
    %2802 = vmatpush1.bf16.msra.mxu0 0
    %2803 = vmatprep.subr.bf16.mxu0 0
    %2804 = vmatpush1.bf16.msra.mxu0 0
    %2805 = vmatprep.subr.bf16.mxu0 0
    %2806 = vmatpush1.bf16.msra.mxu0 0
    %2807 = vmatprep.mubr.bf16.mxu0 0
    %2808 = vmatmul.mubr.bf16.gmra.mrb[0].mxu0 %v2717
    %v2809 = vpop.f32.mrb[0].mxu0
    %v2810 = vadd.f32 0.0, %v2809
    %v2811 = vpop.f32.mrb[0].mxu0
    %v2812 = vadd.f32 0.0, %v2811
    %v2813 = vpop.f32.mrb[0].mxu0
    %v2814 = vadd.f32 0.0, %v2813
    %v2815 = vpop.f32.mrb[0].mxu0
    %v2816 = vadd.f32 0.0, %v2815
    %2817 = vmatprep.mubr.bf16.mxu0 0
    %2818 = vmatmul.mubr.bf16.gmra.mrb[0].mxu0 %v2720
    %v2819 = vpop.f32.mrb[0].mxu0
    %v2820 = vadd.f32 0.0, %v2819
    %v2821 = vpop.f32.mrb[0].mxu0
    %v2822 = vadd.f32 0.0, %v2821
    %v2823 = vpop.f32.mrb[0].mxu0
    %v2824 = vadd.f32 0.0, %v2823
    %v2825 = vpop.f32.mrb[0].mxu0
    %v2826 = vadd.f32 0.0, %v2825
    %2827 = vdwg.mxu0
    %v2828 = vmul.f32 %v2643, %v2757
    %v2829 = vmul.f32 %v2645, %v2759
    %v2830 = vmul.f32 %v2696, %v2810
    %v2831 = vmul.f32 %v2698, %v2812
    %v2832 = vmul.f32 %v2647, %v2761
    %v2833 = vmul.f32 %v2649, %v2763
    %v2834 = vmul.f32 %v2700, %v2814
    %v2835 = vmul.f32 %v2702, %v2816
    %v2836 = vmul.f32 %v2653, %v2767
    %v2837 = vmul.f32 %v2655, %v2769
    %v2838 = vmul.f32 %v2706, %v2820
    %v2839 = vmul.f32 %v2708, %v2822
    %v2840 = vmul.f32 %v2657, %v2771
    %v2841 = vmul.f32 %v2659, %v2773
    %v2842 = vmul.f32 %v2710, %v2824
    %v2843 = vmul.f32 %v2712, %v2826
    %v2844 = vpack.c.bf16 %v2832, %v2828
    %v2845 = vpack.c.bf16 %v2833, %v2829
    %v2846 = vpack.c.bf16 %v2834, %v2830
    %v2847 = vpack.c.bf16 %v2835, %v2831
    %v2848 = vpack.c.bf16 %v2840, %v2836
    %v2849 = vpack.c.bf16 %v2841, %v2837
    %v2850 = vpack.c.bf16 %v2842, %v2838
    %v2851 = vpack.c.bf16 %v2843, %v2839
    %2852 = vmatprep.subr.bf16.mxu0 0
    %2853 = vmatpush1.bf16.msra.mxu0 %v1168
    %2854 = vmatprep.subr.bf16.mxu0 0
    %2855 = vmatpush1.bf16.msra.mxu0 %v1169
    %2856 = vmatprep.subr.bf16.mxu0 0
    %2857 = vmatpush1.bf16.msra.mxu0 %v1170
    %2858 = vmatprep.subr.bf16.mxu0 0
    %2859 = vmatpush1.bf16.msra.mxu0 %v1171
    %2860 = vmatprep.subr.bf16.mxu0 0
    %2861 = vmatpush1.bf16.msra.mxu0 %v1172
    %2862 = vmatprep.subr.bf16.mxu0 0
    %2863 = vmatpush1.bf16.msra.mxu0 %v1173
    %2864 = vmatprep.subr.bf16.mxu0 0
    %2865 = vmatpush1.bf16.msra.mxu0 %v1174
    %2866 = vmatprep.subr.bf16.mxu0 0
    %2867 = vmatpush1.bf16.msra.mxu0 %v1175
    %2868 = vmatprep.subr.bf16.mxu0 0
    %2869 = vmatpush1.bf16.msra.mxu0 %v1176
    %2870 = vmatprep.subr.bf16.mxu0 0
    %2871 = vmatpush1.bf16.msra.mxu0 %v1177
    %2872 = vmatprep.subr.bf16.mxu0 0
    %2873 = vmatpush1.bf16.msra.mxu0 %v1178
    %2874 = vmatprep.subr.bf16.mxu0 0
    %2875 = vmatpush1.bf16.msra.mxu0 %v1179
    %2876 = vmatprep.subr.bf16.mxu0 0
    %2877 = vmatpush1.bf16.msra.mxu0 %v1180
    %2878 = vmatprep.subr.bf16.mxu0 0
    %2879 = vmatpush1.bf16.msra.mxu0 %v1181
    %2880 = vmatprep.subr.bf16.mxu0 0
    %2881 = vmatpush1.bf16.msra.mxu0 %v1182
    %2882 = vmatprep.subr.bf16.mxu0 0
    %2883 = vmatpush1.bf16.msra.mxu0 %v1183
    %2884 = vmatprep.mubr.bf16.mxu0 %v2845
    %2885 = vmatmul.mubr.bf16.gmra.mrb[0].mxu0 %v2844
    %v2886 = vpop.f32.mrb[0].mxu0
    %v2887 = vadd.f32 0.0, %v2886
    %v2888 = vpop.f32.mrb[0].mxu0
    %v2889 = vpop.f32.mrb[0].mxu0
    %v2890 = vadd.f32 0.0, %v2889
    %v2891 = vpop.f32.mrb[0].mxu0
    %2892 = vmatprep.mubr.bf16.mxu0 %v2849
    %2893 = vmatmul.mubr.bf16.gmra.mrb[0].mxu0 %v2848
    %v2894 = vpop.f32.mrb[0].mxu0
    %v2895 = vadd.f32 0.0, %v2894
    %v2896 = vpop.f32.mrb[0].mxu0
    %v2897 = vpop.f32.mrb[0].mxu0
    %v2898 = vadd.f32 0.0, %v2897
    %v2899 = vpop.f32.mrb[0].mxu0
    %2900 = vdwg.mxu0
    %2901 = vmatprep.subr.bf16.mxu0 0
    %2902 = vmatpush1.bf16.msra.mxu0 %v1184
    %2903 = vmatprep.subr.bf16.mxu0 0
    %2904 = vmatpush1.bf16.msra.mxu0 %v1185
    %2905 = vmatprep.subr.bf16.mxu0 0
    %2906 = vmatpush1.bf16.msra.mxu0 %v1186
    %2907 = vmatprep.subr.bf16.mxu0 0
    %2908 = vmatpush1.bf16.msra.mxu0 %v1187
    %2909 = vmatprep.subr.bf16.mxu0 0
    %2910 = vmatpush1.bf16.msra.mxu0 %v1188
    %2911 = vmatprep.subr.bf16.mxu0 0
    %2912 = vmatpush1.bf16.msra.mxu0 %v1189
    %2913 = vmatprep.subr.bf16.mxu0 0
    %2914 = vmatpush1.bf16.msra.mxu0 %v1190
    %2915 = vmatprep.subr.bf16.mxu0 0
    %2916 = vmatpush1.bf16.msra.mxu0 %v1191
    %2917 = vmatprep.subr.bf16.mxu0 0
    %2918 = vmatpush1.bf16.msra.mxu0 %v1192
    %2919 = vmatprep.subr.bf16.mxu0 0
    %2920 = vmatpush1.bf16.msra.mxu0 %v1193
    %2921 = vmatprep.subr.bf16.mxu0 0
    %2922 = vmatpush1.bf16.msra.mxu0 %v1194
    %2923 = vmatprep.subr.bf16.mxu0 0
    %2924 = vmatpush1.bf16.msra.mxu0 %v1195
    %2925 = vmatprep.subr.bf16.mxu0 0
    %2926 = vmatpush1.bf16.msra.mxu0 %v1196
    %2927 = vmatprep.subr.bf16.mxu0 0
    %2928 = vmatpush1.bf16.msra.mxu0 %v1197
    %2929 = vmatprep.subr.bf16.mxu0 0
    %2930 = vmatpush1.bf16.msra.mxu0 %v1198
    %2931 = vmatprep.subr.bf16.mxu0 0
    %2932 = vmatpush1.bf16.msra.mxu0 %v1199
    %2933 = vmatprep.mubr.bf16.mxu0 %v2847
    %2934 = vmatmul.mubr.bf16.gmra.mrb[0].mxu0 %v2846
    %v2935 = vpop.f32.mrb[0].mxu0
    %v2936 = vadd.f32 %v2887, %v2935
    %v2937 = vpop.f32.mrb[0].mxu0
    %v2938 = vpop.f32.mrb[0].mxu0
    %v2939 = vadd.f32 %v2890, %v2938
    %v2940 = vpop.f32.mrb[0].mxu0
    %2941 = vmatprep.mubr.bf16.mxu0 %v2851
    %2942 = vmatmul.mubr.bf16.gmra.mrb[0].mxu0 %v2850
    %v2943 = vpop.f32.mrb[0].mxu0
    %v2944 = vadd.f32 %v2895, %v2943
    %v2945 = vpop.f32.mrb[0].mxu0
    %v2946 = vpop.f32.mrb[0].mxu0
    %v2947 = vadd.f32 %v2898, %v2946
    %v2948 = vpop.f32.mrb[0].mxu0
    %2949 = vdwg.mxu0
    %v2950 = vsel %vm522, %v2936, 0.0
    %v2951 = vsel %vm522, %v2939, 0.0
    %v2952 = vadd.f32 %v2950, %v2951
    %v2953 = vsel %vm522, %v2944, 0.0
    %v2954 = vadd.f32 %v2952, %v2953
    %v2955 = vsel %vm522, %v2947, 0.0
    %v2956 = vadd.f32 %v2954, %v2955
    %v2957 = vrot.slane %v2956, 4
    %v2958 = vadd.f32 %v2956, %v2957
    %v2959 = vrot.slane %v2958, 2
    %v2960 = vadd.f32 %v2958, %v2959
    %v2961 = vrot.slane %v2960, 1
    %v2962 = vadd.f32 %v2960, %v2961
    %v2963 = vmul.f32 %v2962, 0.03125
    %v2964 = vsel %vm387, %v2963, -1e+30
    %v2965 = vsel %vm1345, %v2964, -inf
    %2966 = vmax.xlane.f32.xlu0 %v2965
    %v2967 = vpop.xlane.xlu0 %2966
    %vm2968 = vcmp.ge.f32.partialorder %v2964, %v2967
    %v2969 = vsel %vm2968, -1e+30, %v2964
    %v2970 = vsel %vm1345, %v2969, -inf
    %2971 = vmax.xlane.f32.xlu0 %v2970
    %v2972 = vpop.xlane.xlu0 %2971
    %vm2973 = vcmp.ge.f32.partialorder %v2964, %v2972
    %v2974 = vsub.f32 %v2964, %v2967
    %v2975 = vmul.f32 %v2974, 1.442695
    %v2976 = vpow.pop %v2975
    %v2977 = vsel %vm2973, %v2976, 0.0
    %v2978 = vsel %vm1345, %v2977, 0.0
    %2979 = vadd.xlane.f32.xlu0 %v2978
    %v2980 = vpop.xlane.xlu0 %2979
    %v2981 = vrcp.pop %v2980
    %v2982 = vmul.f32 %v2977, %v2981
    %v2983 = vsel %vm1345, %v2982, 0.0
    %v2984 = vrot.slane %v2983, 4
    %v2985 = vadd.f32 %v2983, %v2984
    %v2986 = vrot.slane %v2985, 2
    %v2987 = vadd.f32 %v2985, %v2986
    %v2988 = vrot.slane %v2987, 1
    %v2989 = vadd.f32 %v2987, %v2988
    %v2990 = vpack.c.bf16 %v2589, %v2586
    %v2991 = vpack.c.bf16 %v2597, %v2594
    %v2993 = vsel %vm522, %v2990, 0
    %v2996 = vsel %vm522, %v2991, 0
    %2998 = vmatprep.subr.bf16.mxu0 %v1398
    %2999 = vmatpush1.bf16.msra.mxu0 %v1397
    %3000 = vmatprep.subr.bf16.mxu0 %v1402
    %3001 = vmatpush1.bf16.msra.mxu0 %v1401
    %3002 = vmatprep.subr.bf16.mxu0 0
    %3003 = vmatpush1.bf16.msra.mxu0 0
    %3004 = vmatprep.subr.bf16.mxu0 0
    %3005 = vmatpush1.bf16.msra.mxu0 0
    %3006 = vmatprep.subr.bf16.mxu0 0
    %3007 = vmatpush1.bf16.msra.mxu0 0
    %3008 = vmatprep.subr.bf16.mxu0 0
    %3009 = vmatpush1.bf16.msra.mxu0 0
    %3010 = vmatprep.subr.bf16.mxu0 0
    %3011 = vmatpush1.bf16.msra.mxu0 0
    %3012 = vmatprep.subr.bf16.mxu0 0
    %3013 = vmatpush1.bf16.msra.mxu0 0
    %3014 = vmatprep.subr.bf16.mxu0 0
    %3015 = vmatpush1.bf16.msra.mxu0 0
    %3016 = vmatprep.subr.bf16.mxu0 0
    %3017 = vmatpush1.bf16.msra.mxu0 0
    %3018 = vmatprep.subr.bf16.mxu0 0
    %3019 = vmatpush1.bf16.msra.mxu0 0
    %3020 = vmatprep.subr.bf16.mxu0 0
    %3021 = vmatpush1.bf16.msra.mxu0 0
    %3022 = vmatprep.subr.bf16.mxu0 0
    %3023 = vmatpush1.bf16.msra.mxu0 0
    %3024 = vmatprep.subr.bf16.mxu0 0
    %3025 = vmatpush1.bf16.msra.mxu0 0
    %3026 = vmatprep.subr.bf16.mxu0 0
    %3027 = vmatpush1.bf16.msra.mxu0 0
    %3028 = vmatprep.subr.bf16.mxu0 0
    %3029 = vmatpush1.bf16.msra.mxu0 0
    %3030 = vmatprep.mubr.bf16.mxu0 0
    %3031 = vmatmul.mubr.bf16.gmra.mrb[0].mxu0 %v2993
    %v3032 = vpop.f32.mrb[0].mxu0
    %v3033 = vadd.f32 0.0, %v3032
    %v3034 = vpop.f32.mrb[0].mxu0
    %v3035 = vadd.f32 0.0, %v3034
    %v3036 = vpop.f32.mrb[0].mxu0
    %v3037 = vadd.f32 0.0, %v3036
    %v3038 = vpop.f32.mrb[0].mxu0
    %v3039 = vadd.f32 0.0, %v3038
    %3040 = vmatprep.mubr.bf16.mxu0 0
    %3041 = vmatmul.mubr.bf16.gmra.mrb[0].mxu0 %v2996
    %v3042 = vpop.f32.mrb[0].mxu0
    %v3043 = vadd.f32 0.0, %v3042
    %v3044 = vpop.f32.mrb[0].mxu0
    %v3045 = vadd.f32 0.0, %v3044
    %v3046 = vpop.f32.mrb[0].mxu0
    %v3047 = vadd.f32 0.0, %v3046
    %v3048 = vpop.f32.mrb[0].mxu0
    %v3049 = vadd.f32 0.0, %v3048
    %3050 = vdwg.mxu0
    %3051 = vmatprep.subr.bf16.mxu0 %v1400
    %3052 = vmatpush1.bf16.msra.mxu0 %v1399
    %3053 = vmatprep.subr.bf16.mxu0 %v1404
    %3054 = vmatpush1.bf16.msra.mxu0 %v1403
    %3055 = vmatprep.subr.bf16.mxu0 0
    %3056 = vmatpush1.bf16.msra.mxu0 0
    %3057 = vmatprep.subr.bf16.mxu0 0
    %3058 = vmatpush1.bf16.msra.mxu0 0
    %3059 = vmatprep.subr.bf16.mxu0 0
    %3060 = vmatpush1.bf16.msra.mxu0 0
    %3061 = vmatprep.subr.bf16.mxu0 0
    %3062 = vmatpush1.bf16.msra.mxu0 0
    %3063 = vmatprep.subr.bf16.mxu0 0
    %3064 = vmatpush1.bf16.msra.mxu0 0
    %3065 = vmatprep.subr.bf16.mxu0 0
    %3066 = vmatpush1.bf16.msra.mxu0 0
    %3067 = vmatprep.subr.bf16.mxu0 0
    %3068 = vmatpush1.bf16.msra.mxu0 0
    %3069 = vmatprep.subr.bf16.mxu0 0
    %3070 = vmatpush1.bf16.msra.mxu0 0
    %3071 = vmatprep.subr.bf16.mxu0 0
    %3072 = vmatpush1.bf16.msra.mxu0 0
    %3073 = vmatprep.subr.bf16.mxu0 0
    %3074 = vmatpush1.bf16.msra.mxu0 0
    %3075 = vmatprep.subr.bf16.mxu0 0
    %3076 = vmatpush1.bf16.msra.mxu0 0
    %3077 = vmatprep.subr.bf16.mxu0 0
    %3078 = vmatpush1.bf16.msra.mxu0 0
    %3079 = vmatprep.subr.bf16.mxu0 0
    %3080 = vmatpush1.bf16.msra.mxu0 0
    %3081 = vmatprep.subr.bf16.mxu0 0
    %3082 = vmatpush1.bf16.msra.mxu0 0
    %3083 = vmatprep.mubr.bf16.mxu0 0
    %3084 = vmatmul.mubr.bf16.gmra.mrb[0].mxu0 %v2993
    %v3085 = vpop.f32.mrb[0].mxu0
    %v3086 = vadd.f32 0.0, %v3085
    %v3087 = vpop.f32.mrb[0].mxu0
    %v3088 = vadd.f32 0.0, %v3087
    %v3089 = vpop.f32.mrb[0].mxu0
    %v3090 = vadd.f32 0.0, %v3089
    %v3091 = vpop.f32.mrb[0].mxu0
    %v3092 = vadd.f32 0.0, %v3091
    %3093 = vmatprep.mubr.bf16.mxu0 0
    %3094 = vmatmul.mubr.bf16.gmra.mrb[0].mxu0 %v2996
    %v3095 = vpop.f32.mrb[0].mxu0
    %v3096 = vadd.f32 0.0, %v3095
    %v3097 = vpop.f32.mrb[0].mxu0
    %v3098 = vadd.f32 0.0, %v3097
    %v3099 = vpop.f32.mrb[0].mxu0
    %v3100 = vadd.f32 0.0, %v3099
    %v3101 = vpop.f32.mrb[0].mxu0
    %v3102 = vadd.f32 0.0, %v3101
    %3103 = vdwg.mxu0
    %v3104 = vpack.c.bf16 %v2989, %v2989
    %v3106 = vsel %vm522, %v3104, 0
    %3108 = vmatprep.subr.bf16.mxu0 %v1551
    %3109 = vmatpush1.bf16.msra.mxu0 %v1550
    %3110 = vmatprep.subr.bf16.mxu0 %v1555
    %3111 = vmatpush1.bf16.msra.mxu0 %v1554
    %3112 = vmatprep.subr.bf16.mxu0 0
    %3113 = vmatpush1.bf16.msra.mxu0 0
    %3114 = vmatprep.subr.bf16.mxu0 0
    %3115 = vmatpush1.bf16.msra.mxu0 0
    %3116 = vmatprep.subr.bf16.mxu0 0
    %3117 = vmatpush1.bf16.msra.mxu0 0
    %3118 = vmatprep.subr.bf16.mxu0 0
    %3119 = vmatpush1.bf16.msra.mxu0 0
    %3120 = vmatprep.subr.bf16.mxu0 0
    %3121 = vmatpush1.bf16.msra.mxu0 0
    %3122 = vmatprep.subr.bf16.mxu0 0
    %3123 = vmatpush1.bf16.msra.mxu0 0
    %3124 = vmatprep.subr.bf16.mxu0 0
    %3125 = vmatpush1.bf16.msra.mxu0 0
    %3126 = vmatprep.subr.bf16.mxu0 0
    %3127 = vmatpush1.bf16.msra.mxu0 0
    %3128 = vmatprep.subr.bf16.mxu0 0
    %3129 = vmatpush1.bf16.msra.mxu0 0
    %3130 = vmatprep.subr.bf16.mxu0 0
    %3131 = vmatpush1.bf16.msra.mxu0 0
    %3132 = vmatprep.subr.bf16.mxu0 0
    %3133 = vmatpush1.bf16.msra.mxu0 0
    %3134 = vmatprep.subr.bf16.mxu0 0
    %3135 = vmatpush1.bf16.msra.mxu0 0
    %3136 = vmatprep.subr.bf16.mxu0 0
    %3137 = vmatpush1.bf16.msra.mxu0 0
    %3138 = vmatprep.subr.bf16.mxu0 0
    %3139 = vmatpush1.bf16.msra.mxu0 0
    %3140 = vmatprep.mubr.bf16.mxu0 0
    %3141 = vmatmul.mubr.bf16.gmra.mrb[0].mxu0 %v3106
    %v3142 = vpop.f32.mrb[0].mxu0
    %v3143 = vadd.f32 0.0, %v3142
    %v3144 = vpop.f32.mrb[0].mxu0
    %v3145 = vadd.f32 0.0, %v3144
    %v3146 = vpop.f32.mrb[0].mxu0
    %v3147 = vpop.f32.mrb[0].mxu0
    %3148 = vdwg.mxu0
    %3149 = vmatprep.subr.bf16.mxu0 %v1553
    %3150 = vmatpush1.bf16.msra.mxu0 %v1552
    %3151 = vmatprep.subr.bf16.mxu0 %v1557
    %3152 = vmatpush1.bf16.msra.mxu0 %v1556
    %3153 = vmatprep.subr.bf16.mxu0 0
    %3154 = vmatpush1.bf16.msra.mxu0 0
    %3155 = vmatprep.subr.bf16.mxu0 0
    %3156 = vmatpush1.bf16.msra.mxu0 0
    %3157 = vmatprep.subr.bf16.mxu0 0
    %3158 = vmatpush1.bf16.msra.mxu0 0
    %3159 = vmatprep.subr.bf16.mxu0 0
    %3160 = vmatpush1.bf16.msra.mxu0 0
    %3161 = vmatprep.subr.bf16.mxu0 0
    %3162 = vmatpush1.bf16.msra.mxu0 0
    %3163 = vmatprep.subr.bf16.mxu0 0
    %3164 = vmatpush1.bf16.msra.mxu0 0
    %3165 = vmatprep.subr.bf16.mxu0 0
    %3166 = vmatpush1.bf16.msra.mxu0 0
    %3167 = vmatprep.subr.bf16.mxu0 0
    %3168 = vmatpush1.bf16.msra.mxu0 0
    %3169 = vmatprep.subr.bf16.mxu0 0
    %3170 = vmatpush1.bf16.msra.mxu0 0
    %3171 = vmatprep.subr.bf16.mxu0 0
    %3172 = vmatpush1.bf16.msra.mxu0 0
    %3173 = vmatprep.subr.bf16.mxu0 0
    %3174 = vmatpush1.bf16.msra.mxu0 0
    %3175 = vmatprep.subr.bf16.mxu0 0
    %3176 = vmatpush1.bf16.msra.mxu0 0
    %3177 = vmatprep.subr.bf16.mxu0 0
    %3178 = vmatpush1.bf16.msra.mxu0 0
    %3179 = vmatprep.subr.bf16.mxu0 0
    %3180 = vmatpush1.bf16.msra.mxu0 0
    %3181 = vmatprep.mubr.bf16.mxu0 0
    %3182 = vmatmul.mubr.bf16.gmra.mrb[0].mxu0 %v3106
    %v3183 = vpop.f32.mrb[0].mxu0
    %v3184 = vadd.f32 0.0, %v3183
    %v3185 = vpop.f32.mrb[0].mxu0
    %v3186 = vadd.f32 0.0, %v3185
    %v3187 = vpop.f32.mrb[0].mxu0
    %v3188 = vpop.f32.mrb[0].mxu0
    %3189 = vdwg.mxu0
    %v3190 = vlaneseq
    %v3191 = vshrl.u32 %v3190, 7
    %v3192 = vsub.s32 0, %v3191
    %v3193 = vrot.slane %v3143, %v3192
    %v3194 = vlaneseq
    %v3195 = vshrl.u32 %v3194, 7
    %v3196 = vsub.s32 0, %v3195
    %v3197 = vrot.slane %v3145, %v3196
    %v3198 = vlaneseq
    %v3199 = vshrl.u32 %v3198, 7
    %v3200 = vsub.s32 0, %v3199
    %v3201 = vrot.slane %v3184, %v3200
    %v3202 = vlaneseq
    %v3203 = vshrl.u32 %v3202, 7
    %v3204 = vsub.s32 0, %v3203
    %v3205 = vrot.slane %v3186, %v3204
    %v3206 = vmul.f32 %v3193, %v3033
    %v3207 = vmul.f32 %v3197, %v3035
    %v3208 = vmul.f32 %v3201, %v3086
    %v3209 = vmul.f32 %v3205, %v3088
    %v3210 = vmul.f32 %v3193, %v3037
    %v3211 = vmul.f32 %v3197, %v3039
    %v3212 = vmul.f32 %v3201, %v3090
    %v3213 = vmul.f32 %v3205, %v3092
    %v3214 = vmul.f32 %v3193, %v3043
    %v3215 = vmul.f32 %v3197, %v3045
    %v3216 = vmul.f32 %v3201, %v3096
    %v3217 = vmul.f32 %v3205, %v3098
    %v3218 = vmul.f32 %v3193, %v3047
    %v3219 = vmul.f32 %v3197, %v3049
    %v3220 = vmul.f32 %v3201, %v3100
    %v3221 = vmul.f32 %v3205, %v3102
    %v3222 = vpack.c.bf16 %v3210, %v3206
    %v3223 = vpack.c.bf16 %v3211, %v3207
    %v3224 = vpack.c.bf16 %v3212, %v3208
    %v3225 = vpack.c.bf16 %v3213, %v3209
    %v3226 = vpack.c.bf16 %v3218, %v3214
    %v3227 = vpack.c.bf16 %v3219, %v3215
    %v3228 = vpack.c.bf16 %v3220, %v3216
    %v3229 = vpack.c.bf16 %v3221, %v3217
    %3230 = vmatprep.subr.bf16.mxu0 0
    %3231 = vmatpush1.bf16.msra.mxu0 %v1819
    %3232 = vmatprep.subr.bf16.mxu0 0
    %3233 = vmatpush1.bf16.msra.mxu0 %v1820
    %3234 = vmatprep.subr.bf16.mxu0 0
    %3235 = vmatpush1.bf16.msra.mxu0 %v1821
    %3236 = vmatprep.subr.bf16.mxu0 0
    %3237 = vmatpush1.bf16.msra.mxu0 %v1822
    %3238 = vmatprep.subr.bf16.mxu0 0
    %3239 = vmatpush1.bf16.msra.mxu0 %v1823
    %3240 = vmatprep.subr.bf16.mxu0 0
    %3241 = vmatpush1.bf16.msra.mxu0 %v1824
    %3242 = vmatprep.subr.bf16.mxu0 0
    %3243 = vmatpush1.bf16.msra.mxu0 %v1825
    %3244 = vmatprep.subr.bf16.mxu0 0
    %3245 = vmatpush1.bf16.msra.mxu0 %v1826
    %3246 = vmatprep.subr.bf16.mxu0 0
    %3247 = vmatpush1.bf16.msra.mxu0 %v1827
    %3248 = vmatprep.subr.bf16.mxu0 0
    %3249 = vmatpush1.bf16.msra.mxu0 %v1828
    %3250 = vmatprep.subr.bf16.mxu0 0
    %3251 = vmatpush1.bf16.msra.mxu0 %v1829
    %3252 = vmatprep.subr.bf16.mxu0 0
    %3253 = vmatpush1.bf16.msra.mxu0 %v1830
    %3254 = vmatprep.subr.bf16.mxu0 0
    %3255 = vmatpush1.bf16.msra.mxu0 %v1831
    %3256 = vmatprep.subr.bf16.mxu0 0
    %3257 = vmatpush1.bf16.msra.mxu0 %v1832
    %3258 = vmatprep.subr.bf16.mxu0 0
    %3259 = vmatpush1.bf16.msra.mxu0 %v1833
    %3260 = vmatprep.subr.bf16.mxu0 0
    %3261 = vmatpush1.bf16.msra.mxu0 %v1834
    %3262 = vmatprep.mubr.bf16.mxu0 %v3223
    %3263 = vmatmul.mubr.bf16.gmra.mrb[0].mxu0 %v3222
    %v3264 = vpop.f32.mrb[0].mxu0
    %v3265 = vadd.f32 0.0, %v3264
    %v3266 = vpop.f32.mrb[0].mxu0
    %v3267 = vpop.f32.mrb[0].mxu0
    %v3268 = vadd.f32 0.0, %v3267
    %v3269 = vpop.f32.mrb[0].mxu0
    %3270 = vmatprep.mubr.bf16.mxu0 %v3227
    %3271 = vmatmul.mubr.bf16.gmra.mrb[0].mxu0 %v3226
    %v3272 = vpop.f32.mrb[0].mxu0
    %v3273 = vadd.f32 0.0, %v3272
    %v3274 = vpop.f32.mrb[0].mxu0
    %v3275 = vpop.f32.mrb[0].mxu0
    %v3276 = vadd.f32 0.0, %v3275
    %v3277 = vpop.f32.mrb[0].mxu0
    %3278 = vdwg.mxu0
    %3279 = vmatprep.subr.bf16.mxu0 0
    %3280 = vmatpush1.bf16.msra.mxu0 %v1835
    %3281 = vmatprep.subr.bf16.mxu0 0
    %3282 = vmatpush1.bf16.msra.mxu0 %v1836
    %3283 = vmatprep.subr.bf16.mxu0 0
    %3284 = vmatpush1.bf16.msra.mxu0 %v1837
    %3285 = vmatprep.subr.bf16.mxu0 0
    %3286 = vmatpush1.bf16.msra.mxu0 %v1838
    %3287 = vmatprep.subr.bf16.mxu0 0
    %3288 = vmatpush1.bf16.msra.mxu0 %v1839
    %3289 = vmatprep.subr.bf16.mxu0 0
    %3290 = vmatpush1.bf16.msra.mxu0 %v1840
    %3291 = vmatprep.subr.bf16.mxu0 0
    %3292 = vmatpush1.bf16.msra.mxu0 %v1841
    %3293 = vmatprep.subr.bf16.mxu0 0
    %3294 = vmatpush1.bf16.msra.mxu0 %v1842
    %3295 = vmatprep.subr.bf16.mxu0 0
    %3296 = vmatpush1.bf16.msra.mxu0 %v1843
    %3297 = vmatprep.subr.bf16.mxu0 0
    %3298 = vmatpush1.bf16.msra.mxu0 %v1844
    %3299 = vmatprep.subr.bf16.mxu0 0
    %3300 = vmatpush1.bf16.msra.mxu0 %v1845
    %3301 = vmatprep.subr.bf16.mxu0 0
    %3302 = vmatpush1.bf16.msra.mxu0 %v1846
    %3303 = vmatprep.subr.bf16.mxu0 0
    %3304 = vmatpush1.bf16.msra.mxu0 %v1847
    %3305 = vmatprep.subr.bf16.mxu0 0
    %3306 = vmatpush1.bf16.msra.mxu0 %v1848
    %3307 = vmatprep.subr.bf16.mxu0 0
    %3308 = vmatpush1.bf16.msra.mxu0 %v1849
    %3309 = vmatprep.subr.bf16.mxu0 0
    %3310 = vmatpush1.bf16.msra.mxu0 %v1850
    %3311 = vmatprep.mubr.bf16.mxu0 %v3225
    %3312 = vmatmul.mubr.bf16.gmra.mrb[0].mxu0 %v3224
    %v3313 = vpop.f32.mrb[0].mxu0
    %v3314 = vadd.f32 %v3265, %v3313
    %v3315 = vpop.f32.mrb[0].mxu0
    %v3316 = vpop.f32.mrb[0].mxu0
    %v3317 = vadd.f32 %v3268, %v3316
    %v3318 = vpop.f32.mrb[0].mxu0
    %3319 = vmatprep.mubr.bf16.mxu0 %v3229
    %3320 = vmatmul.mubr.bf16.gmra.mrb[0].mxu0 %v3228
    %v3321 = vpop.f32.mrb[0].mxu0
    %v3322 = vadd.f32 %v3273, %v3321
    %v3323 = vpop.f32.mrb[0].mxu0
    %v3324 = vpop.f32.mrb[0].mxu0
    %v3325 = vadd.f32 %v3276, %v3324
    %v3326 = vpop.f32.mrb[0].mxu0
    %3327 = vdwg.mxu0
    %v3328 = vpack.c.bf16 %v3317, %v3314
    %v3329 = vpack.c.bf16 %v3325, %v3322
    %v3334 = vunpack.c.l.b16 %v2383
    %v3335 = vunpack.c.l.b16 %v2384
    %v3336 = vunpack.c.l.b16 %v2385
    %v3337 = vunpack.c.l.b16 %v2386
    %v3338 = vpack.c.b16 %v3335, %v3334
    %v3339 = vpack.c.b16 %v3337, %v3336
    %v3341 = vsel %vm522, %v3338, 0
    %v3344 = vsel %vm522, %v3339, 0
    %3346 = vmatprep.subr.bf16.mxu0 0
    %3347 = vmatpush1.bf16.msra.mxu0 %v3328
    %3348 = vmatprep.subr.bf16.mxu0 0
    %3349 = vmatpush1.bf16.msra.mxu0 %v3329
    %3350 = vmatprep.subr.bf16.mxu0 0
    %3351 = vmatpush1.bf16.msra.mxu0 0
    %3352 = vmatprep.subr.bf16.mxu0 0
    %3353 = vmatpush1.bf16.msra.mxu0 0
    %3354 = vmatprep.subr.bf16.mxu0 0
    %3355 = vmatpush1.bf16.msra.mxu0 0
    %3356 = vmatprep.subr.bf16.mxu0 0
    %3357 = vmatpush1.bf16.msra.mxu0 0
    %3358 = vmatprep.subr.bf16.mxu0 0
    %3359 = vmatpush1.bf16.msra.mxu0 0
    %3360 = vmatprep.subr.bf16.mxu0 0
    %3361 = vmatpush1.bf16.msra.mxu0 0
    %3362 = vmatprep.subr.bf16.mxu0 0
    %3363 = vmatpush1.bf16.msra.mxu0 0
    %3364 = vmatprep.subr.bf16.mxu0 0
    %3365 = vmatpush1.bf16.msra.mxu0 0
    %3366 = vmatprep.subr.bf16.mxu0 0
    %3367 = vmatpush1.bf16.msra.mxu0 0
    %3368 = vmatprep.subr.bf16.mxu0 0
    %3369 = vmatpush1.bf16.msra.mxu0 0
    %3370 = vmatprep.subr.bf16.mxu0 0
    %3371 = vmatpush1.bf16.msra.mxu0 0
    %3372 = vmatprep.subr.bf16.mxu0 0
    %3373 = vmatpush1.bf16.msra.mxu0 0
    %3374 = vmatprep.subr.bf16.mxu0 0
    %3375 = vmatpush1.bf16.msra.mxu0 0
    %3376 = vmatprep.subr.bf16.mxu0 0
    %3377 = vmatpush1.bf16.msra.mxu0 0
    %3378 = vmatprep.mubr.bf16.mxu0 0
    %3379 = vmatmul.mubr.bf16.gmra.mrb[0].mxu0 %v3341
    %v3380 = vpop.f32.mrb[0].mxu0
    %v3381 = vadd.f32 %v2387, %v3380
    %v3382 = vpop.f32.mrb[0].mxu0
    %v3383 = vpop.f32.mrb[0].mxu0
    %v3384 = vadd.f32 %v2388, %v3383
    %v3385 = vpop.f32.mrb[0].mxu0
    %3386 = vmatprep.mubr.bf16.mxu0 0
    %3387 = vmatmul.mubr.bf16.gmra.mrb[0].mxu0 %v3344
    %v3388 = vpop.f32.mrb[0].mxu0
    %v3389 = vadd.f32 %v2389, %v3388
    %v3390 = vpop.f32.mrb[0].mxu0
    %v3391 = vpop.f32.mrb[0].mxu0
    %v3392 = vadd.f32 %v2390, %v3391
    %v3393 = vpop.f32.mrb[0].mxu0
    %3394 = vdwg.mxu0
    %v3395 = vadd.f32 %v2345, %v3381
    %v3396 = vadd.f32 %v2348, %v3384
    %v3397 = vadd.f32 %v2353, %v3389
    %v3398 = vadd.f32 %v2356, %v3392
    %v3399 = vpack.c.bf16 %v3396, %v3395
    %v3400 = vpack.c.bf16 %v3398, %v3397
    %v3402 = vsel %vm522, %v3399, 0
    %v3405 = vsel %vm522, %v3400, 0
    %3407 = vmatprep.subr.bf16.mxu0 0
    %3408 = vmatpush1.bf16.msra.mxu0 %v2062
    %3409 = vmatprep.subr.bf16.mxu0 0
    %3410 = vmatpush1.bf16.msra.mxu0 %v2063
    %3411 = vmatprep.subr.bf16.mxu0 0
    %3412 = vmatpush1.bf16.msra.mxu0 0
    %3413 = vmatprep.subr.bf16.mxu0 0
    %3414 = vmatpush1.bf16.msra.mxu0 0
    %3415 = vmatprep.subr.bf16.mxu0 0
    %3416 = vmatpush1.bf16.msra.mxu0 0
    %3417 = vmatprep.subr.bf16.mxu0 0
    %3418 = vmatpush1.bf16.msra.mxu0 0
    %3419 = vmatprep.subr.bf16.mxu0 0
    %3420 = vmatpush1.bf16.msra.mxu0 0
    %3421 = vmatprep.subr.bf16.mxu0 0
    %3422 = vmatpush1.bf16.msra.mxu0 0
    %3423 = vmatprep.subr.bf16.mxu0 0
    %3424 = vmatpush1.bf16.msra.mxu0 0
    %3425 = vmatprep.subr.bf16.mxu0 0
    %3426 = vmatpush1.bf16.msra.mxu0 0
    %3427 = vmatprep.subr.bf16.mxu0 0
    %3428 = vmatpush1.bf16.msra.mxu0 0
    %3429 = vmatprep.subr.bf16.mxu0 0
    %3430 = vmatpush1.bf16.msra.mxu0 0
    %3431 = vmatprep.subr.bf16.mxu0 0
    %3432 = vmatpush1.bf16.msra.mxu0 0
    %3433 = vmatprep.subr.bf16.mxu0 0
    %3434 = vmatpush1.bf16.msra.mxu0 0
    %3435 = vmatprep.subr.bf16.mxu0 0
    %3436 = vmatpush1.bf16.msra.mxu0 0
    %3437 = vmatprep.subr.bf16.mxu0 0
    %3438 = vmatpush1.bf16.msra.mxu0 0
    %3439 = vmatprep.mubr.bf16.mxu0 0
    %3440 = vmatmul.mubr.bf16.gmra.mrb[0].mxu0 %v3402
    %v3441 = vpop.f32.mrb[0].mxu0
    %v3442 = vadd.f32 0.0, %v3441
    %v3443 = vpop.f32.mrb[0].mxu0
    %v3444 = vpop.f32.mrb[0].mxu0
    %v3445 = vadd.f32 0.0, %v3444
    %v3446 = vpop.f32.mrb[0].mxu0
    %3447 = vmatprep.mubr.bf16.mxu0 0
    %3448 = vmatmul.mubr.bf16.gmra.mrb[0].mxu0 %v3405
    %v3449 = vpop.f32.mrb[0].mxu0
    %v3450 = vadd.f32 0.0, %v3449
    %v3451 = vpop.f32.mrb[0].mxu0
    %v3452 = vpop.f32.mrb[0].mxu0
    %v3453 = vadd.f32 0.0, %v3452
    %v3454 = vpop.f32.mrb[0].mxu0
    %3455 = vdwg.mxu0
    %v3456 = vpack.c.bf16 %v3445, %v3442
    %v3457 = vpack.c.bf16 %v3453, %v3450
    %v3466 = vunpack.c.l.b16 %v2391
    %v3467 = vunpack.c.l.b16 %v2392
    %v3468 = vunpack.c.l.b16 %v2393
    %v3469 = vunpack.c.l.b16 %v2394
    %v3470 = vunpack.c.l.b16 %v2395
    %v3471 = vunpack.c.l.b16 %v2396
    %v3472 = vunpack.c.l.b16 %v2397
    %v3473 = vunpack.c.l.b16 %v2398
    %v3474 = vpack.c.b16 %v3467, %v3466
    %v3475 = vpack.c.b16 %v3469, %v3468
    %v3476 = vpack.c.b16 %v3471, %v3470
    %v3477 = vpack.c.b16 %v3473, %v3472
    %v3479 = vsel %vm522, %v3474, 0
    %v3482 = vsel %vm522, %v3475, 0
    %v3485 = vsel %vm522, %v3476, 0
    %v3488 = vsel %vm522, %v3477, 0
    %3490 = vmatprep.subr.bf16.mxu0 0
    %3491 = vmatpush1.bf16.msra.mxu0 %v3456
    %3492 = vmatprep.subr.bf16.mxu0 0
    %3493 = vmatpush1.bf16.msra.mxu0 %v3457
    %3494 = vmatprep.subr.bf16.mxu0 0
    %3495 = vmatpush1.bf16.msra.mxu0 0
    %3496 = vmatprep.subr.bf16.mxu0 0
    %3497 = vmatpush1.bf16.msra.mxu0 0
    %3498 = vmatprep.subr.bf16.mxu0 0
    %3499 = vmatpush1.bf16.msra.mxu0 0
    %3500 = vmatprep.subr.bf16.mxu0 0
    %3501 = vmatpush1.bf16.msra.mxu0 0
    %3502 = vmatprep.subr.bf16.mxu0 0
    %3503 = vmatpush1.bf16.msra.mxu0 0
    %3504 = vmatprep.subr.bf16.mxu0 0
    %3505 = vmatpush1.bf16.msra.mxu0 0
    %3506 = vmatprep.subr.bf16.mxu0 0
    %3507 = vmatpush1.bf16.msra.mxu0 0
    %3508 = vmatprep.subr.bf16.mxu0 0
    %3509 = vmatpush1.bf16.msra.mxu0 0
    %3510 = vmatprep.subr.bf16.mxu0 0
    %3511 = vmatpush1.bf16.msra.mxu0 0
    %3512 = vmatprep.subr.bf16.mxu0 0
    %3513 = vmatpush1.bf16.msra.mxu0 0
    %3514 = vmatprep.subr.bf16.mxu0 0
    %3515 = vmatpush1.bf16.msra.mxu0 0
    %3516 = vmatprep.subr.bf16.mxu0 0
    %3517 = vmatpush1.bf16.msra.mxu0 0
    %3518 = vmatprep.subr.bf16.mxu0 0
    %3519 = vmatpush1.bf16.msra.mxu0 0
    %3520 = vmatprep.subr.bf16.mxu0 0
    %3521 = vmatpush1.bf16.msra.mxu0 0
    %3522 = vmatprep.mubr.bf16.mxu0 0
    %3523 = vmatmul.mubr.bf16.gmra.mrb[0].mxu0 %v3479
    %v3524 = vpop.f32.mrb[0].mxu0
    %v3525 = vadd.f32 0.0, %v3524
    %v3526 = vpop.f32.mrb[0].mxu0
    %v3527 = vpop.f32.mrb[0].mxu0
    %v3528 = vadd.f32 0.0, %v3527
    %v3529 = vpop.f32.mrb[0].mxu0
    %3530 = vmatprep.mubr.bf16.mxu0 0
    %3531 = vmatmul.mubr.bf16.gmra.mrb[0].mxu0 %v3482
    %v3532 = vpop.f32.mrb[0].mxu0
    %v3533 = vadd.f32 0.0, %v3532
    %v3534 = vpop.f32.mrb[0].mxu0
    %v3535 = vpop.f32.mrb[0].mxu0
    %v3536 = vadd.f32 0.0, %v3535
    %v3537 = vpop.f32.mrb[0].mxu0
    %3538 = vmatprep.mubr.bf16.mxu0 0
    %3539 = vmatmul.mubr.bf16.gmra.mrb[0].mxu0 %v3485
    %v3540 = vpop.f32.mrb[0].mxu0
    %v3541 = vadd.f32 0.0, %v3540
    %v3542 = vpop.f32.mrb[0].mxu0
    %v3543 = vpop.f32.mrb[0].mxu0
    %v3544 = vadd.f32 0.0, %v3543
    %v3545 = vpop.f32.mrb[0].mxu0
    %3546 = vmatprep.mubr.bf16.mxu0 0
    %3547 = vmatmul.mubr.bf16.gmra.mrb[0].mxu0 %v3488
    %v3548 = vpop.f32.mrb[0].mxu0
    %v3549 = vadd.f32 0.0, %v3548
    %v3550 = vpop.f32.mrb[0].mxu0
    %v3551 = vpop.f32.mrb[0].mxu0
    %v3552 = vadd.f32 0.0, %v3551
    %v3553 = vpop.f32.mrb[0].mxu0
    %3554 = vdwg.mxu0
    %v3555 = vmax.f32 %v3525, 0.0
    %v3556 = vmax.f32 %v3528, 0.0
    %v3557 = vmax.f32 %v3533, 0.0
    %v3558 = vmax.f32 %v3536, 0.0
    %v3559 = vmax.f32 %v3541, 0.0
    %v3560 = vmax.f32 %v3544, 0.0
    %v3561 = vmax.f32 %v3549, 0.0
    %v3562 = vmax.f32 %v3552, 0.0
    %v3563 = vpack.c.bf16 %v3556, %v3555
    %v3564 = vpack.c.bf16 %v3558, %v3557
    %v3565 = vpack.c.bf16 %v3560, %v3559
    %v3566 = vpack.c.bf16 %v3562, %v3561
    %v3571 = vunpack.c.l.b16 %v2399
    %v3572 = vunpack.c.l.b16 %v2400
    %v3573 = vunpack.c.l.b16 %v2401
    %v3574 = vunpack.c.l.b16 %v2402
    %v3575 = vpack.c.b16 %v3572, %v3571
    %v3576 = vpack.c.b16 %v3574, %v3573
    %v3578 = vsel %vm2242, %v3575, 0
    %v3581 = vsel %vm2242, %v3576, 0
    %3583 = vmatprep.subr.bf16.mxu0 0
    %3584 = vmatpush1.bf16.msra.mxu0 %v3563
    %3585 = vmatprep.subr.bf16.mxu0 0
    %3586 = vmatpush1.bf16.msra.mxu0 %v3564
    %3587 = vmatprep.subr.bf16.mxu0 0
    %3588 = vmatpush1.bf16.msra.mxu0 %v3565
    %3589 = vmatprep.subr.bf16.mxu0 0
    %3590 = vmatpush1.bf16.msra.mxu0 %v3566
    %3591 = vmatprep.subr.bf16.mxu0 0
    %3592 = vmatpush1.bf16.msra.mxu0 0
    %3593 = vmatprep.subr.bf16.mxu0 0
    %3594 = vmatpush1.bf16.msra.mxu0 0
    %3595 = vmatprep.subr.bf16.mxu0 0
    %3596 = vmatpush1.bf16.msra.mxu0 0
    %3597 = vmatprep.subr.bf16.mxu0 0
    %3598 = vmatpush1.bf16.msra.mxu0 0
    %3599 = vmatprep.subr.bf16.mxu0 0
    %3600 = vmatpush1.bf16.msra.mxu0 0
    %3601 = vmatprep.subr.bf16.mxu0 0
    %3602 = vmatpush1.bf16.msra.mxu0 0
    %3603 = vmatprep.subr.bf16.mxu0 0
    %3604 = vmatpush1.bf16.msra.mxu0 0
    %3605 = vmatprep.subr.bf16.mxu0 0
    %3606 = vmatpush1.bf16.msra.mxu0 0
    %3607 = vmatprep.subr.bf16.mxu0 0
    %3608 = vmatpush1.bf16.msra.mxu0 0
    %3609 = vmatprep.subr.bf16.mxu0 0
    %3610 = vmatpush1.bf16.msra.mxu0 0
    %3611 = vmatprep.subr.bf16.mxu0 0
    %3612 = vmatpush1.bf16.msra.mxu0 0
    %3613 = vmatprep.subr.bf16.mxu0 0
    %3614 = vmatpush1.bf16.msra.mxu0 0
    %3615 = vmatprep.mubr.bf16.mxu0 0
    %3616 = vmatmul.mubr.bf16.gmra.mrb[0].mxu0 %v3578
    %v3617 = vpop.f32.mrb[0].mxu0
    %v3618 = vadd.f32 0.0, %v3617
    %v3619 = vpop.f32.mrb[0].mxu0
    %v3620 = vpop.f32.mrb[0].mxu0
    %v3621 = vadd.f32 0.0, %v3620
    %v3622 = vpop.f32.mrb[0].mxu0
    %3623 = vmatprep.mubr.bf16.mxu0 0
    %3624 = vmatmul.mubr.bf16.gmra.mrb[0].mxu0 %v3581
    %v3625 = vpop.f32.mrb[0].mxu0
    %v3626 = vadd.f32 0.0, %v3625
    %v3627 = vpop.f32.mrb[0].mxu0
    %v3628 = vpop.f32.mrb[0].mxu0
    %v3629 = vadd.f32 0.0, %v3628
    %v3630 = vpop.f32.mrb[0].mxu0
    %3631 = vdwg.mxu0
    %v3632 = vadd.f32 %v3442, %v3618
    %v3633 = vadd.f32 %v3445, %v3621
    %v3634 = vadd.f32 %v3450, %v3626
    %v3635 = vadd.f32 %v3453, %v3629
    %v3636 = vpack.c.bf16 %v3633, %v3632
    %v3637 = vpack.c.bf16 %v3635, %v3634
    %v3639 = vsel %vm522, %v3636, 0
    %v3642 = vsel %vm522, %v3637, 0
    %3644 = vmatprep.subr.bf16.mxu0 0
    %3645 = vmatpush1.bf16.msra.mxu0 %v2062
    %3646 = vmatprep.subr.bf16.mxu0 0
    %3647 = vmatpush1.bf16.msra.mxu0 %v2063
    %3648 = vmatprep.subr.bf16.mxu0 0
    %3649 = vmatpush1.bf16.msra.mxu0 0
    %3650 = vmatprep.subr.bf16.mxu0 0
    %3651 = vmatpush1.bf16.msra.mxu0 0
    %3652 = vmatprep.subr.bf16.mxu0 0
    %3653 = vmatpush1.bf16.msra.mxu0 0
    %3654 = vmatprep.subr.bf16.mxu0 0
    %3655 = vmatpush1.bf16.msra.mxu0 0
    %3656 = vmatprep.subr.bf16.mxu0 0
    %3657 = vmatpush1.bf16.msra.mxu0 0
    %3658 = vmatprep.subr.bf16.mxu0 0
    %3659 = vmatpush1.bf16.msra.mxu0 0
    %3660 = vmatprep.subr.bf16.mxu0 0
    %3661 = vmatpush1.bf16.msra.mxu0 0
    %3662 = vmatprep.subr.bf16.mxu0 0
    %3663 = vmatpush1.bf16.msra.mxu0 0
    %3664 = vmatprep.subr.bf16.mxu0 0
    %3665 = vmatpush1.bf16.msra.mxu0 0
    %3666 = vmatprep.subr.bf16.mxu0 0
    %3667 = vmatpush1.bf16.msra.mxu0 0
    %3668 = vmatprep.subr.bf16.mxu0 0
    %3669 = vmatpush1.bf16.msra.mxu0 0
    %3670 = vmatprep.subr.bf16.mxu0 0
    %3671 = vmatpush1.bf16.msra.mxu0 0
    %3672 = vmatprep.subr.bf16.mxu0 0
    %3673 = vmatpush1.bf16.msra.mxu0 0
    %3674 = vmatprep.subr.bf16.mxu0 0
    %3675 = vmatpush1.bf16.msra.mxu0 0
    %3676 = vmatprep.mubr.bf16.mxu0 0
    %3677 = vmatmul.mubr.bf16.gmra.mrb[0].mxu0 %v3639
    %v3678 = vpop.f32.mrb[0].mxu0
    %v3679 = vadd.f32 0.0, %v3678
    %v3680 = vpop.f32.mrb[0].mxu0
    %v3681 = vpop.f32.mrb[0].mxu0
    %v3682 = vadd.f32 0.0, %v3681
    %v3683 = vpop.f32.mrb[0].mxu0
    %3684 = vmatprep.mubr.bf16.mxu0 0
    %3685 = vmatmul.mubr.bf16.gmra.mrb[0].mxu0 %v3642
    %v3686 = vpop.f32.mrb[0].mxu0
    %v3687 = vadd.f32 0.0, %v3686
    %v3688 = vpop.f32.mrb[0].mxu0
    %v3689 = vpop.f32.mrb[0].mxu0
    %v3690 = vadd.f32 0.0, %v3689
    %v3691 = vpop.f32.mrb[0].mxu0
    %3692 = vdwg.mxu0
    %v3693 = vsel %vm522, %v3679, 0.0
    %v3694 = vsel %vm522, %v3682, 0.0
    %v3695 = vadd.f32 %v3693, %v3694
    %v3696 = vsel %vm522, %v3687, 0.0
    %v3697 = vadd.f32 %v3695, %v3696
    %v3698 = vsel %vm522, %v3690, 0.0
    %v3699 = vadd.f32 %v3697, %v3698
    %v3700 = vrot.slane %v3699, 4
    %v3701 = vadd.f32 %v3699, %v3700
    %v3702 = vrot.slane %v3701, 2
    %v3703 = vadd.f32 %v3701, %v3702
    %v3704 = vrot.slane %v3703, 1
    %v3705 = vadd.f32 %v3703, %v3704
    %v3706 = vrcp.pop 32.0
    %v3707 = vmul.f32 %v3705, %v3706
    %v3708 = vsub.f32 %v3679, %v3707
    %v3709 = vsub.f32 %v3682, %v3707
    %v3710 = vsub.f32 %v3687, %v3707
    %v3711 = vsub.f32 %v3690, %v3707
    %v3712 = vmul.f32 %v3708, %v3708
    %v3713 = vmul.f32 %v3709, %v3709
    %v3714 = vmul.f32 %v3710, %v3710
    %v3715 = vmul.f32 %v3711, %v3711
    %v3716 = vsel %vm522, %v3712, 0.0
    %v3717 = vsel %vm522, %v3713, 0.0
    %v3718 = vadd.f32 %v3716, %v3717
    %v3719 = vsel %vm522, %v3714, 0.0
    %v3720 = vadd.f32 %v3718, %v3719
    %v3721 = vsel %vm522, %v3715, 0.0
    %v3722 = vadd.f32 %v3720, %v3721
    %v3723 = vrot.slane %v3722, 4
    %v3724 = vadd.f32 %v3722, %v3723
    %v3725 = vrot.slane %v3724, 2
    %v3726 = vadd.f32 %v3724, %v3725
    %v3727 = vrot.slane %v3726, 1
    %v3728 = vadd.f32 %v3726, %v3727
    %v3729 = vmul.f32 %v3728, %v3706
    %v3730 = vadd.f32 %v3729, 1e-05
    %v3731 = vrsqrt.pop %v3730
    %v3732 = vmul.f32 %v3708, %v3731
    %v3733 = vmul.f32 %v3709, %v3731
    %v3734 = vmul.f32 %v3710, %v3731
    %v3735 = vmul.f32 %v3711, %v3731
    %v3736 = vld [vmem:[%s61] sm:$0xff]
    %v3737 = vld [vmem:[%s61 + $0x8] sm:$0xff]
    %v3738 = vld [vmem:[%s61 + $0x10] sm:$0xff]
    %v3739 = vld [vmem:[%s61 + $0x18] sm:$0xff]
    %v3740 = vmul.f32 %v3732, %v3736
    %v3741 = vmul.f32 %v3733, %v3737
    %v3742 = vmul.f32 %v3734, %v3738
    %v3743 = vmul.f32 %v3735, %v3739
    %v3744 = vld [vmem:[%s63] sm:$0xff]
    %v3745 = vld [vmem:[%s63 + $0x8] sm:$0xff]
    %v3746 = vld [vmem:[%s63 + $0x10] sm:$0xff]
    %v3747 = vld [vmem:[%s63 + $0x18] sm:$0xff]
    %v3748 = vadd.f32 %v3740, %v3744
    %v3749 = vadd.f32 %v3741, %v3745
    %v3750 = vadd.f32 %v3742, %v3746
    %v3751 = vadd.f32 %v3743, %v3747
    %v3752 = vpack.c.bf16 %v3749, %v3748
    %v3753 = vpack.c.bf16 %v3751, %v3750
    %v3758 = vunpack.c.l.b16 %v374
    %v3759 = vunpack.c.l.b16 %v375
    %v3760 = vunpack.c.l.b16 %v376
    %v3761 = vunpack.c.l.b16 %v377
    %v3762 = vpack.c.b16 %v3759, %v3758
    %v3763 = vpack.c.b16 %v3761, %v3760
    %v3767 = vsel %vm522, %v3752, 0
    %v3770 = vsel %vm522, %v3753, 0
    %3772 = vmatprep.subr.bf16.mxu0 0
    %3773 = vmatpush1.bf16.msra.mxu0 %v3762
    %3774 = vmatprep.subr.bf16.mxu0 0
    %3775 = vmatpush1.bf16.msra.mxu0 %v3763
    %3776 = vmatprep.subr.bf16.mxu0 0
    %3777 = vmatpush1.bf16.msra.mxu0 0
    %3778 = vmatprep.subr.bf16.mxu0 0
    %3779 = vmatpush1.bf16.msra.mxu0 0
    %3780 = vmatprep.subr.bf16.mxu0 0
    %3781 = vmatpush1.bf16.msra.mxu0 0
    %3782 = vmatprep.subr.bf16.mxu0 0
    %3783 = vmatpush1.bf16.msra.mxu0 0
    %3784 = vmatprep.subr.bf16.mxu0 0
    %3785 = vmatpush1.bf16.msra.mxu0 0
    %3786 = vmatprep.subr.bf16.mxu0 0
    %3787 = vmatpush1.bf16.msra.mxu0 0
    %3788 = vmatprep.subr.bf16.mxu0 0
    %3789 = vmatpush1.bf16.msra.mxu0 0
    %3790 = vmatprep.subr.bf16.mxu0 0
    %3791 = vmatpush1.bf16.msra.mxu0 0
    %3792 = vmatprep.subr.bf16.mxu0 0
    %3793 = vmatpush1.bf16.msra.mxu0 0
    %3794 = vmatprep.subr.bf16.mxu0 0
    %3795 = vmatpush1.bf16.msra.mxu0 0
    %3796 = vmatprep.subr.bf16.mxu0 0
    %3797 = vmatpush1.bf16.msra.mxu0 0
    %3798 = vmatprep.subr.bf16.mxu0 0
    %3799 = vmatpush1.bf16.msra.mxu0 0
    %3800 = vmatprep.subr.bf16.mxu0 0
    %3801 = vmatpush1.bf16.msra.mxu0 0
    %3802 = vmatprep.subr.bf16.mxu0 0
    %3803 = vmatpush1.bf16.msra.mxu0 0
    %3804 = vmatprep.mubr.bf16.mxu0 0
    %3805 = vmatmul.mubr.bf16.gmra.mrb[0].mxu0 %v3767
    %v3806 = vpop.f32.mrb[0].mxu0
    %v3807 = vadd.f32 0.0, %v3806
    %v3808 = vpop.f32.mrb[0].mxu0
    %v3809 = vpop.f32.mrb[0].mxu0
    %v3810 = vadd.f32 0.0, %v3809
    %v3811 = vpop.f32.mrb[0].mxu0
    %3812 = vmatprep.mubr.bf16.mxu0 0
    %3813 = vmatmul.mubr.bf16.gmra.mrb[0].mxu0 %v3770
    %v3814 = vpop.f32.mrb[0].mxu0
    %v3815 = vadd.f32 0.0, %v3814
    %v3816 = vpop.f32.mrb[0].mxu0
    %v3817 = vpop.f32.mrb[0].mxu0
    %v3818 = vadd.f32 0.0, %v3817
    %v3819 = vpop.f32.mrb[0].mxu0
    %3820 = vdwg.mxu0
    %v3821 = vld [vmem:[#allocation10] sm:$0xf]
    %v3822 = vpack.c.bf16 %v3810, %v3807
    %v3823 = vpack.c.bf16 %v3818, %v3815
    %v3824 = vld [vmem:[%s67] sm:$0xff]
    %v3826 = vsel %vm522, %v3821, 0
    %3828 = vmatprep.subr.bf16.mxu0 0
    %3829 = vmatpush1.bf16.msra.mxu0 %v3822
    %3830 = vmatprep.subr.bf16.mxu0 0
    %3831 = vmatpush1.bf16.msra.mxu0 %v3823
    %3832 = vmatprep.subr.bf16.mxu0 0
    %3833 = vmatpush1.bf16.msra.mxu0 0
    %3834 = vmatprep.subr.bf16.mxu0 0
    %3835 = vmatpush1.bf16.msra.mxu0 0
    %3836 = vmatprep.subr.bf16.mxu0 0
    %3837 = vmatpush1.bf16.msra.mxu0 0
    %3838 = vmatprep.subr.bf16.mxu0 0
    %3839 = vmatpush1.bf16.msra.mxu0 0
    %3840 = vmatprep.subr.bf16.mxu0 0
    %3841 = vmatpush1.bf16.msra.mxu0 0
    %3842 = vmatprep.subr.bf16.mxu0 0
    %3843 = vmatpush1.bf16.msra.mxu0 0
    %3844 = vmatprep.subr.bf16.mxu0 0
    %3845 = vmatpush1.bf16.msra.mxu0 0
    %3846 = vmatprep.subr.bf16.mxu0 0
    %3847 = vmatpush1.bf16.msra.mxu0 0
    %3848 = vmatprep.subr.bf16.mxu0 0
    %3849 = vmatpush1.bf16.msra.mxu0 0
    %3850 = vmatprep.subr.bf16.mxu0 0
    %3851 = vmatpush1.bf16.msra.mxu0 0
    %3852 = vmatprep.subr.bf16.mxu0 0
    %3853 = vmatpush1.bf16.msra.mxu0 0
    %3854 = vmatprep.subr.bf16.mxu0 0
    %3855 = vmatpush1.bf16.msra.mxu0 0
    %3856 = vmatprep.subr.bf16.mxu0 0
    %3857 = vmatpush1.bf16.msra.mxu0 0
    %3858 = vmatprep.subr.bf16.mxu0 0
    %3859 = vmatpush1.bf16.msra.mxu0 0
    %3860 = vmatprep.mubr.bf16.mxu0 0
    %3861 = vmatmul.mubr.bf16.gmra.mrb[0].mxu0 %v3826
    %v3862 = vpop.f32.mrb[0].mxu0
    %v3863 = vadd.f32 %v3824, %v3862
    %v3864 = vpop.f32.mrb[0].mxu0
    %v3865 = vpop.f32.mrb[0].mxu0
    %v3866 = vpop.f32.mrb[0].mxu0
    %3867 = vdwg.mxu0
    %3868 = vst.msk [vmem:[#allocation11] sm:$0xff] %vm522, %v3863
    // Predicated region
    $region158: #{tpu_custom_call.1} parent=1 // pred_check
      _
    $region159: #{tpu_custom_call.1} parent=1 // pred_check_branch
      %3870 = sbr.rel (0) target = $region161
    $region160: #{tpu_custom_call.1} parent=1 // pred_region
      %s3872 = ssub.s32 128, 128
      %3873 = vsyncadd [#allocation4], %s3872
      %s3875 = sshll.u32 [#allocation11], 4
      %s3876 = int_to_ptr.vmem [resolvable:$true] %s3875
      %3878 = dma.vmem_to_hbm [thread:$0]  %s3876, 128, %s69, [#allocation4]
    $region161: #{tpu_custom_call.1} parent=1 // pred_fallthru
      _
    // Predicated region
    $region162: #{tpu_custom_call.1} parent=1 // pred_check
      _
    $region163: #{tpu_custom_call.1} parent=1 // pred_check_branch
      %3880 = sbr.rel (0) target = $region165
    $region164: #{tpu_custom_call.1} parent=1 // pred_region
      %3881 = dma.done [#allocation4], 128
    $region165: #{tpu_custom_call.1} parent=1 // pred_fallthru
      _
    %3882 = vsyncpa [#allocation3], 1
    %3883 = vsyncpa [#allocation6], 1
    %3884 = vsyncpa [#allocation9], 1
    %3885 = vsyncpa [#allocation4], 1

</llo_original>
